<compile_context>
chip_gen: v5e
topology: v5e:2x2
jax: 0.10.0
libtpu: 0.0.40
codegen_flags: <defaults>
</compile_context>

<pallas_src>
import jax
import jax.numpy as jnp
from jax import lax
from jax.experimental import pallas as pl
from jax.experimental.pallas import tpu as pltpu

_CIN_PAD = 8      # conv input channels padded to 8 (one aligned K sub-block)
_LANES = 128      # every matmul N dim padded to a full lane tile


# ----------------------------- fused kernel --------------------------------

def _lenet_kernel(x_ref, w1_ref, b1_ref, w2_ref, b2_ref,
                  wf1_ref, bf1_ref, wf2_ref, bf2_ref, wf3_ref, bf3_ref,
                  o_ref, a_scr, p1_ref, p2_ref):
    f32 = jnp.float32

    def conv_row(load_row, y, n_out, w_ref, b_ref):
        # Stage im2col patches of one output row into a_scr[(n_out, 200)] and
        # run a single lane-dense GEMM + bias + ReLU on the MXU.
        for i in range(5):
            row = load_row(y + i)                       # (W_in, 8)
            for j in range(5):
                t = i * 5 + j
                a_scr[0:n_out, t * 8:(t + 1) * 8] = row[j:j + n_out, :]
        a = a_scr[0:n_out, :]                            # (n_out, 200)
        acc = jnp.dot(a, w_ref[...], preferred_element_type=f32)
        return jnp.maximum(acc + b_ref[...], 0.0)        # (n_out, 128)

    # ---- conv1 (3->6, 5x5) + ReLU + 2x2 maxpool  ->  p1_ref (14,14,8) ------
    def c1_body(yp, carry):
        r0 = conv_row(lambda i: x_ref[i], 2 * yp, 28, w1_ref, b1_ref)
        r1 = conv_row(lambda i: x_ref[i], 2 * yp + 1, 28, w1_ref, b1_ref)
        rm = jnp.maximum(r0, r1)                         # (28, 128)
        for k in range(14):
            m = jnp.maximum(rm[2 * k:2 * k + 1, :], rm[2 * k + 1:2 * k + 2, :])
            p1_ref[yp, k:k + 1, :] = m[:, 0:8]
        return carry

    lax.fori_loop(0, 14, c1_body, 0)

    # ---- conv2 (6->16, 5x5) + ReLU + 2x2 maxpool ->  p2_ref (5,5,16) -------
    def c2_body(yp, carry):
        r0 = conv_row(lambda i: p1_ref[i], 2 * yp, 10, w2_ref, b2_ref)
        r1 = conv_row(lambda i: p1_ref[i], 2 * yp + 1, 10, w2_ref, b2_ref)
        rm = jnp.maximum(r0, r1)                         # (10, 128)
        for k in range(5):
            m = jnp.maximum(rm[2 * k:2 * k + 1, :], rm[2 * k + 1:2 * k + 2, :])
            p2_ref[yp, k:k + 1, :] = m[:, 0:16]
        return carry

    lax.fori_loop(0, 5, c2_body, 0)

    # ---- fc1 (400->120): 25 accumulated K=16 dots over the pooled map ------
    h = bf1_ref[...]                                     # (1, 128)
    for yy in range(5):
        for xx in range(5):
            s = yy * 5 + xx
            piece = p2_ref[yy, xx:xx + 1, :]             # (1, 16)
            h = h + jnp.dot(piece, wf1_ref[s * 16:(s + 1) * 16, :],
                            preferred_element_type=f32)
    h = jnp.maximum(h, 0.0)

    # ---- fc2 (120->84) + ReLU ----------------------------------------------
    h = jnp.maximum(
        jnp.dot(h, wf2_ref[...], preferred_element_type=f32) + bf2_ref[...],
        0.0)

    # ---- fc3 (84->10), padded lanes stay zero ------------------------------
    o_ref[...] = (jnp.dot(h, wf3_ref[...], preferred_element_type=f32)
                  + bf3_ref[...])


def _lenet_pallas(x_pad, pp):
    """x_pad: (B, 32, 32, 8) NHWC padded; pp: prepared/padded params."""
    B = x_pad.shape[0]
    flops = int(B * (2 * 28 * 28 * 200 * 128        # conv1 GEMMs
                     + 2 * 10 * 10 * 200 * 128      # conv2 GEMMs
                     + 2 * 25 * 16 * 128            # fc1
                     + 2 * 2 * 128 * 128))          # fc2 + fc3
    nbytes = int(4 * (x_pad.size + sum(int(v.size) for v in pp.values())
                      + B * _LANES))

    def const2(b):
        return (0, 0)

    in_specs = [
        pl.BlockSpec((None, 32, 32, _CIN_PAD), lambda b: (b, 0, 0, 0)),  # x
        pl.BlockSpec((200, 128), const2),   # w1
        pl.BlockSpec((1, 128), const2),     # b1
        pl.BlockSpec((200, 128), const2),   # w2
        pl.BlockSpec((1, 128), const2),     # b2
        pl.BlockSpec((400, 128), const2),   # wf1
        pl.BlockSpec((1, 128), const2),     # bf1
        pl.BlockSpec((128, 128), const2),   # wf2
        pl.BlockSpec((1, 128), const2),     # bf2
        pl.BlockSpec((128, 128), const2),   # wf3
        pl.BlockSpec((1, 128), const2),     # bf3
    ]

    grid_spec = pltpu.PrefetchScalarGridSpec(
        num_scalar_prefetch=0,
        grid=(B,),
        in_specs=in_specs,
        out_specs=pl.BlockSpec((None, 1, _LANES), lambda b: (b, 0, 0)),
        scratch_shapes=[
            pltpu.VMEM((28, 200), jnp.float32),    # per-row im2col staging
            pltpu.VMEM((14, 14, 8), jnp.float32),  # pool1 activations
            pltpu.VMEM((5, 5, 16), jnp.float32),   # pool2 activations
        ],
    )

    out = pl.pallas_call(
        _lenet_kernel,
        out_shape=jax.ShapeDtypeStruct((B, 1, _LANES), jnp.float32),
        grid_spec=grid_spec,
        compiler_params=pltpu.CompilerParams(
            dimension_semantics=("parallel",),
            vmem_limit_bytes=32 * 1024 * 1024),
        cost_estimate=pl.CostEstimate(
            flops=flops, transcendentals=0, bytes_accessed=nbytes),
    )(x_pad, pp["w1"], pp["b1"], pp["w2"], pp["b2"],
      pp["wf1"], pp["bf1"], pp["wf2"], pp["bf2"], pp["wf3"], pp["bf3"])
    return out[:, 0, :]


# -------------------------- parameter preparation ---------------------------

def prepare_params(p):
    """One-time padding/transposition so the kernel sees lane-dense weights."""
    f32 = jnp.float32
    # conv1: (6,3,5,5) -> K-order ((i*5+j)*8 + cin), N padded to 128
    w1 = jnp.transpose(p["w1"].astype(f32), (2, 3, 1, 0))          # (5,5,3,6)
    w1 = jnp.pad(w1, ((0, 0), (0, 0), (0, _CIN_PAD - 3), (0, 0)))  # (5,5,8,6)
    w1 = jnp.pad(w1.reshape(200, 6), ((0, 0), (0, 122)))           # (200,128)
    b1 = jnp.pad(p["b1"].astype(f32), (0, 122)).reshape(1, 128)
    # conv2: (16,6,5,5)
    w2 = jnp.transpose(p["w2"].astype(f32), (2, 3, 1, 0))          # (5,5,6,16)
    w2 = jnp.pad(w2, ((0, 0), (0, 0), (0, _CIN_PAD - 6), (0, 0)))  # (5,5,8,16)
    w2 = jnp.pad(w2.reshape(200, 16), ((0, 0), (0, 112)))          # (200,128)
    b2 = jnp.pad(p["b2"].astype(f32), (0, 112)).reshape(1, 128)
    # fc1: torch flatten index is c*25 + y*5 + x; kernel uses (y*5+x)*16 + c
    wf1 = p["wf1"].astype(f32).reshape(120, 16, 5, 5)              # (n,c,y,x)
    wf1 = jnp.transpose(wf1, (2, 3, 1, 0)).reshape(400, 120)       # (y,x,c | n)
    wf1 = jnp.pad(wf1, ((0, 0), (0, 8)))                           # (400,128)
    bf1 = jnp.pad(p["bf1"].astype(f32), (0, 8)).reshape(1, 128)
    # fc2 / fc3: pre-transposed once, K and N padded (pads stay exactly zero)
    wf2 = jnp.pad(p["wf2"].astype(f32).T, ((0, 8), (0, 44)))       # (128,128)
    bf2 = jnp.pad(p["bf2"].astype(f32), (0, 44)).reshape(1, 128)
    wf3 = jnp.pad(p["wf3"].astype(f32).T, ((0, 44), (0, 118)))     # (128,128)
    bf3 = jnp.pad(p["bf3"].astype(f32), (0, 118)).reshape(1, 128)
    return dict(w1=w1, b1=b1, w2=w2, b2=b2, wf1=wf1, bf1=bf1,
                wf2=wf2, bf2=bf2, wf3=wf3, bf3=bf3)


# ------------------------------- forward ------------------------------------

def net_forward(x_nchw, prepped):
    assert x_nchw.shape[1:] == (3, 32, 32), x_nchw.shape
    x = jnp.transpose(x_nchw, (0, 2, 3, 1)).astype(jnp.float32)    # NHWC
    x = jnp.pad(x, ((0, 0), (0, 0), (0, 0), (0, _CIN_PAD - 3)))
    out = _lenet_pallas(x, prepped)                                # (B, 128)
    return out[:, :10]


# ------------------------- init + pure-JAX reference ------------------------

def init_params(key):
    ks = jax.random.split(key, 10)

    def u(k, shape, fan_in):
        bound = 1.0 / jnp.sqrt(jnp.float32(fan_in))
        return jax.random.uniform(k, shape, jnp.float32, -bound, bound)

    return {
        "w1": u(ks[0], (6, 3, 5, 5), 3 * 25),
        "b1": u(ks[1], (6,), 3 * 25),
        "w2": u(ks[2], (16, 6, 5, 5), 6 * 25),
        "b2": u(ks[3], (16,), 6 * 25),
        "wf1": u(ks[4], (120, 400), 400),
        "bf1": u(ks[5], (120,), 400),
        "wf2": u(ks[6], (84, 120), 120),
        "bf2": u(ks[7], (84,), 120),
        "wf3": u(ks[8], (10, 84), 84),
        "bf3": u(ks[9], (10,), 84),
    }


def ref_forward(x, p):
    """Pure-JAX reference of the same forward pass (correctness check)."""
    def conv(x, w, b):
        y = jax.lax.conv_general_dilated(
            x, w, (1, 1), "VALID",
            dimension_numbers=("NCHW", "OIHW", "NCHW"))
        return jax.nn.relu(y + b[None, :, None, None])

    def pool(x):
        return jax.lax.reduce_window(x, -jnp.inf, jax.lax.max,
                                     (1, 1, 2, 2), (1, 1, 2, 2), "VALID")

    x = pool(conv(x, p["w1"], p["b1"]))
    x = pool(conv(x, p["w2"], p["b2"]))
    x = x.reshape(x.shape[0], -1)
    x = jax.nn.relu(x @ p["wf1"].T + p["bf1"])
    x = jax.nn.relu(x @ p["wf2"].T + p["bf2"])
    return x @ p["wf3"].T + p["bf3"]


if __name__ == "__main__":
    key = jax.random.PRNGKey(0)
    k_x, k_p = jax.random.split(key)
    # Input must be 32x32 so that the 16*5*5 flatten matches the module.
    x = jax.random.normal(k_x, (2, 3, 32, 32), jnp.float32)
    params = init_params(k_p)
    prepped = prepare_params(params)        # one-time weight padding/permute

    fwd = jax.jit(net_forward)
    out = jax.block_until_ready(fwd(x, prepped))
    assert out.shape == (2, 10), out.shape

    ref = jax.block_until_ready(ref_forward(x, params))
    err = float(jnp.max(jnp.abs(out - ref)))
    assert jnp.allclose(out, ref, rtol=2e-4, atol=2e-4), err

    print("KERNEL_OK")
</pallas_src>

<mosaic_0001>
module attributes {stable_mosaic.version = 11 : i64} {
  func.func @_lenet_kernel(%arg0: i32, %arg1: memref<1x32x32x8xf32, #tpu.memory_space<vmem>>, %arg2: memref<200x128xf32, #tpu.memory_space<vmem>>, %arg3: memref<1x128xf32, #tpu.memory_space<vmem>>, %arg4: memref<200x128xf32, #tpu.memory_space<vmem>>, %arg5: memref<1x128xf32, #tpu.memory_space<vmem>>, %arg6: memref<400x128xf32, #tpu.memory_space<vmem>>, %arg7: memref<1x128xf32, #tpu.memory_space<vmem>>, %arg8: memref<128x128xf32, #tpu.memory_space<vmem>>, %arg9: memref<1x128xf32, #tpu.memory_space<vmem>>, %arg10: memref<128x128xf32, #tpu.memory_space<vmem>>, %arg11: memref<1x128xf32, #tpu.memory_space<vmem>>, %arg12: memref<1x1x128xf32, #tpu.memory_space<vmem>>, %arg13: memref<28x200xf32, #tpu.memory_space<vmem>>, %arg14: memref<14x14x8xf32, #tpu.memory_space<vmem>>, %arg15: memref<5x5x16xf32, #tpu.memory_space<vmem>>) attributes {dimension_semantics = [#tpu.dimension_semantics<parallel>], iteration_bounds = array<i64: 2>, scalar_prefetch = 0 : i64, scratch_operands = 3 : i64, tpu.core_type = #tpu.core_type<tc>, window_params = [{transform_indices = @transform_0, window_bounds = array<i64: 1, 32, 32, 8>}, {pipeline_mode = #tpu.pipeline_mode<synchronous>, transform_indices = @transform_1, window_bounds = array<i64: 200, 128>}, {pipeline_mode = #tpu.pipeline_mode<synchronous>, transform_indices = @transform_2, window_bounds = array<i64: 1, 128>}, {pipeline_mode = #tpu.pipeline_mode<synchronous>, transform_indices = @transform_3, window_bounds = array<i64: 200, 128>}, {pipeline_mode = #tpu.pipeline_mode<synchronous>, transform_indices = @transform_4, window_bounds = array<i64: 1, 128>}, {pipeline_mode = #tpu.pipeline_mode<synchronous>, transform_indices = @transform_5, window_bounds = array<i64: 400, 128>}, {pipeline_mode = #tpu.pipeline_mode<synchronous>, transform_indices = @transform_6, window_bounds = array<i64: 1, 128>}, {pipeline_mode = #tpu.pipeline_mode<synchronous>, transform_indices = @transform_7, window_bounds = array<i64: 128, 128>}, {pipeline_mode = #tpu.pipeline_mode<synchronous>, transform_indices = @transform_8, window_bounds = array<i64: 1, 128>}, {pipeline_mode = #tpu.pipeline_mode<synchronous>, transform_indices = @transform_9, window_bounds = array<i64: 128, 128>}, {pipeline_mode = #tpu.pipeline_mode<synchronous>, transform_indices = @transform_10, window_bounds = array<i64: 1, 128>}, {transform_indices = @transform_11, window_bounds = array<i64: 1, 1, 128>}]} {
    %c0_i32 = arith.constant 0 : i32
    %c14_i32 = arith.constant 14 : i32
    %0 = arith.addi %c0_i32, %c14_i32 : i32
    %c1_i32 = arith.constant 1 : i32
    scf.for %arg16 = %c0_i32 to %0 step %c1_i32  : i32 {
      %c2_i32 = arith.constant 2 : i32
      %143 = arith.muli %c2_i32, %arg16 : i32
      %c0_i32_141 = arith.constant 0 : i32
      %144 = arith.addi %143, %c0_i32_141 : i32
      %c0_142 = arith.constant 0 : index
      %145 = arith.index_cast %144 : i32 to index
      %c0_143 = arith.constant 0 : index
      %c0_144 = arith.constant 0 : index
      %146 = vector.load %arg1[%c0_142, %145, %c0_143, %c0_144] : memref<1x32x32x8xf32, #tpu.memory_space<vmem>>, vector<1x1x32x8xf32>
      %147 = vector.shape_cast %146 : vector<1x1x32x8xf32> to vector<32x8xf32>
      %148 = vector.extract_strided_slice %147 {offsets = [0, 0], sizes = [28, 8], strides = [1, 1]} : vector<32x8xf32> to vector<28x8xf32>
      %c0_145 = arith.constant 0 : index
      %c0_146 = arith.constant 0 : index
      %149 = vector.load %arg13[%c0_145, %c0_146] : memref<28x200xf32, #tpu.memory_space<vmem>>, vector<28x8xf32>
      tpu.vector_store %arg13[%c0_145, %c0_146], %148 {strides = array<i32>} : memref<28x200xf32, #tpu.memory_space<vmem>>, vector<28x8xf32>,
      %150 = vector.extract_strided_slice %147 {offsets = [1, 0], sizes = [28, 8], strides = [1, 1]} : vector<32x8xf32> to vector<28x8xf32>
      %c0_147 = arith.constant 0 : index
      %c8 = arith.constant 8 : index
      %151 = vector.load %arg13[%c0_147, %c8] : memref<28x200xf32, #tpu.memory_space<vmem>>, vector<28x8xf32>
      tpu.vector_store %arg13[%c0_147, %c8], %150 {strides = array<i32>} : memref<28x200xf32, #tpu.memory_space<vmem>>, vector<28x8xf32>,
      %152 = vector.extract_strided_slice %147 {offsets = [2, 0], sizes = [28, 8], strides = [1, 1]} : vector<32x8xf32> to vector<28x8xf32>
      %c0_148 = arith.constant 0 : index
      %c16_149 = arith.constant 16 : index
      %153 = vector.load %arg13[%c0_148, %c16_149] : memref<28x200xf32, #tpu.memory_space<vmem>>, vector<28x8xf32>
      tpu.vector_store %arg13[%c0_148, %c16_149], %152 {strides = array<i32>} : memref<28x200xf32, #tpu.memory_space<vmem>>, vector<28x8xf32>,
      %154 = vector.extract_strided_slice %147 {offsets = [3, 0], sizes = [28, 8], strides = [1, 1]} : vector<32x8xf32> to vector<28x8xf32>
      %c0_150 = arith.constant 0 : index
      %c24 = arith.constant 24 : index
      %155 = vector.load %arg13[%c0_150, %c24] : memref<28x200xf32, #tpu.memory_space<vmem>>, vector<28x8xf32>
      tpu.vector_store %arg13[%c0_150, %c24], %154 {strides = array<i32>} : memref<28x200xf32, #tpu.memory_space<vmem>>, vector<28x8xf32>,
      %156 = vector.extract_strided_slice %147 {offsets = [4, 0], sizes = [28, 8], strides = [1, 1]} : vector<32x8xf32> to vector<28x8xf32>
      %c0_151 = arith.constant 0 : index
      %c32_152 = arith.constant 32 : index
      %157 = vector.load %arg13[%c0_151, %c32_152] : memref<28x200xf32, #tpu.memory_space<vmem>>, vector<28x8xf32>
      tpu.vector_store %arg13[%c0_151, %c32_152], %156 {strides = array<i32>} : memref<28x200xf32, #tpu.memory_space<vmem>>, vector<28x8xf32>,
      %c1_i32_153 = arith.constant 1 : i32
      %158 = arith.addi %143, %c1_i32_153 : i32
      %c0_154 = arith.constant 0 : index
      %159 = arith.index_cast %158 : i32 to index
      %c0_155 = arith.constant 0 : index
      %c0_156 = arith.constant 0 : index
      %160 = vector.load %arg1[%c0_154, %159, %c0_155, %c0_156] : memref<1x32x32x8xf32, #tpu.memory_space<vmem>>, vector<1x1x32x8xf32>
      %161 = vector.shape_cast %160 : vector<1x1x32x8xf32> to vector<32x8xf32>
      %162 = vector.extract_strided_slice %161 {offsets = [0, 0], sizes = [28, 8], strides = [1, 1]} : vector<32x8xf32> to vector<28x8xf32>
      %c0_157 = arith.constant 0 : index
      %c40 = arith.constant 40 : index
      %163 = vector.load %arg13[%c0_157, %c40] : memref<28x200xf32, #tpu.memory_space<vmem>>, vector<28x8xf32>
      tpu.vector_store %arg13[%c0_157, %c40], %162 {strides = array<i32>} : memref<28x200xf32, #tpu.memory_space<vmem>>, vector<28x8xf32>,
      %164 = vector.extract_strided_slice %161 {offsets = [1, 0], sizes = [28, 8], strides = [1, 1]} : vector<32x8xf32> to vector<28x8xf32>
      %c0_158 = arith.constant 0 : index
      %c48_159 = arith.constant 48 : index
      %165 = vector.load %arg13[%c0_158, %c48_159] : memref<28x200xf32, #tpu.memory_space<vmem>>, vector<28x8xf32>
      tpu.vector_store %arg13[%c0_158, %c48_159], %164 {strides = array<i32>} : memref<28x200xf32, #tpu.memory_space<vmem>>, vector<28x8xf32>,
      %166 = vector.extract_strided_slice %161 {offsets = [2, 0], sizes = [28, 8], strides = [1, 1]} : vector<32x8xf32> to vector<28x8xf32>
      %c0_160 = arith.constant 0 : index
      %c56 = arith.constant 56 : index
      %167 = vector.load %arg13[%c0_160, %c56] : memref<28x200xf32, #tpu.memory_space<vmem>>, vector<28x8xf32>
      tpu.vector_store %arg13[%c0_160, %c56], %166 {strides = array<i32>} : memref<28x200xf32, #tpu.memory_space<vmem>>, vector<28x8xf32>,
      %168 = vector.extract_strided_slice %161 {offsets = [3, 0], sizes = [28, 8], strides = [1, 1]} : vector<32x8xf32> to vector<28x8xf32>
      %c0_161 = arith.constant 0 : index
      %c64_162 = arith.constant 64 : index
      %169 = vector.load %arg13[%c0_161, %c64_162] : memref<28x200xf32, #tpu.memory_space<vmem>>, vector<28x8xf32>
      tpu.vector_store %arg13[%c0_161, %c64_162], %168 {strides = array<i32>} : memref<28x200xf32, #tpu.memory_space<vmem>>, vector<28x8xf32>,
      %170 = vector.extract_strided_slice %161 {offsets = [4, 0], sizes = [28, 8], strides = [1, 1]} : vector<32x8xf32> to vector<28x8xf32>
      %c0_163 = arith.constant 0 : index
      %c72 = arith.constant 72 : index
      %171 = vector.load %arg13[%c0_163, %c72] : memref<28x200xf32, #tpu.memory_space<vmem>>, vector<28x8xf32>
      tpu.vector_store %arg13[%c0_163, %c72], %170 {strides = array<i32>} : memref<28x200xf32, #tpu.memory_space<vmem>>, vector<28x8xf32>,
      %c2_i32_164 = arith.constant 2 : i32
      %172 = arith.addi %143, %c2_i32_164 : i32
      %c0_165 = arith.constant 0 : index
      %173 = arith.index_cast %172 : i32 to index
      %c0_166 = arith.constant 0 : index
      %c0_167 = arith.constant 0 : index
      %174 = vector.load %arg1[%c0_165, %173, %c0_166, %c0_167] : memref<1x32x32x8xf32, #tpu.memory_space<vmem>>, vector<1x1x32x8xf32>
      %175 = vector.shape_cast %174 : vector<1x1x32x8xf32> to vector<32x8xf32>
      %176 = vector.extract_strided_slice %175 {offsets = [0, 0], sizes = [28, 8], strides = [1, 1]} : vector<32x8xf32> to vector<28x8xf32>
      %c0_168 = arith.constant 0 : index
      %c80_169 = arith.constant 80 : index
      %177 = vector.load %arg13[%c0_168, %c80_169] : memref<28x200xf32, #tpu.memory_space<vmem>>, vector<28x8xf32>
      tpu.vector_store %arg13[%c0_168, %c80_169], %176 {strides = array<i32>} : memref<28x200xf32, #tpu.memory_space<vmem>>, vector<28x8xf32>,
      %178 = vector.extract_strided_slice %175 {offsets = [1, 0], sizes = [28, 8], strides = [1, 1]} : vector<32x8xf32> to vector<28x8xf32>
      %c0_170 = arith.constant 0 : index
      %c88 = arith.constant 88 : index
      %179 = vector.load %arg13[%c0_170, %c88] : memref<28x200xf32, #tpu.memory_space<vmem>>, vector<28x8xf32>
      tpu.vector_store %arg13[%c0_170, %c88], %178 {strides = array<i32>} : memref<28x200xf32, #tpu.memory_space<vmem>>, vector<28x8xf32>,
      %180 = vector.extract_strided_slice %175 {offsets = [2, 0], sizes = [28, 8], strides = [1, 1]} : vector<32x8xf32> to vector<28x8xf32>
      %c0_171 = arith.constant 0 : index
      %c96_172 = arith.constant 96 : index
      %181 = vector.load %arg13[%c0_171, %c96_172] : memref<28x200xf32, #tpu.memory_space<vmem>>, vector<28x8xf32>
      tpu.vector_store %arg13[%c0_171, %c96_172], %180 {strides = array<i32>} : memref<28x200xf32, #tpu.memory_space<vmem>>, vector<28x8xf32>,
      %182 = vector.extract_strided_slice %175 {offsets = [3, 0], sizes = [28, 8], strides = [1, 1]} : vector<32x8xf32> to vector<28x8xf32>
      %c0_173 = arith.constant 0 : index
      %c104 = arith.constant 104 : index
      %183 = vector.load %arg13[%c0_173, %c104] : memref<28x200xf32, #tpu.memory_space<vmem>>, vector<28x8xf32>
      tpu.vector_store %arg13[%c0_173, %c104], %182 {strides = array<i32>} : memref<28x200xf32, #tpu.memory_space<vmem>>, vector<28x8xf32>,
      %184 = vector.extract_strided_slice %175 {offsets = [4, 0], sizes = [28, 8], strides = [1, 1]} : vector<32x8xf32> to vector<28x8xf32>
      %c0_174 = arith.constant 0 : index
      %c112_175 = arith.constant 112 : index
      %185 = vector.load %arg13[%c0_174, %c112_175] : memref<28x200xf32, #tpu.memory_space<vmem>>, vector<28x8xf32>
      tpu.vector_store %arg13[%c0_174, %c112_175], %184 {strides = array<i32>} : memref<28x200xf32, #tpu.memory_space<vmem>>, vector<28x8xf32>,
      %c3_i32 = arith.constant 3 : i32
      %186 = arith.addi %143, %c3_i32 : i32
      %c0_176 = arith.constant 0 : index
      %187 = arith.index_cast %186 : i32 to index
      %c0_177 = arith.constant 0 : index
      %c0_178 = arith.constant 0 : index
      %188 = vector.load %arg1[%c0_176, %187, %c0_177, %c0_178] : memref<1x32x32x8xf32, #tpu.memory_space<vmem>>, vector<1x1x32x8xf32>
      %189 = vector.shape_cast %188 : vector<1x1x32x8xf32> to vector<32x8xf32>
      %190 = vector.extract_strided_slice %189 {offsets = [0, 0], sizes = [28, 8], strides = [1, 1]} : vector<32x8xf32> to vector<28x8xf32>
      %c0_179 = arith.constant 0 : index
      %c120 = arith.constant 120 : index
      %191 = vector.load %arg13[%c0_179, %c120] : memref<28x200xf32, #tpu.memory_space<vmem>>, vector<28x8xf32>
      tpu.vector_store %arg13[%c0_179, %c120], %190 {strides = array<i32>} : memref<28x200xf32, #tpu.memory_space<vmem>>, vector<28x8xf32>,
      %192 = vector.extract_strided_slice %189 {offsets = [1, 0], sizes = [28, 8], strides = [1, 1]} : vector<32x8xf32> to vector<28x8xf32>
      %c0_180 = arith.constant 0 : index
      %c128_181 = arith.constant 128 : index
      %193 = vector.load %arg13[%c0_180, %c128_181] : memref<28x200xf32, #tpu.memory_space<vmem>>, vector<28x8xf32>
      tpu.vector_store %arg13[%c0_180, %c128_181], %192 {strides = array<i32>} : memref<28x200xf32, #tpu.memory_space<vmem>>, vector<28x8xf32>,
      %194 = vector.extract_strided_slice %189 {offsets = [2, 0], sizes = [28, 8], strides = [1, 1]} : vector<32x8xf32> to vector<28x8xf32>
      %c0_182 = arith.constant 0 : index
      %c136 = arith.constant 136 : index
      %195 = vector.load %arg13[%c0_182, %c136] : memref<28x200xf32, #tpu.memory_space<vmem>>, vector<28x8xf32>
      tpu.vector_store %arg13[%c0_182, %c136], %194 {strides = array<i32>} : memref<28x200xf32, #tpu.memory_space<vmem>>, vector<28x8xf32>,
      %196 = vector.extract_strided_slice %189 {offsets = [3, 0], sizes = [28, 8], strides = [1, 1]} : vector<32x8xf32> to vector<28x8xf32>
      %c0_183 = arith.constant 0 : index
      %c144_184 = arith.constant 144 : index
      %197 = vector.load %arg13[%c0_183, %c144_184] : memref<28x200xf32, #tpu.memory_space<vmem>>, vector<28x8xf32>
      tpu.vector_store %arg13[%c0_183, %c144_184], %196 {strides = array<i32>} : memref<28x200xf32, #tpu.memory_space<vmem>>, vector<28x8xf32>,
      %198 = vector.extract_strided_slice %189 {offsets = [4, 0], sizes = [28, 8], strides = [1, 1]} : vector<32x8xf32> to vector<28x8xf32>
      %c0_185 = arith.constant 0 : index
      %c152 = arith.constant 152 : index
      %199 = vector.load %arg13[%c0_185, %c152] : memref<28x200xf32, #tpu.memory_space<vmem>>, vector<28x8xf32>
      tpu.vector_store %arg13[%c0_185, %c152], %198 {strides = array<i32>} : memref<28x200xf32, #tpu.memory_space<vmem>>, vector<28x8xf32>,
      %c4_i32 = arith.constant 4 : i32
      %200 = arith.addi %143, %c4_i32 : i32
      %c0_186 = arith.constant 0 : index
      %201 = arith.index_cast %200 : i32 to index
      %c0_187 = arith.constant 0 : index
      %c0_188 = arith.constant 0 : index
      %202 = vector.load %arg1[%c0_186, %201, %c0_187, %c0_188] : memref<1x32x32x8xf32, #tpu.memory_space<vmem>>, vector<1x1x32x8xf32>
      %203 = vector.shape_cast %202 : vector<1x1x32x8xf32> to vector<32x8xf32>
      %204 = vector.extract_strided_slice %203 {offsets = [0, 0], sizes = [28, 8], strides = [1, 1]} : vector<32x8xf32> to vector<28x8xf32>
      %c0_189 = arith.constant 0 : index
      %c160_190 = arith.constant 160 : index
      %205 = vector.load %arg13[%c0_189, %c160_190] : memref<28x200xf32, #tpu.memory_space<vmem>>, vector<28x8xf32>
      tpu.vector_store %arg13[%c0_189, %c160_190], %204 {strides = array<i32>} : memref<28x200xf32, #tpu.memory_space<vmem>>, vector<28x8xf32>,
      %206 = vector.extract_strided_slice %203 {offsets = [1, 0], sizes = [28, 8], strides = [1, 1]} : vector<32x8xf32> to vector<28x8xf32>
      %c0_191 = arith.constant 0 : index
      %c168 = arith.constant 168 : index
      %207 = vector.load %arg13[%c0_191, %c168] : memref<28x200xf32, #tpu.memory_space<vmem>>, vector<28x8xf32>
      tpu.vector_store %arg13[%c0_191, %c168], %206 {strides = array<i32>} : memref<28x200xf32, #tpu.memory_space<vmem>>, vector<28x8xf32>,
      %208 = vector.extract_strided_slice %203 {offsets = [2, 0], sizes = [28, 8], strides = [1, 1]} : vector<32x8xf32> to vector<28x8xf32>
      %c0_192 = arith.constant 0 : index
      %c176_193 = arith.constant 176 : index
      %209 = vector.load %arg13[%c0_192, %c176_193] : memref<28x200xf32, #tpu.memory_space<vmem>>, vector<28x8xf32>
      tpu.vector_store %arg13[%c0_192, %c176_193], %208 {strides = array<i32>} : memref<28x200xf32, #tpu.memory_space<vmem>>, vector<28x8xf32>,
      %210 = vector.extract_strided_slice %203 {offsets = [3, 0], sizes = [28, 8], strides = [1, 1]} : vector<32x8xf32> to vector<28x8xf32>
      %c0_194 = arith.constant 0 : index
      %c184 = arith.constant 184 : index
      %211 = vector.load %arg13[%c0_194, %c184] : memref<28x200xf32, #tpu.memory_space<vmem>>, vector<28x8xf32>
      tpu.vector_store %arg13[%c0_194, %c184], %210 {strides = array<i32>} : memref<28x200xf32, #tpu.memory_space<vmem>>, vector<28x8xf32>,
      %212 = vector.extract_strided_slice %203 {offsets = [4, 0], sizes = [28, 8], strides = [1, 1]} : vector<32x8xf32> to vector<28x8xf32>
      %c0_195 = arith.constant 0 : index
      %c192_196 = arith.constant 192 : index
      %213 = vector.load %arg13[%c0_195, %c192_196] : memref<28x200xf32, #tpu.memory_space<vmem>>, vector<28x8xf32>
      tpu.vector_store %arg13[%c0_195, %c192_196], %212 {strides = array<i32>} : memref<28x200xf32, #tpu.memory_space<vmem>>, vector<28x8xf32>,
      %c0_197 = arith.constant 0 : index
      %c0_198 = arith.constant 0 : index
      %214 = vector.load %arg13[%c0_197, %c0_198] : memref<28x200xf32, #tpu.memory_space<vmem>>, vector<28x200xf32>
      %c0_199 = arith.constant 0 : index
      %c0_200 = arith.constant 0 : index
      %215 = vector.load %arg2[%c0_199, %c0_200] : memref<200x128xf32, #tpu.memory_space<vmem>>, vector<200x128xf32>
      %cst_201 = arith.constant dense<0.000000e+00> : vector<28x128xf32>
      %216 = tpu.matmul %214, %215, %cst_201 {dimension_numbers = #tpu.dot_dimension_numbers<[1], [0], [0], [1], [0, 0, 1, 1], [], []>} : vector<28x200xf32>, vector<200x128xf32>, vector<28x128xf32> -> vector<28x128xf32>
      %c0_202 = arith.constant 0 : index
      %c0_203 = arith.constant 0 : index
      %217 = vector.load %arg3[%c0_202, %c0_203] : memref<1x128xf32, #tpu.memory_space<vmem>>, vector<1x128xf32>
      %218 = vector.broadcast %217 : vector<1x128xf32> to vector<28x128xf32>
      %219 = arith.addf %216, %218 : vector<28x128xf32>
      %cst_204 = arith.constant 0.000000e+00 : f32
      %220 = vector.broadcast %cst_204 : f32 to vector<28x128xf32>
      %221 = arith.maximumf %219, %220 : vector<28x128xf32>
      %c2_i32_205 = arith.constant 2 : i32
      %222 = arith.muli %c2_i32_205, %arg16 : i32
      %c1_i32_206 = arith.constant 1 : i32
      %223 = arith.addi %222, %c1_i32_206 : i32
      %c0_i32_207 = arith.constant 0 : i32
      %224 = arith.addi %223, %c0_i32_207 : i32
      %c0_208 = arith.constant 0 : index
      %225 = arith.index_cast %224 : i32 to index
      %c0_209 = arith.constant 0 : index
      %c0_210 = arith.constant 0 : index
      %226 = vector.load %arg1[%c0_208, %225, %c0_209, %c0_210] : memref<1x32x32x8xf32, #tpu.memory_space<vmem>>, vector<1x1x32x8xf32>
      %227 = vector.shape_cast %226 : vector<1x1x32x8xf32> to vector<32x8xf32>
      %228 = vector.extract_strided_slice %227 {offsets = [0, 0], sizes = [28, 8], strides = [1, 1]} : vector<32x8xf32> to vector<28x8xf32>
      %c0_211 = arith.constant 0 : index
      %c0_212 = arith.constant 0 : index
      %229 = vector.load %arg13[%c0_211, %c0_212] : memref<28x200xf32, #tpu.memory_space<vmem>>, vector<28x8xf32>
      tpu.vector_store %arg13[%c0_211, %c0_212], %228 {strides = array<i32>} : memref<28x200xf32, #tpu.memory_space<vmem>>, vector<28x8xf32>,
      %230 = vector.extract_strided_slice %227 {offsets = [1, 0], sizes = [28, 8], strides = [1, 1]} : vector<32x8xf32> to vector<28x8xf32>
      %c0_213 = arith.constant 0 : index
      %c8_214 = arith.constant 8 : index
      %231 = vector.load %arg13[%c0_213, %c8_214] : memref<28x200xf32, #tpu.memory_space<vmem>>, vector<28x8xf32>
      tpu.vector_store %arg13[%c0_213, %c8_214], %230 {strides = array<i32>} : memref<28x200xf32, #tpu.memory_space<vmem>>, vector<28x8xf32>,
      %232 = vector.extract_strided_slice %227 {offsets = [2, 0], sizes = [28, 8], strides = [1, 1]} : vector<32x8xf32> to vector<28x8xf32>
      %c0_215 = arith.constant 0 : index
      %c16_216 = arith.constant 16 : index
      %233 = vector.load %arg13[%c0_215, %c16_216] : memref<28x200xf32, #tpu.memory_space<vmem>>, vector<28x8xf32>
      tpu.vector_store %arg13[%c0_215, %c16_216], %232 {strides = array<i32>} : memref<28x200xf32, #tpu.memory_space<vmem>>, vector<28x8xf32>,
      %234 = vector.extract_strided_slice %227 {offsets = [3, 0], sizes = [28, 8], strides = [1, 1]} : vector<32x8xf32> to vector<28x8xf32>
      %c0_217 = arith.constant 0 : index
      %c24_218 = arith.constant 24 : index
      %235 = vector.load %arg13[%c0_217, %c24_218] : memref<28x200xf32, #tpu.memory_space<vmem>>, vector<28x8xf32>
      tpu.vector_store %arg13[%c0_217, %c24_218], %234 {strides = array<i32>} : memref<28x200xf32, #tpu.memory_space<vmem>>, vector<28x8xf32>,
      %236 = vector.extract_strided_slice %227 {offsets = [4, 0], sizes = [28, 8], strides = [1, 1]} : vector<32x8xf32> to vector<28x8xf32>
      %c0_219 = arith.constant 0 : index
      %c32_220 = arith.constant 32 : index
      %237 = vector.load %arg13[%c0_219, %c32_220] : memref<28x200xf32, #tpu.memory_space<vmem>>, vector<28x8xf32>
      tpu.vector_store %arg13[%c0_219, %c32_220], %236 {strides = array<i32>} : memref<28x200xf32, #tpu.memory_space<vmem>>, vector<28x8xf32>,
      %c1_i32_221 = arith.constant 1 : i32
      %238 = arith.addi %223, %c1_i32_221 : i32
      %c0_222 = arith.constant 0 : index
      %239 = arith.index_cast %238 : i32 to index
      %c0_223 = arith.constant 0 : index
      %c0_224 = arith.constant 0 : index
      %240 = vector.load %arg1[%c0_222, %239, %c0_223, %c0_224] : memref<1x32x32x8xf32, #tpu.memory_space<vmem>>, vector<1x1x32x8xf32>
      %241 = vector.shape_cast %240 : vector<1x1x32x8xf32> to vector<32x8xf32>
      %242 = vector.extract_strided_slice %241 {offsets = [0, 0], sizes = [28, 8], strides = [1, 1]} : vector<32x8xf32> to vector<28x8xf32>
      %c0_225 = arith.constant 0 : index
      %c40_226 = arith.constant 40 : index
      %243 = vector.load %arg13[%c0_225, %c40_226] : memref<28x200xf32, #tpu.memory_space<vmem>>, vector<28x8xf32>
      tpu.vector_store %arg13[%c0_225, %c40_226], %242 {strides = array<i32>} : memref<28x200xf32, #tpu.memory_space<vmem>>, vector<28x8xf32>,
      %244 = vector.extract_strided_slice %241 {offsets = [1, 0], sizes = [28, 8], strides = [1, 1]} : vector<32x8xf32> to vector<28x8xf32>
      %c0_227 = arith.constant 0 : index
      %c48_228 = arith.constant 48 : index
      %245 = vector.load %arg13[%c0_227, %c48_228] : memref<28x200xf32, #tpu.memory_space<vmem>>, vector<28x8xf32>
      tpu.vector_store %arg13[%c0_227, %c48_228], %244 {strides = array<i32>} : memref<28x200xf32, #tpu.memory_space<vmem>>, vector<28x8xf32>,
      %246 = vector.extract_strided_slice %241 {offsets = [2, 0], sizes = [28, 8], strides = [1, 1]} : vector<32x8xf32> to vector<28x8xf32>
      %c0_229 = arith.constant 0 : index
      %c56_230 = arith.constant 56 : index
      %247 = vector.load %arg13[%c0_229, %c56_230] : memref<28x200xf32, #tpu.memory_space<vmem>>, vector<28x8xf32>
      tpu.vector_store %arg13[%c0_229, %c56_230], %246 {strides = array<i32>} : memref<28x200xf32, #tpu.memory_space<vmem>>, vector<28x8xf32>,
      %248 = vector.extract_strided_slice %241 {offsets = [3, 0], sizes = [28, 8], strides = [1, 1]} : vector<32x8xf32> to vector<28x8xf32>
      %c0_231 = arith.constant 0 : index
      %c64_232 = arith.constant 64 : index
      %249 = vector.load %arg13[%c0_231, %c64_232] : memref<28x200xf32, #tpu.memory_space<vmem>>, vector<28x8xf32>
      tpu.vector_store %arg13[%c0_231, %c64_232], %248 {strides = array<i32>} : memref<28x200xf32, #tpu.memory_space<vmem>>, vector<28x8xf32>,
      %250 = vector.extract_strided_slice %241 {offsets = [4, 0], sizes = [28, 8], strides = [1, 1]} : vector<32x8xf32> to vector<28x8xf32>
      %c0_233 = arith.constant 0 : index
      %c72_234 = arith.constant 72 : index
      %251 = vector.load %arg13[%c0_233, %c72_234] : memref<28x200xf32, #tpu.memory_space<vmem>>, vector<28x8xf32>
      tpu.vector_store %arg13[%c0_233, %c72_234], %250 {strides = array<i32>} : memref<28x200xf32, #tpu.memory_space<vmem>>, vector<28x8xf32>,
      %c2_i32_235 = arith.constant 2 : i32
      %252 = arith.addi %223, %c2_i32_235 : i32
      %c0_236 = arith.constant 0 : index
      %253 = arith.index_cast %252 : i32 to index
      %c0_237 = arith.constant 0 : index
      %c0_238 = arith.constant 0 : index
      %254 = vector.load %arg1[%c0_236, %253, %c0_237, %c0_238] : memref<1x32x32x8xf32, #tpu.memory_space<vmem>>, vector<1x1x32x8xf32>
      %255 = vector.shape_cast %254 : vector<1x1x32x8xf32> to vector<32x8xf32>
      %256 = vector.extract_strided_slice %255 {offsets = [0, 0], sizes = [28, 8], strides = [1, 1]} : vector<32x8xf32> to vector<28x8xf32>
      %c0_239 = arith.constant 0 : index
      %c80_240 = arith.constant 80 : index
      %257 = vector.load %arg13[%c0_239, %c80_240] : memref<28x200xf32, #tpu.memory_space<vmem>>, vector<28x8xf32>
      tpu.vector_store %arg13[%c0_239, %c80_240], %256 {strides = array<i32>} : memref<28x200xf32, #tpu.memory_space<vmem>>, vector<28x8xf32>,
      %258 = vector.extract_strided_slice %255 {offsets = [1, 0], sizes = [28, 8], strides = [1, 1]} : vector<32x8xf32> to vector<28x8xf32>
      %c0_241 = arith.constant 0 : index
      %c88_242 = arith.constant 88 : index
      %259 = vector.load %arg13[%c0_241, %c88_242] : memref<28x200xf32, #tpu.memory_space<vmem>>, vector<28x8xf32>
      tpu.vector_store %arg13[%c0_241, %c88_242], %258 {strides = array<i32>} : memref<28x200xf32, #tpu.memory_space<vmem>>, vector<28x8xf32>,
      %260 = vector.extract_strided_slice %255 {offsets = [2, 0], sizes = [28, 8], strides = [1, 1]} : vector<32x8xf32> to vector<28x8xf32>
      %c0_243 = arith.constant 0 : index
      %c96_244 = arith.constant 96 : index
      %261 = vector.load %arg13[%c0_243, %c96_244] : memref<28x200xf32, #tpu.memory_space<vmem>>, vector<28x8xf32>
      tpu.vector_store %arg13[%c0_243, %c96_244], %260 {strides = array<i32>} : memref<28x200xf32, #tpu.memory_space<vmem>>, vector<28x8xf32>,
      %262 = vector.extract_strided_slice %255 {offsets = [3, 0], sizes = [28, 8], strides = [1, 1]} : vector<32x8xf32> to vector<28x8xf32>
      %c0_245 = arith.constant 0 : index
      %c104_246 = arith.constant 104 : index
      %263 = vector.load %arg13[%c0_245, %c104_246] : memref<28x200xf32, #tpu.memory_space<vmem>>, vector<28x8xf32>
      tpu.vector_store %arg13[%c0_245, %c104_246], %262 {strides = array<i32>} : memref<28x200xf32, #tpu.memory_space<vmem>>, vector<28x8xf32>,
      %264 = vector.extract_strided_slice %255 {offsets = [4, 0], sizes = [28, 8], strides = [1, 1]} : vector<32x8xf32> to vector<28x8xf32>
      %c0_247 = arith.constant 0 : index
      %c112_248 = arith.constant 112 : index
      %265 = vector.load %arg13[%c0_247, %c112_248] : memref<28x200xf32, #tpu.memory_space<vmem>>, vector<28x8xf32>
      tpu.vector_store %arg13[%c0_247, %c112_248], %264 {strides = array<i32>} : memref<28x200xf32, #tpu.memory_space<vmem>>, vector<28x8xf32>,
      %c3_i32_249 = arith.constant 3 : i32
      %266 = arith.addi %223, %c3_i32_249 : i32
      %c0_250 = arith.constant 0 : index
      %267 = arith.index_cast %266 : i32 to index
      %c0_251 = arith.constant 0 : index
      %c0_252 = arith.constant 0 : index
      %268 = vector.load %arg1[%c0_250, %267, %c0_251, %c0_252] : memref<1x32x32x8xf32, #tpu.memory_space<vmem>>, vector<1x1x32x8xf32>
      %269 = vector.shape_cast %268 : vector<1x1x32x8xf32> to vector<32x8xf32>
      %270 = vector.extract_strided_slice %269 {offsets = [0, 0], sizes = [28, 8], strides = [1, 1]} : vector<32x8xf32> to vector<28x8xf32>
      %c0_253 = arith.constant 0 : index
      %c120_254 = arith.constant 120 : index
      %271 = vector.load %arg13[%c0_253, %c120_254] : memref<28x200xf32, #tpu.memory_space<vmem>>, vector<28x8xf32>
      tpu.vector_store %arg13[%c0_253, %c120_254], %270 {strides = array<i32>} : memref<28x200xf32, #tpu.memory_space<vmem>>, vector<28x8xf32>,
      %272 = vector.extract_strided_slice %269 {offsets = [1, 0], sizes = [28, 8], strides = [1, 1]} : vector<32x8xf32> to vector<28x8xf32>
      %c0_255 = arith.constant 0 : index
      %c128_256 = arith.constant 128 : index
      %273 = vector.load %arg13[%c0_255, %c128_256] : memref<28x200xf32, #tpu.memory_space<vmem>>, vector<28x8xf32>
      tpu.vector_store %arg13[%c0_255, %c128_256], %272 {strides = array<i32>} : memref<28x200xf32, #tpu.memory_space<vmem>>, vector<28x8xf32>,
      %274 = vector.extract_strided_slice %269 {offsets = [2, 0], sizes = [28, 8], strides = [1, 1]} : vector<32x8xf32> to vector<28x8xf32>
      %c0_257 = arith.constant 0 : index
      %c136_258 = arith.constant 136 : index
      %275 = vector.load %arg13[%c0_257, %c136_258] : memref<28x200xf32, #tpu.memory_space<vmem>>, vector<28x8xf32>
      tpu.vector_store %arg13[%c0_257, %c136_258], %274 {strides = array<i32>} : memref<28x200xf32, #tpu.memory_space<vmem>>, vector<28x8xf32>,
      %276 = vector.extract_strided_slice %269 {offsets = [3, 0], sizes = [28, 8], strides = [1, 1]} : vector<32x8xf32> to vector<28x8xf32>
      %c0_259 = arith.constant 0 : index
      %c144_260 = arith.constant 144 : index
      %277 = vector.load %arg13[%c0_259, %c144_260] : memref<28x200xf32, #tpu.memory_space<vmem>>, vector<28x8xf32>
      tpu.vector_store %arg13[%c0_259, %c144_260], %276 {strides = array<i32>} : memref<28x200xf32, #tpu.memory_space<vmem>>, vector<28x8xf32>,
      %278 = vector.extract_strided_slice %269 {offsets = [4, 0], sizes = [28, 8], strides = [1, 1]} : vector<32x8xf32> to vector<28x8xf32>
      %c0_261 = arith.constant 0 : index
      %c152_262 = arith.constant 152 : index
      %279 = vector.load %arg13[%c0_261, %c152_262] : memref<28x200xf32, #tpu.memory_space<vmem>>, vector<28x8xf32>
      tpu.vector_store %arg13[%c0_261, %c152_262], %278 {strides = array<i32>} : memref<28x200xf32, #tpu.memory_space<vmem>>, vector<28x8xf32>,
      %c4_i32_263 = arith.constant 4 : i32
      %280 = arith.addi %223, %c4_i32_263 : i32
      %c0_264 = arith.constant 0 : index
      %281 = arith.index_cast %280 : i32 to index
      %c0_265 = arith.constant 0 : index
      %c0_266 = arith.constant 0 : index
      %282 = vector.load %arg1[%c0_264, %281, %c0_265, %c0_266] : memref<1x32x32x8xf32, #tpu.memory_space<vmem>>, vector<1x1x32x8xf32>
      %283 = vector.shape_cast %282 : vector<1x1x32x8xf32> to vector<32x8xf32>
      %284 = vector.extract_strided_slice %283 {offsets = [0, 0], sizes = [28, 8], strides = [1, 1]} : vector<32x8xf32> to vector<28x8xf32>
      %c0_267 = arith.constant 0 : index
      %c160_268 = arith.constant 160 : index
      %285 = vector.load %arg13[%c0_267, %c160_268] : memref<28x200xf32, #tpu.memory_space<vmem>>, vector<28x8xf32>
      tpu.vector_store %arg13[%c0_267, %c160_268], %284 {strides = array<i32>} : memref<28x200xf32, #tpu.memory_space<vmem>>, vector<28x8xf32>,
      %286 = vector.extract_strided_slice %283 {offsets = [1, 0], sizes = [28, 8], strides = [1, 1]} : vector<32x8xf32> to vector<28x8xf32>
      %c0_269 = arith.constant 0 : index
      %c168_270 = arith.constant 168 : index
      %287 = vector.load %arg13[%c0_269, %c168_270] : memref<28x200xf32, #tpu.memory_space<vmem>>, vector<28x8xf32>
      tpu.vector_store %arg13[%c0_269, %c168_270], %286 {strides = array<i32>} : memref<28x200xf32, #tpu.memory_space<vmem>>, vector<28x8xf32>,
      %288 = vector.extract_strided_slice %283 {offsets = [2, 0], sizes = [28, 8], strides = [1, 1]} : vector<32x8xf32> to vector<28x8xf32>
      %c0_271 = arith.constant 0 : index
      %c176_272 = arith.constant 176 : index
      %289 = vector.load %arg13[%c0_271, %c176_272] : memref<28x200xf32, #tpu.memory_space<vmem>>, vector<28x8xf32>
      tpu.vector_store %arg13[%c0_271, %c176_272], %288 {strides = array<i32>} : memref<28x200xf32, #tpu.memory_space<vmem>>, vector<28x8xf32>,
      %290 = vector.extract_strided_slice %283 {offsets = [3, 0], sizes = [28, 8], strides = [1, 1]} : vector<32x8xf32> to vector<28x8xf32>
      %c0_273 = arith.constant 0 : index
      %c184_274 = arith.constant 184 : index
      %291 = vector.load %arg13[%c0_273, %c184_274] : memref<28x200xf32, #tpu.memory_space<vmem>>, vector<28x8xf32>
      tpu.vector_store %arg13[%c0_273, %c184_274], %290 {strides = array<i32>} : memref<28x200xf32, #tpu.memory_space<vmem>>, vector<28x8xf32>,
      %292 = vector.extract_strided_slice %283 {offsets = [4, 0], sizes = [28, 8], strides = [1, 1]} : vector<32x8xf32> to vector<28x8xf32>
      %c0_275 = arith.constant 0 : index
      %c192_276 = arith.constant 192 : index
      %293 = vector.load %arg13[%c0_275, %c192_276] : memref<28x200xf32, #tpu.memory_space<vmem>>, vector<28x8xf32>
      tpu.vector_store %arg13[%c0_275, %c192_276], %292 {strides = array<i32>} : memref<28x200xf32, #tpu.memory_space<vmem>>, vector<28x8xf32>,
      %c0_277 = arith.constant 0 : index
      %c0_278 = arith.constant 0 : index
      %294 = vector.load %arg13[%c0_277, %c0_278] : memref<28x200xf32, #tpu.memory_space<vmem>>, vector<28x200xf32>
      %c0_279 = arith.constant 0 : index
      %c0_280 = arith.constant 0 : index
      %295 = vector.load %arg2[%c0_279, %c0_280] : memref<200x128xf32, #tpu.memory_space<vmem>>, vector<200x128xf32>
      %cst_281 = arith.constant dense<0.000000e+00> : vector<28x128xf32>
      %296 = tpu.matmul %294, %295, %cst_281 {dimension_numbers = #tpu.dot_dimension_numbers<[1], [0], [0], [1], [0, 0, 1, 1], [], []>} : vector<28x200xf32>, vector<200x128xf32>, vector<28x128xf32> -> vector<28x128xf32>
      %c0_282 = arith.constant 0 : index
      %c0_283 = arith.constant 0 : index
      %297 = vector.load %arg3[%c0_282, %c0_283] : memref<1x128xf32, #tpu.memory_space<vmem>>, vector<1x128xf32>
      %298 = vector.broadcast %297 : vector<1x128xf32> to vector<28x128xf32>
      %299 = arith.addf %296, %298 : vector<28x128xf32>
      %cst_284 = arith.constant 0.000000e+00 : f32
      %300 = vector.broadcast %cst_284 : f32 to vector<28x128xf32>
      %301 = arith.maximumf %299, %300 : vector<28x128xf32>
      %302 = arith.maximumf %221, %301 : vector<28x128xf32>
      %303 = vector.extract_strided_slice %302 {offsets = [0, 0], sizes = [1, 128], strides = [1, 1]} : vector<28x128xf32> to vector<1x128xf32>
      %304 = vector.extract_strided_slice %302 {offsets = [1, 0], sizes = [1, 128], strides = [1, 1]} : vector<28x128xf32> to vector<1x128xf32>
      %305 = arith.maximumf %303, %304 : vector<1x128xf32>
      %306 = vector.extract_strided_slice %305 {offsets = [0, 0], sizes = [1, 8], strides = [1, 1]} : vector<1x128xf32> to vector<1x8xf32>
      %307 = arith.index_cast %arg16 : i32 to index
      %c0_285 = arith.constant 0 : index
      %c0_286 = arith.constant 0 : index
      %308 = vector.load %arg14[%307, %c0_285, %c0_286] : memref<14x14x8xf32, #tpu.memory_space<vmem>>, vector<1x1x8xf32>
      %309 = vector.shape_cast %308 : vector<1x1x8xf32> to vector<1x8xf32>
      %310 = vector.shape_cast %306 : vector<1x8xf32> to vector<1x1x8xf32>
      tpu.vector_store %arg14[%307, %c0_285, %c0_286], %310 {strides = array<i32>} : memref<14x14x8xf32, #tpu.memory_space<vmem>>, vector<1x1x8xf32>,
      %311 = vector.extract_strided_slice %302 {offsets = [2, 0], sizes = [1, 128], strides = [1, 1]} : vector<28x128xf32> to vector<1x128xf32>
      %312 = vector.extract_strided_slice %302 {offsets = [3, 0], sizes = [1, 128], strides = [1, 1]} : vector<28x128xf32> to vector<1x128xf32>
      %313 = arith.maximumf %311, %312 : vector<1x128xf32>
      %314 = vector.extract_strided_slice %313 {offsets = [0, 0], sizes = [1, 8], strides = [1, 1]} : vector<1x128xf32> to vector<1x8xf32>
      %315 = arith.index_cast %arg16 : i32 to index
      %c1_287 = arith.constant 1 : index
      %c0_288 = arith.constant 0 : index
      %316 = vector.load %arg14[%315, %c1_287, %c0_288] : memref<14x14x8xf32, #tpu.memory_space<vmem>>, vector<1x1x8xf32>
      %317 = vector.shape_cast %316 : vector<1x1x8xf32> to vector<1x8xf32>
      %318 = vector.shape_cast %314 : vector<1x8xf32> to vector<1x1x8xf32>
      tpu.vector_store %arg14[%315, %c1_287, %c0_288], %318 {strides = array<i32>} : memref<14x14x8xf32, #tpu.memory_space<vmem>>, vector<1x1x8xf32>,
      %319 = vector.extract_strided_slice %302 {offsets = [4, 0], sizes = [1, 128], strides = [1, 1]} : vector<28x128xf32> to vector<1x128xf32>
      %320 = vector.extract_strided_slice %302 {offsets = [5, 0], sizes = [1, 128], strides = [1, 1]} : vector<28x128xf32> to vector<1x128xf32>
      %321 = arith.maximumf %319, %320 : vector<1x128xf32>
      %322 = vector.extract_strided_slice %321 {offsets = [0, 0], sizes = [1, 8], strides = [1, 1]} : vector<1x128xf32> to vector<1x8xf32>
      %323 = arith.index_cast %arg16 : i32 to index
      %c2_289 = arith.constant 2 : index
      %c0_290 = arith.constant 0 : index
      %324 = vector.load %arg14[%323, %c2_289, %c0_290] : memref<14x14x8xf32, #tpu.memory_space<vmem>>, vector<1x1x8xf32>
      %325 = vector.shape_cast %324 : vector<1x1x8xf32> to vector<1x8xf32>
      %326 = vector.shape_cast %322 : vector<1x8xf32> to vector<1x1x8xf32>
      tpu.vector_store %arg14[%323, %c2_289, %c0_290], %326 {strides = array<i32>} : memref<14x14x8xf32, #tpu.memory_space<vmem>>, vector<1x1x8xf32>,
      %327 = vector.extract_strided_slice %302 {offsets = [6, 0], sizes = [1, 128], strides = [1, 1]} : vector<28x128xf32> to vector<1x128xf32>
      %328 = vector.extract_strided_slice %302 {offsets = [7, 0], sizes = [1, 128], strides = [1, 1]} : vector<28x128xf32> to vector<1x128xf32>
      %329 = arith.maximumf %327, %328 : vector<1x128xf32>
      %330 = vector.extract_strided_slice %329 {offsets = [0, 0], sizes = [1, 8], strides = [1, 1]} : vector<1x128xf32> to vector<1x8xf32>
      %331 = arith.index_cast %arg16 : i32 to index
      %c3_291 = arith.constant 3 : index
      %c0_292 = arith.constant 0 : index
      %332 = vector.load %arg14[%331, %c3_291, %c0_292] : memref<14x14x8xf32, #tpu.memory_space<vmem>>, vector<1x1x8xf32>
      %333 = vector.shape_cast %332 : vector<1x1x8xf32> to vector<1x8xf32>
      %334 = vector.shape_cast %330 : vector<1x8xf32> to vector<1x1x8xf32>
      tpu.vector_store %arg14[%331, %c3_291, %c0_292], %334 {strides = array<i32>} : memref<14x14x8xf32, #tpu.memory_space<vmem>>, vector<1x1x8xf32>,
      %335 = vector.extract_strided_slice %302 {offsets = [8, 0], sizes = [1, 128], strides = [1, 1]} : vector<28x128xf32> to vector<1x128xf32>
      %336 = vector.extract_strided_slice %302 {offsets = [9, 0], sizes = [1, 128], strides = [1, 1]} : vector<28x128xf32> to vector<1x128xf32>
      %337 = arith.maximumf %335, %336 : vector<1x128xf32>
      %338 = vector.extract_strided_slice %337 {offsets = [0, 0], sizes = [1, 8], strides = [1, 1]} : vector<1x128xf32> to vector<1x8xf32>
      %339 = arith.index_cast %arg16 : i32 to index
      %c4_293 = arith.constant 4 : index
      %c0_294 = arith.constant 0 : index
      %340 = vector.load %arg14[%339, %c4_293, %c0_294] : memref<14x14x8xf32, #tpu.memory_space<vmem>>, vector<1x1x8xf32>
      %341 = vector.shape_cast %340 : vector<1x1x8xf32> to vector<1x8xf32>
      %342 = vector.shape_cast %338 : vector<1x8xf32> to vector<1x1x8xf32>
      tpu.vector_store %arg14[%339, %c4_293, %c0_294], %342 {strides = array<i32>} : memref<14x14x8xf32, #tpu.memory_space<vmem>>, vector<1x1x8xf32>,
      %343 = vector.extract_strided_slice %302 {offsets = [10, 0], sizes = [1, 128], strides = [1, 1]} : vector<28x128xf32> to vector<1x128xf32>
      %344 = vector.extract_strided_slice %302 {offsets = [11, 0], sizes = [1, 128], strides = [1, 1]} : vector<28x128xf32> to vector<1x128xf32>
      %345 = arith.maximumf %343, %344 : vector<1x128xf32>
      %346 = vector.extract_strided_slice %345 {offsets = [0, 0], sizes = [1, 8], strides = [1, 1]} : vector<1x128xf32> to vector<1x8xf32>
      %347 = arith.index_cast %arg16 : i32 to index
      %c5 = arith.constant 5 : index
      %c0_295 = arith.constant 0 : index
      %348 = vector.load %arg14[%347, %c5, %c0_295] : memref<14x14x8xf32, #tpu.memory_space<vmem>>, vector<1x1x8xf32>
      %349 = vector.shape_cast %348 : vector<1x1x8xf32> to vector<1x8xf32>
      %350 = vector.shape_cast %346 : vector<1x8xf32> to vector<1x1x8xf32>
      tpu.vector_store %arg14[%347, %c5, %c0_295], %350 {strides = array<i32>} : memref<14x14x8xf32, #tpu.memory_space<vmem>>, vector<1x1x8xf32>,
      %351 = vector.extract_strided_slice %302 {offsets = [12, 0], sizes = [1, 128], strides = [1, 1]} : vector<28x128xf32> to vector<1x128xf32>
      %352 = vector.extract_strided_slice %302 {offsets = [13, 0], sizes = [1, 128], strides = [1, 1]} : vector<28x128xf32> to vector<1x128xf32>
      %353 = arith.maximumf %351, %352 : vector<1x128xf32>
      %354 = vector.extract_strided_slice %353 {offsets = [0, 0], sizes = [1, 8], strides = [1, 1]} : vector<1x128xf32> to vector<1x8xf32>
      %355 = arith.index_cast %arg16 : i32 to index
      %c6 = arith.constant 6 : index
      %c0_296 = arith.constant 0 : index
      %356 = vector.load %arg14[%355, %c6, %c0_296] : memref<14x14x8xf32, #tpu.memory_space<vmem>>, vector<1x1x8xf32>
      %357 = vector.shape_cast %356 : vector<1x1x8xf32> to vector<1x8xf32>
      %358 = vector.shape_cast %354 : vector<1x8xf32> to vector<1x1x8xf32>
      tpu.vector_store %arg14[%355, %c6, %c0_296], %358 {strides = array<i32>} : memref<14x14x8xf32, #tpu.memory_space<vmem>>, vector<1x1x8xf32>,
      %359 = vector.extract_strided_slice %302 {offsets = [14, 0], sizes = [1, 128], strides = [1, 1]} : vector<28x128xf32> to vector<1x128xf32>
      %360 = vector.extract_strided_slice %302 {offsets = [15, 0], sizes = [1, 128], strides = [1, 1]} : vector<28x128xf32> to vector<1x128xf32>
      %361 = arith.maximumf %359, %360 : vector<1x128xf32>
      %362 = vector.extract_strided_slice %361 {offsets = [0, 0], sizes = [1, 8], strides = [1, 1]} : vector<1x128xf32> to vector<1x8xf32>
      %363 = arith.index_cast %arg16 : i32 to index
      %c7 = arith.constant 7 : index
      %c0_297 = arith.constant 0 : index
      %364 = vector.load %arg14[%363, %c7, %c0_297] : memref<14x14x8xf32, #tpu.memory_space<vmem>>, vector<1x1x8xf32>
      %365 = vector.shape_cast %364 : vector<1x1x8xf32> to vector<1x8xf32>
      %366 = vector.shape_cast %362 : vector<1x8xf32> to vector<1x1x8xf32>
      tpu.vector_store %arg14[%363, %c7, %c0_297], %366 {strides = array<i32>} : memref<14x14x8xf32, #tpu.memory_space<vmem>>, vector<1x1x8xf32>,
      %367 = vector.extract_strided_slice %302 {offsets = [16, 0], sizes = [1, 128], strides = [1, 1]} : vector<28x128xf32> to vector<1x128xf32>
      %368 = vector.extract_strided_slice %302 {offsets = [17, 0], sizes = [1, 128], strides = [1, 1]} : vector<28x128xf32> to vector<1x128xf32>
      %369 = arith.maximumf %367, %368 : vector<1x128xf32>
      %370 = vector.extract_strided_slice %369 {offsets = [0, 0], sizes = [1, 8], strides = [1, 1]} : vector<1x128xf32> to vector<1x8xf32>
      %371 = arith.index_cast %arg16 : i32 to index
      %c8_298 = arith.constant 8 : index
      %c0_299 = arith.constant 0 : index
      %372 = vector.load %arg14[%371, %c8_298, %c0_299] : memref<14x14x8xf32, #tpu.memory_space<vmem>>, vector<1x1x8xf32>
      %373 = vector.shape_cast %372 : vector<1x1x8xf32> to vector<1x8xf32>
      %374 = vector.shape_cast %370 : vector<1x8xf32> to vector<1x1x8xf32>
      tpu.vector_store %arg14[%371, %c8_298, %c0_299], %374 {strides = array<i32>} : memref<14x14x8xf32, #tpu.memory_space<vmem>>, vector<1x1x8xf32>,
      %375 = vector.extract_strided_slice %302 {offsets = [18, 0], sizes = [1, 128], strides = [1, 1]} : vector<28x128xf32> to vector<1x128xf32>
      %376 = vector.extract_strided_slice %302 {offsets = [19, 0], sizes = [1, 128], strides = [1, 1]} : vector<28x128xf32> to vector<1x128xf32>
      %377 = arith.maximumf %375, %376 : vector<1x128xf32>
      %378 = vector.extract_strided_slice %377 {offsets = [0, 0], sizes = [1, 8], strides = [1, 1]} : vector<1x128xf32> to vector<1x8xf32>
      %379 = arith.index_cast %arg16 : i32 to index
      %c9 = arith.constant 9 : index
      %c0_300 = arith.constant 0 : index
      %380 = vector.load %arg14[%379, %c9, %c0_300] : memref<14x14x8xf32, #tpu.memory_space<vmem>>, vector<1x1x8xf32>
      %381 = vector.shape_cast %380 : vector<1x1x8xf32> to vector<1x8xf32>
      %382 = vector.shape_cast %378 : vector<1x8xf32> to vector<1x1x8xf32>
      tpu.vector_store %arg14[%379, %c9, %c0_300], %382 {strides = array<i32>} : memref<14x14x8xf32, #tpu.memory_space<vmem>>, vector<1x1x8xf32>,
      %383 = vector.extract_strided_slice %302 {offsets = [20, 0], sizes = [1, 128], strides = [1, 1]} : vector<28x128xf32> to vector<1x128xf32>
      %384 = vector.extract_strided_slice %302 {offsets = [21, 0], sizes = [1, 128], strides = [1, 1]} : vector<28x128xf32> to vector<1x128xf32>
      %385 = arith.maximumf %383, %384 : vector<1x128xf32>
      %386 = vector.extract_strided_slice %385 {offsets = [0, 0], sizes = [1, 8], strides = [1, 1]} : vector<1x128xf32> to vector<1x8xf32>
      %387 = arith.index_cast %arg16 : i32 to index
      %c10 = arith.constant 10 : index
      %c0_301 = arith.constant 0 : index
      %388 = vector.load %arg14[%387, %c10, %c0_301] : memref<14x14x8xf32, #tpu.memory_space<vmem>>, vector<1x1x8xf32>
      %389 = vector.shape_cast %388 : vector<1x1x8xf32> to vector<1x8xf32>
      %390 = vector.shape_cast %386 : vector<1x8xf32> to vector<1x1x8xf32>
      tpu.vector_store %arg14[%387, %c10, %c0_301], %390 {strides = array<i32>} : memref<14x14x8xf32, #tpu.memory_space<vmem>>, vector<1x1x8xf32>,
      %391 = vector.extract_strided_slice %302 {offsets = [22, 0], sizes = [1, 128], strides = [1, 1]} : vector<28x128xf32> to vector<1x128xf32>
      %392 = vector.extract_strided_slice %302 {offsets = [23, 0], sizes = [1, 128], strides = [1, 1]} : vector<28x128xf32> to vector<1x128xf32>
      %393 = arith.maximumf %391, %392 : vector<1x128xf32>
      %394 = vector.extract_strided_slice %393 {offsets = [0, 0], sizes = [1, 8], strides = [1, 1]} : vector<1x128xf32> to vector<1x8xf32>
      %395 = arith.index_cast %arg16 : i32 to index
      %c11 = arith.constant 11 : index
      %c0_302 = arith.constant 0 : index
      %396 = vector.load %arg14[%395, %c11, %c0_302] : memref<14x14x8xf32, #tpu.memory_space<vmem>>, vector<1x1x8xf32>
      %397 = vector.shape_cast %396 : vector<1x1x8xf32> to vector<1x8xf32>
      %398 = vector.shape_cast %394 : vector<1x8xf32> to vector<1x1x8xf32>
      tpu.vector_store %arg14[%395, %c11, %c0_302], %398 {strides = array<i32>} : memref<14x14x8xf32, #tpu.memory_space<vmem>>, vector<1x1x8xf32>,
      %399 = vector.extract_strided_slice %302 {offsets = [24, 0], sizes = [1, 128], strides = [1, 1]} : vector<28x128xf32> to vector<1x128xf32>
      %400 = vector.extract_strided_slice %302 {offsets = [25, 0], sizes = [1, 128], strides = [1, 1]} : vector<28x128xf32> to vector<1x128xf32>
      %401 = arith.maximumf %399, %400 : vector<1x128xf32>
      %402 = vector.extract_strided_slice %401 {offsets = [0, 0], sizes = [1, 8], strides = [1, 1]} : vector<1x128xf32> to vector<1x8xf32>
      %403 = arith.index_cast %arg16 : i32 to index
      %c12 = arith.constant 12 : index
      %c0_303 = arith.constant 0 : index
      %404 = vector.load %arg14[%403, %c12, %c0_303] : memref<14x14x8xf32, #tpu.memory_space<vmem>>, vector<1x1x8xf32>
      %405 = vector.shape_cast %404 : vector<1x1x8xf32> to vector<1x8xf32>
      %406 = vector.shape_cast %402 : vector<1x8xf32> to vector<1x1x8xf32>
      tpu.vector_store %arg14[%403, %c12, %c0_303], %406 {strides = array<i32>} : memref<14x14x8xf32, #tpu.memory_space<vmem>>, vector<1x1x8xf32>,
      %407 = vector.extract_strided_slice %302 {offsets = [26, 0], sizes = [1, 128], strides = [1, 1]} : vector<28x128xf32> to vector<1x128xf32>
      %408 = vector.extract_strided_slice %302 {offsets = [27, 0], sizes = [1, 128], strides = [1, 1]} : vector<28x128xf32> to vector<1x128xf32>
      %409 = arith.maximumf %407, %408 : vector<1x128xf32>
      %410 = vector.extract_strided_slice %409 {offsets = [0, 0], sizes = [1, 8], strides = [1, 1]} : vector<1x128xf32> to vector<1x8xf32>
      %411 = arith.index_cast %arg16 : i32 to index
      %c13 = arith.constant 13 : index
      %c0_304 = arith.constant 0 : index
      %412 = vector.load %arg14[%411, %c13, %c0_304] : memref<14x14x8xf32, #tpu.memory_space<vmem>>, vector<1x1x8xf32>
      %413 = vector.shape_cast %412 : vector<1x1x8xf32> to vector<1x8xf32>
      %414 = vector.shape_cast %410 : vector<1x8xf32> to vector<1x1x8xf32>
      tpu.vector_store %arg14[%411, %c13, %c0_304], %414 {strides = array<i32>} : memref<14x14x8xf32, #tpu.memory_space<vmem>>, vector<1x1x8xf32>,
    }
    %c14_i32_0 = arith.constant 14 : i32
    %c0_i32_1 = arith.constant 0 : i32
    %c5_i32 = arith.constant 5 : i32
    %1 = arith.addi %c0_i32_1, %c5_i32 : i32
    %c1_i32_2 = arith.constant 1 : i32
    scf.for %arg16 = %c0_i32_1 to %1 step %c1_i32_2  : i32 {
      %c2_i32 = arith.constant 2 : i32
      %143 = arith.muli %c2_i32, %arg16 : i32
      %c0_i32_141 = arith.constant 0 : i32
      %144 = arith.addi %143, %c0_i32_141 : i32
      %145 = arith.index_cast %144 : i32 to index
      %c0_142 = arith.constant 0 : index
      %c0_143 = arith.constant 0 : index
      %146 = vector.load %arg14[%145, %c0_142, %c0_143] : memref<14x14x8xf32, #tpu.memory_space<vmem>>, vector<1x14x8xf32>
      %147 = vector.shape_cast %146 : vector<1x14x8xf32> to vector<14x8xf32>
      %148 = vector.extract_strided_slice %147 {offsets = [0, 0], sizes = [10, 8], strides = [1, 1]} : vector<14x8xf32> to vector<10x8xf32>
      %c0_144 = arith.constant 0 : index
      %c0_145 = arith.constant 0 : index
      %149 = vector.load %arg13[%c0_144, %c0_145] : memref<28x200xf32, #tpu.memory_space<vmem>>, vector<10x8xf32>
      tpu.vector_store %arg13[%c0_144, %c0_145], %148 {strides = array<i32>} : memref<28x200xf32, #tpu.memory_space<vmem>>, vector<10x8xf32>,
      %150 = vector.extract_strided_slice %147 {offsets = [1, 0], sizes = [10, 8], strides = [1, 1]} : vector<14x8xf32> to vector<10x8xf32>
      %c0_146 = arith.constant 0 : index
      %c8 = arith.constant 8 : index
      %151 = vector.load %arg13[%c0_146, %c8] : memref<28x200xf32, #tpu.memory_space<vmem>>, vector<10x8xf32>
      tpu.vector_store %arg13[%c0_146, %c8], %150 {strides = array<i32>} : memref<28x200xf32, #tpu.memory_space<vmem>>, vector<10x8xf32>,
      %152 = vector.extract_strided_slice %147 {offsets = [2, 0], sizes = [10, 8], strides = [1, 1]} : vector<14x8xf32> to vector<10x8xf32>
      %c0_147 = arith.constant 0 : index
      %c16_148 = arith.constant 16 : index
      %153 = vector.load %arg13[%c0_147, %c16_148] : memref<28x200xf32, #tpu.memory_space<vmem>>, vector<10x8xf32>
      tpu.vector_store %arg13[%c0_147, %c16_148], %152 {strides = array<i32>} : memref<28x200xf32, #tpu.memory_space<vmem>>, vector<10x8xf32>,
      %154 = vector.extract_strided_slice %147 {offsets = [3, 0], sizes = [10, 8], strides = [1, 1]} : vector<14x8xf32> to vector<10x8xf32>
      %c0_149 = arith.constant 0 : index
      %c24 = arith.constant 24 : index
      %155 = vector.load %arg13[%c0_149, %c24] : memref<28x200xf32, #tpu.memory_space<vmem>>, vector<10x8xf32>
      tpu.vector_store %arg13[%c0_149, %c24], %154 {strides = array<i32>} : memref<28x200xf32, #tpu.memory_space<vmem>>, vector<10x8xf32>,
      %156 = vector.extract_strided_slice %147 {offsets = [4, 0], sizes = [10, 8], strides = [1, 1]} : vector<14x8xf32> to vector<10x8xf32>
      %c0_150 = arith.constant 0 : index
      %c32_151 = arith.constant 32 : index
      %157 = vector.load %arg13[%c0_150, %c32_151] : memref<28x200xf32, #tpu.memory_space<vmem>>, vector<10x8xf32>
      tpu.vector_store %arg13[%c0_150, %c32_151], %156 {strides = array<i32>} : memref<28x200xf32, #tpu.memory_space<vmem>>, vector<10x8xf32>,
      %c1_i32_152 = arith.constant 1 : i32
      %158 = arith.addi %143, %c1_i32_152 : i32
      %159 = arith.index_cast %158 : i32 to index
      %c0_153 = arith.constant 0 : index
      %c0_154 = arith.constant 0 : index
      %160 = vector.load %arg14[%159, %c0_153, %c0_154] : memref<14x14x8xf32, #tpu.memory_space<vmem>>, vector<1x14x8xf32>
      %161 = vector.shape_cast %160 : vector<1x14x8xf32> to vector<14x8xf32>
      %162 = vector.extract_strided_slice %161 {offsets = [0, 0], sizes = [10, 8], strides = [1, 1]} : vector<14x8xf32> to vector<10x8xf32>
      %c0_155 = arith.constant 0 : index
      %c40 = arith.constant 40 : index
      %163 = vector.load %arg13[%c0_155, %c40] : memref<28x200xf32, #tpu.memory_space<vmem>>, vector<10x8xf32>
      tpu.vector_store %arg13[%c0_155, %c40], %162 {strides = array<i32>} : memref<28x200xf32, #tpu.memory_space<vmem>>, vector<10x8xf32>,
      %164 = vector.extract_strided_slice %161 {offsets = [1, 0], sizes = [10, 8], strides = [1, 1]} : vector<14x8xf32> to vector<10x8xf32>
      %c0_156 = arith.constant 0 : index
      %c48_157 = arith.constant 48 : index
      %165 = vector.load %arg13[%c0_156, %c48_157] : memref<28x200xf32, #tpu.memory_space<vmem>>, vector<10x8xf32>
      tpu.vector_store %arg13[%c0_156, %c48_157], %164 {strides = array<i32>} : memref<28x200xf32, #tpu.memory_space<vmem>>, vector<10x8xf32>,
      %166 = vector.extract_strided_slice %161 {offsets = [2, 0], sizes = [10, 8], strides = [1, 1]} : vector<14x8xf32> to vector<10x8xf32>
      %c0_158 = arith.constant 0 : index
      %c56 = arith.constant 56 : index
      %167 = vector.load %arg13[%c0_158, %c56] : memref<28x200xf32, #tpu.memory_space<vmem>>, vector<10x8xf32>
      tpu.vector_store %arg13[%c0_158, %c56], %166 {strides = array<i32>} : memref<28x200xf32, #tpu.memory_space<vmem>>, vector<10x8xf32>,
      %168 = vector.extract_strided_slice %161 {offsets = [3, 0], sizes = [10, 8], strides = [1, 1]} : vector<14x8xf32> to vector<10x8xf32>
      %c0_159 = arith.constant 0 : index
      %c64_160 = arith.constant 64 : index
      %169 = vector.load %arg13[%c0_159, %c64_160] : memref<28x200xf32, #tpu.memory_space<vmem>>, vector<10x8xf32>
      tpu.vector_store %arg13[%c0_159, %c64_160], %168 {strides = array<i32>} : memref<28x200xf32, #tpu.memory_space<vmem>>, vector<10x8xf32>,
      %170 = vector.extract_strided_slice %161 {offsets = [4, 0], sizes = [10, 8], strides = [1, 1]} : vector<14x8xf32> to vector<10x8xf32>
      %c0_161 = arith.constant 0 : index
      %c72 = arith.constant 72 : index
      %171 = vector.load %arg13[%c0_161, %c72] : memref<28x200xf32, #tpu.memory_space<vmem>>, vector<10x8xf32>
      tpu.vector_store %arg13[%c0_161, %c72], %170 {strides = array<i32>} : memref<28x200xf32, #tpu.memory_space<vmem>>, vector<10x8xf32>,
      %c2_i32_162 = arith.constant 2 : i32
      %172 = arith.addi %143, %c2_i32_162 : i32
      %173 = arith.index_cast %172 : i32 to index
      %c0_163 = arith.constant 0 : index
      %c0_164 = arith.constant 0 : index
      %174 = vector.load %arg14[%173, %c0_163, %c0_164] : memref<14x14x8xf32, #tpu.memory_space<vmem>>, vector<1x14x8xf32>
      %175 = vector.shape_cast %174 : vector<1x14x8xf32> to vector<14x8xf32>
      %176 = vector.extract_strided_slice %175 {offsets = [0, 0], sizes = [10, 8], strides = [1, 1]} : vector<14x8xf32> to vector<10x8xf32>
      %c0_165 = arith.constant 0 : index
      %c80_166 = arith.constant 80 : index
      %177 = vector.load %arg13[%c0_165, %c80_166] : memref<28x200xf32, #tpu.memory_space<vmem>>, vector<10x8xf32>
      tpu.vector_store %arg13[%c0_165, %c80_166], %176 {strides = array<i32>} : memref<28x200xf32, #tpu.memory_space<vmem>>, vector<10x8xf32>,
      %178 = vector.extract_strided_slice %175 {offsets = [1, 0], sizes = [10, 8], strides = [1, 1]} : vector<14x8xf32> to vector<10x8xf32>
      %c0_167 = arith.constant 0 : index
      %c88 = arith.constant 88 : index
      %179 = vector.load %arg13[%c0_167, %c88] : memref<28x200xf32, #tpu.memory_space<vmem>>, vector<10x8xf32>
      tpu.vector_store %arg13[%c0_167, %c88], %178 {strides = array<i32>} : memref<28x200xf32, #tpu.memory_space<vmem>>, vector<10x8xf32>,
      %180 = vector.extract_strided_slice %175 {offsets = [2, 0], sizes = [10, 8], strides = [1, 1]} : vector<14x8xf32> to vector<10x8xf32>
      %c0_168 = arith.constant 0 : index
      %c96_169 = arith.constant 96 : index
      %181 = vector.load %arg13[%c0_168, %c96_169] : memref<28x200xf32, #tpu.memory_space<vmem>>, vector<10x8xf32>
      tpu.vector_store %arg13[%c0_168, %c96_169], %180 {strides = array<i32>} : memref<28x200xf32, #tpu.memory_space<vmem>>, vector<10x8xf32>,
      %182 = vector.extract_strided_slice %175 {offsets = [3, 0], sizes = [10, 8], strides = [1, 1]} : vector<14x8xf32> to vector<10x8xf32>
      %c0_170 = arith.constant 0 : index
      %c104 = arith.constant 104 : index
      %183 = vector.load %arg13[%c0_170, %c104] : memref<28x200xf32, #tpu.memory_space<vmem>>, vector<10x8xf32>
      tpu.vector_store %arg13[%c0_170, %c104], %182 {strides = array<i32>} : memref<28x200xf32, #tpu.memory_space<vmem>>, vector<10x8xf32>,
      %184 = vector.extract_strided_slice %175 {offsets = [4, 0], sizes = [10, 8], strides = [1, 1]} : vector<14x8xf32> to vector<10x8xf32>
      %c0_171 = arith.constant 0 : index
      %c112_172 = arith.constant 112 : index
      %185 = vector.load %arg13[%c0_171, %c112_172] : memref<28x200xf32, #tpu.memory_space<vmem>>, vector<10x8xf32>
      tpu.vector_store %arg13[%c0_171, %c112_172], %184 {strides = array<i32>} : memref<28x200xf32, #tpu.memory_space<vmem>>, vector<10x8xf32>,
      %c3_i32 = arith.constant 3 : i32
      %186 = arith.addi %143, %c3_i32 : i32
      %187 = arith.index_cast %186 : i32 to index
      %c0_173 = arith.constant 0 : index
      %c0_174 = arith.constant 0 : index
      %188 = vector.load %arg14[%187, %c0_173, %c0_174] : memref<14x14x8xf32, #tpu.memory_space<vmem>>, vector<1x14x8xf32>
      %189 = vector.shape_cast %188 : vector<1x14x8xf32> to vector<14x8xf32>
      %190 = vector.extract_strided_slice %189 {offsets = [0, 0], sizes = [10, 8], strides = [1, 1]} : vector<14x8xf32> to vector<10x8xf32>
      %c0_175 = arith.constant 0 : index
      %c120 = arith.constant 120 : index
      %191 = vector.load %arg13[%c0_175, %c120] : memref<28x200xf32, #tpu.memory_space<vmem>>, vector<10x8xf32>
      tpu.vector_store %arg13[%c0_175, %c120], %190 {strides = array<i32>} : memref<28x200xf32, #tpu.memory_space<vmem>>, vector<10x8xf32>,
      %192 = vector.extract_strided_slice %189 {offsets = [1, 0], sizes = [10, 8], strides = [1, 1]} : vector<14x8xf32> to vector<10x8xf32>
      %c0_176 = arith.constant 0 : index
      %c128_177 = arith.constant 128 : index
      %193 = vector.load %arg13[%c0_176, %c128_177] : memref<28x200xf32, #tpu.memory_space<vmem>>, vector<10x8xf32>
      tpu.vector_store %arg13[%c0_176, %c128_177], %192 {strides = array<i32>} : memref<28x200xf32, #tpu.memory_space<vmem>>, vector<10x8xf32>,
      %194 = vector.extract_strided_slice %189 {offsets = [2, 0], sizes = [10, 8], strides = [1, 1]} : vector<14x8xf32> to vector<10x8xf32>
      %c0_178 = arith.constant 0 : index
      %c136 = arith.constant 136 : index
      %195 = vector.load %arg13[%c0_178, %c136] : memref<28x200xf32, #tpu.memory_space<vmem>>, vector<10x8xf32>
      tpu.vector_store %arg13[%c0_178, %c136], %194 {strides = array<i32>} : memref<28x200xf32, #tpu.memory_space<vmem>>, vector<10x8xf32>,
      %196 = vector.extract_strided_slice %189 {offsets = [3, 0], sizes = [10, 8], strides = [1, 1]} : vector<14x8xf32> to vector<10x8xf32>
      %c0_179 = arith.constant 0 : index
      %c144_180 = arith.constant 144 : index
      %197 = vector.load %arg13[%c0_179, %c144_180] : memref<28x200xf32, #tpu.memory_space<vmem>>, vector<10x8xf32>
      tpu.vector_store %arg13[%c0_179, %c144_180], %196 {strides = array<i32>} : memref<28x200xf32, #tpu.memory_space<vmem>>, vector<10x8xf32>,
      %198 = vector.extract_strided_slice %189 {offsets = [4, 0], sizes = [10, 8], strides = [1, 1]} : vector<14x8xf32> to vector<10x8xf32>
      %c0_181 = arith.constant 0 : index
      %c152 = arith.constant 152 : index
      %199 = vector.load %arg13[%c0_181, %c152] : memref<28x200xf32, #tpu.memory_space<vmem>>, vector<10x8xf32>
      tpu.vector_store %arg13[%c0_181, %c152], %198 {strides = array<i32>} : memref<28x200xf32, #tpu.memory_space<vmem>>, vector<10x8xf32>,
      %c4_i32 = arith.constant 4 : i32
      %200 = arith.addi %143, %c4_i32 : i32
      %201 = arith.index_cast %200 : i32 to index
      %c0_182 = arith.constant 0 : index
      %c0_183 = arith.constant 0 : index
      %202 = vector.load %arg14[%201, %c0_182, %c0_183] : memref<14x14x8xf32, #tpu.memory_space<vmem>>, vector<1x14x8xf32>
      %203 = vector.shape_cast %202 : vector<1x14x8xf32> to vector<14x8xf32>
      %204 = vector.extract_strided_slice %203 {offsets = [0, 0], sizes = [10, 8], strides = [1, 1]} : vector<14x8xf32> to vector<10x8xf32>
      %c0_184 = arith.constant 0 : index
      %c160_185 = arith.constant 160 : index
      %205 = vector.load %arg13[%c0_184, %c160_185] : memref<28x200xf32, #tpu.memory_space<vmem>>, vector<10x8xf32>
      tpu.vector_store %arg13[%c0_184, %c160_185], %204 {strides = array<i32>} : memref<28x200xf32, #tpu.memory_space<vmem>>, vector<10x8xf32>,
      %206 = vector.extract_strided_slice %203 {offsets = [1, 0], sizes = [10, 8], strides = [1, 1]} : vector<14x8xf32> to vector<10x8xf32>
      %c0_186 = arith.constant 0 : index
      %c168 = arith.constant 168 : index
      %207 = vector.load %arg13[%c0_186, %c168] : memref<28x200xf32, #tpu.memory_space<vmem>>, vector<10x8xf32>
      tpu.vector_store %arg13[%c0_186, %c168], %206 {strides = array<i32>} : memref<28x200xf32, #tpu.memory_space<vmem>>, vector<10x8xf32>,
      %208 = vector.extract_strided_slice %203 {offsets = [2, 0], sizes = [10, 8], strides = [1, 1]} : vector<14x8xf32> to vector<10x8xf32>
      %c0_187 = arith.constant 0 : index
      %c176_188 = arith.constant 176 : index
      %209 = vector.load %arg13[%c0_187, %c176_188] : memref<28x200xf32, #tpu.memory_space<vmem>>, vector<10x8xf32>
      tpu.vector_store %arg13[%c0_187, %c176_188], %208 {strides = array<i32>} : memref<28x200xf32, #tpu.memory_space<vmem>>, vector<10x8xf32>,
      %210 = vector.extract_strided_slice %203 {offsets = [3, 0], sizes = [10, 8], strides = [1, 1]} : vector<14x8xf32> to vector<10x8xf32>
      %c0_189 = arith.constant 0 : index
      %c184 = arith.constant 184 : index
      %211 = vector.load %arg13[%c0_189, %c184] : memref<28x200xf32, #tpu.memory_space<vmem>>, vector<10x8xf32>
      tpu.vector_store %arg13[%c0_189, %c184], %210 {strides = array<i32>} : memref<28x200xf32, #tpu.memory_space<vmem>>, vector<10x8xf32>,
      %212 = vector.extract_strided_slice %203 {offsets = [4, 0], sizes = [10, 8], strides = [1, 1]} : vector<14x8xf32> to vector<10x8xf32>
      %c0_190 = arith.constant 0 : index
      %c192_191 = arith.constant 192 : index
      %213 = vector.load %arg13[%c0_190, %c192_191] : memref<28x200xf32, #tpu.memory_space<vmem>>, vector<10x8xf32>
      tpu.vector_store %arg13[%c0_190, %c192_191], %212 {strides = array<i32>} : memref<28x200xf32, #tpu.memory_space<vmem>>, vector<10x8xf32>,
      %c0_192 = arith.constant 0 : index
      %c0_193 = arith.constant 0 : index
      %214 = vector.load %arg13[%c0_192, %c0_193] : memref<28x200xf32, #tpu.memory_space<vmem>>, vector<10x200xf32>
      %c0_194 = arith.constant 0 : index
      %c0_195 = arith.constant 0 : index
      %215 = vector.load %arg4[%c0_194, %c0_195] : memref<200x128xf32, #tpu.memory_space<vmem>>, vector<200x128xf32>
      %cst_196 = arith.constant dense<0.000000e+00> : vector<10x128xf32>
      %216 = tpu.matmul %214, %215, %cst_196 {dimension_numbers = #tpu.dot_dimension_numbers<[1], [0], [0], [1], [0, 0, 1, 1], [], []>} : vector<10x200xf32>, vector<200x128xf32>, vector<10x128xf32> -> vector<10x128xf32>
      %c0_197 = arith.constant 0 : index
      %c0_198 = arith.constant 0 : index
      %217 = vector.load %arg5[%c0_197, %c0_198] : memref<1x128xf32, #tpu.memory_space<vmem>>, vector<1x128xf32>
      %218 = vector.broadcast %217 : vector<1x128xf32> to vector<10x128xf32>
      %219 = arith.addf %216, %218 : vector<10x128xf32>
      %cst_199 = arith.constant 0.000000e+00 : f32
      %220 = vector.broadcast %cst_199 : f32 to vector<10x128xf32>
      %221 = arith.maximumf %219, %220 : vector<10x128xf32>
      %c2_i32_200 = arith.constant 2 : i32
      %222 = arith.muli %c2_i32_200, %arg16 : i32
      %c1_i32_201 = arith.constant 1 : i32
      %223 = arith.addi %222, %c1_i32_201 : i32
      %c0_i32_202 = arith.constant 0 : i32
      %224 = arith.addi %223, %c0_i32_202 : i32
      %225 = arith.index_cast %224 : i32 to index
      %c0_203 = arith.constant 0 : index
      %c0_204 = arith.constant 0 : index
      %226 = vector.load %arg14[%225, %c0_203, %c0_204] : memref<14x14x8xf32, #tpu.memory_space<vmem>>, vector<1x14x8xf32>
      %227 = vector.shape_cast %226 : vector<1x14x8xf32> to vector<14x8xf32>
      %228 = vector.extract_strided_slice %227 {offsets = [0, 0], sizes = [10, 8], strides = [1, 1]} : vector<14x8xf32> to vector<10x8xf32>
      %c0_205 = arith.constant 0 : index
      %c0_206 = arith.constant 0 : index
      %229 = vector.load %arg13[%c0_205, %c0_206] : memref<28x200xf32, #tpu.memory_space<vmem>>, vector<10x8xf32>
      tpu.vector_store %arg13[%c0_205, %c0_206], %228 {strides = array<i32>} : memref<28x200xf32, #tpu.memory_space<vmem>>, vector<10x8xf32>,
      %230 = vector.extract_strided_slice %227 {offsets = [1, 0], sizes = [10, 8], strides = [1, 1]} : vector<14x8xf32> to vector<10x8xf32>
      %c0_207 = arith.constant 0 : index
      %c8_208 = arith.constant 8 : index
      %231 = vector.load %arg13[%c0_207, %c8_208] : memref<28x200xf32, #tpu.memory_space<vmem>>, vector<10x8xf32>
      tpu.vector_store %arg13[%c0_207, %c8_208], %230 {strides = array<i32>} : memref<28x200xf32, #tpu.memory_space<vmem>>, vector<10x8xf32>,
      %232 = vector.extract_strided_slice %227 {offsets = [2, 0], sizes = [10, 8], strides = [1, 1]} : vector<14x8xf32> to vector<10x8xf32>
      %c0_209 = arith.constant 0 : index
      %c16_210 = arith.constant 16 : index
      %233 = vector.load %arg13[%c0_209, %c16_210] : memref<28x200xf32, #tpu.memory_space<vmem>>, vector<10x8xf32>
      tpu.vector_store %arg13[%c0_209, %c16_210], %232 {strides = array<i32>} : memref<28x200xf32, #tpu.memory_space<vmem>>, vector<10x8xf32>,
      %234 = vector.extract_strided_slice %227 {offsets = [3, 0], sizes = [10, 8], strides = [1, 1]} : vector<14x8xf32> to vector<10x8xf32>
      %c0_211 = arith.constant 0 : index
      %c24_212 = arith.constant 24 : index
      %235 = vector.load %arg13[%c0_211, %c24_212] : memref<28x200xf32, #tpu.memory_space<vmem>>, vector<10x8xf32>
      tpu.vector_store %arg13[%c0_211, %c24_212], %234 {strides = array<i32>} : memref<28x200xf32, #tpu.memory_space<vmem>>, vector<10x8xf32>,
      %236 = vector.extract_strided_slice %227 {offsets = [4, 0], sizes = [10, 8], strides = [1, 1]} : vector<14x8xf32> to vector<10x8xf32>
      %c0_213 = arith.constant 0 : index
      %c32_214 = arith.constant 32 : index
      %237 = vector.load %arg13[%c0_213, %c32_214] : memref<28x200xf32, #tpu.memory_space<vmem>>, vector<10x8xf32>
      tpu.vector_store %arg13[%c0_213, %c32_214], %236 {strides = array<i32>} : memref<28x200xf32, #tpu.memory_space<vmem>>, vector<10x8xf32>,
      %c1_i32_215 = arith.constant 1 : i32
      %238 = arith.addi %223, %c1_i32_215 : i32
      %239 = arith.index_cast %238 : i32 to index
      %c0_216 = arith.constant 0 : index
      %c0_217 = arith.constant 0 : index
      %240 = vector.load %arg14[%239, %c0_216, %c0_217] : memref<14x14x8xf32, #tpu.memory_space<vmem>>, vector<1x14x8xf32>
      %241 = vector.shape_cast %240 : vector<1x14x8xf32> to vector<14x8xf32>
      %242 = vector.extract_strided_slice %241 {offsets = [0, 0], sizes = [10, 8], strides = [1, 1]} : vector<14x8xf32> to vector<10x8xf32>
      %c0_218 = arith.constant 0 : index
      %c40_219 = arith.constant 40 : index
      %243 = vector.load %arg13[%c0_218, %c40_219] : memref<28x200xf32, #tpu.memory_space<vmem>>, vector<10x8xf32>
      tpu.vector_store %arg13[%c0_218, %c40_219], %242 {strides = array<i32>} : memref<28x200xf32, #tpu.memory_space<vmem>>, vector<10x8xf32>,
      %244 = vector.extract_strided_slice %241 {offsets = [1, 0], sizes = [10, 8], strides = [1, 1]} : vector<14x8xf32> to vector<10x8xf32>
      %c0_220 = arith.constant 0 : index
      %c48_221 = arith.constant 48 : index
      %245 = vector.load %arg13[%c0_220, %c48_221] : memref<28x200xf32, #tpu.memory_space<vmem>>, vector<10x8xf32>
      tpu.vector_store %arg13[%c0_220, %c48_221], %244 {strides = array<i32>} : memref<28x200xf32, #tpu.memory_space<vmem>>, vector<10x8xf32>,
      %246 = vector.extract_strided_slice %241 {offsets = [2, 0], sizes = [10, 8], strides = [1, 1]} : vector<14x8xf32> to vector<10x8xf32>
      %c0_222 = arith.constant 0 : index
      %c56_223 = arith.constant 56 : index
      %247 = vector.load %arg13[%c0_222, %c56_223] : memref<28x200xf32, #tpu.memory_space<vmem>>, vector<10x8xf32>
      tpu.vector_store %arg13[%c0_222, %c56_223], %246 {strides = array<i32>} : memref<28x200xf32, #tpu.memory_space<vmem>>, vector<10x8xf32>,
      %248 = vector.extract_strided_slice %241 {offsets = [3, 0], sizes = [10, 8], strides = [1, 1]} : vector<14x8xf32> to vector<10x8xf32>
      %c0_224 = arith.constant 0 : index
      %c64_225 = arith.constant 64 : index
      %249 = vector.load %arg13[%c0_224, %c64_225] : memref<28x200xf32, #tpu.memory_space<vmem>>, vector<10x8xf32>
      tpu.vector_store %arg13[%c0_224, %c64_225], %248 {strides = array<i32>} : memref<28x200xf32, #tpu.memory_space<vmem>>, vector<10x8xf32>,
      %250 = vector.extract_strided_slice %241 {offsets = [4, 0], sizes = [10, 8], strides = [1, 1]} : vector<14x8xf32> to vector<10x8xf32>
      %c0_226 = arith.constant 0 : index
      %c72_227 = arith.constant 72 : index
      %251 = vector.load %arg13[%c0_226, %c72_227] : memref<28x200xf32, #tpu.memory_space<vmem>>, vector<10x8xf32>
      tpu.vector_store %arg13[%c0_226, %c72_227], %250 {strides = array<i32>} : memref<28x200xf32, #tpu.memory_space<vmem>>, vector<10x8xf32>,
      %c2_i32_228 = arith.constant 2 : i32
      %252 = arith.addi %223, %c2_i32_228 : i32
      %253 = arith.index_cast %252 : i32 to index
      %c0_229 = arith.constant 0 : index
      %c0_230 = arith.constant 0 : index
      %254 = vector.load %arg14[%253, %c0_229, %c0_230] : memref<14x14x8xf32, #tpu.memory_space<vmem>>, vector<1x14x8xf32>
      %255 = vector.shape_cast %254 : vector<1x14x8xf32> to vector<14x8xf32>
      %256 = vector.extract_strided_slice %255 {offsets = [0, 0], sizes = [10, 8], strides = [1, 1]} : vector<14x8xf32> to vector<10x8xf32>
      %c0_231 = arith.constant 0 : index
      %c80_232 = arith.constant 80 : index
      %257 = vector.load %arg13[%c0_231, %c80_232] : memref<28x200xf32, #tpu.memory_space<vmem>>, vector<10x8xf32>
      tpu.vector_store %arg13[%c0_231, %c80_232], %256 {strides = array<i32>} : memref<28x200xf32, #tpu.memory_space<vmem>>, vector<10x8xf32>,
      %258 = vector.extract_strided_slice %255 {offsets = [1, 0], sizes = [10, 8], strides = [1, 1]} : vector<14x8xf32> to vector<10x8xf32>
      %c0_233 = arith.constant 0 : index
      %c88_234 = arith.constant 88 : index
      %259 = vector.load %arg13[%c0_233, %c88_234] : memref<28x200xf32, #tpu.memory_space<vmem>>, vector<10x8xf32>
      tpu.vector_store %arg13[%c0_233, %c88_234], %258 {strides = array<i32>} : memref<28x200xf32, #tpu.memory_space<vmem>>, vector<10x8xf32>,
      %260 = vector.extract_strided_slice %255 {offsets = [2, 0], sizes = [10, 8], strides = [1, 1]} : vector<14x8xf32> to vector<10x8xf32>
      %c0_235 = arith.constant 0 : index
      %c96_236 = arith.constant 96 : index
      %261 = vector.load %arg13[%c0_235, %c96_236] : memref<28x200xf32, #tpu.memory_space<vmem>>, vector<10x8xf32>
      tpu.vector_store %arg13[%c0_235, %c96_236], %260 {strides = array<i32>} : memref<28x200xf32, #tpu.memory_space<vmem>>, vector<10x8xf32>,
      %262 = vector.extract_strided_slice %255 {offsets = [3, 0], sizes = [10, 8], strides = [1, 1]} : vector<14x8xf32> to vector<10x8xf32>
      %c0_237 = arith.constant 0 : index
      %c104_238 = arith.constant 104 : index
      %263 = vector.load %arg13[%c0_237, %c104_238] : memref<28x200xf32, #tpu.memory_space<vmem>>, vector<10x8xf32>
      tpu.vector_store %arg13[%c0_237, %c104_238], %262 {strides = array<i32>} : memref<28x200xf32, #tpu.memory_space<vmem>>, vector<10x8xf32>,
      %264 = vector.extract_strided_slice %255 {offsets = [4, 0], sizes = [10, 8], strides = [1, 1]} : vector<14x8xf32> to vector<10x8xf32>
      %c0_239 = arith.constant 0 : index
      %c112_240 = arith.constant 112 : index
      %265 = vector.load %arg13[%c0_239, %c112_240] : memref<28x200xf32, #tpu.memory_space<vmem>>, vector<10x8xf32>
      tpu.vector_store %arg13[%c0_239, %c112_240], %264 {strides = array<i32>} : memref<28x200xf32, #tpu.memory_space<vmem>>, vector<10x8xf32>,
      %c3_i32_241 = arith.constant 3 : i32
      %266 = arith.addi %223, %c3_i32_241 : i32
      %267 = arith.index_cast %266 : i32 to index
      %c0_242 = arith.constant 0 : index
      %c0_243 = arith.constant 0 : index
      %268 = vector.load %arg14[%267, %c0_242, %c0_243] : memref<14x14x8xf32, #tpu.memory_space<vmem>>, vector<1x14x8xf32>
      %269 = vector.shape_cast %268 : vector<1x14x8xf32> to vector<14x8xf32>
      %270 = vector.extract_strided_slice %269 {offsets = [0, 0], sizes = [10, 8], strides = [1, 1]} : vector<14x8xf32> to vector<10x8xf32>
      %c0_244 = arith.constant 0 : index
      %c120_245 = arith.constant 120 : index
      %271 = vector.load %arg13[%c0_244, %c120_245] : memref<28x200xf32, #tpu.memory_space<vmem>>, vector<10x8xf32>
      tpu.vector_store %arg13[%c0_244, %c120_245], %270 {strides = array<i32>} : memref<28x200xf32, #tpu.memory_space<vmem>>, vector<10x8xf32>,
      %272 = vector.extract_strided_slice %269 {offsets = [1, 0], sizes = [10, 8], strides = [1, 1]} : vector<14x8xf32> to vector<10x8xf32>
      %c0_246 = arith.constant 0 : index
      %c128_247 = arith.constant 128 : index
      %273 = vector.load %arg13[%c0_246, %c128_247] : memref<28x200xf32, #tpu.memory_space<vmem>>, vector<10x8xf32>
      tpu.vector_store %arg13[%c0_246, %c128_247], %272 {strides = array<i32>} : memref<28x200xf32, #tpu.memory_space<vmem>>, vector<10x8xf32>,
      %274 = vector.extract_strided_slice %269 {offsets = [2, 0], sizes = [10, 8], strides = [1, 1]} : vector<14x8xf32> to vector<10x8xf32>
      %c0_248 = arith.constant 0 : index
      %c136_249 = arith.constant 136 : index
      %275 = vector.load %arg13[%c0_248, %c136_249] : memref<28x200xf32, #tpu.memory_space<vmem>>, vector<10x8xf32>
      tpu.vector_store %arg13[%c0_248, %c136_249], %274 {strides = array<i32>} : memref<28x200xf32, #tpu.memory_space<vmem>>, vector<10x8xf32>,
      %276 = vector.extract_strided_slice %269 {offsets = [3, 0], sizes = [10, 8], strides = [1, 1]} : vector<14x8xf32> to vector<10x8xf32>
      %c0_250 = arith.constant 0 : index
      %c144_251 = arith.constant 144 : index
      %277 = vector.load %arg13[%c0_250, %c144_251] : memref<28x200xf32, #tpu.memory_space<vmem>>, vector<10x8xf32>
      tpu.vector_store %arg13[%c0_250, %c144_251], %276 {strides = array<i32>} : memref<28x200xf32, #tpu.memory_space<vmem>>, vector<10x8xf32>,
      %278 = vector.extract_strided_slice %269 {offsets = [4, 0], sizes = [10, 8], strides = [1, 1]} : vector<14x8xf32> to vector<10x8xf32>
      %c0_252 = arith.constant 0 : index
      %c152_253 = arith.constant 152 : index
      %279 = vector.load %arg13[%c0_252, %c152_253] : memref<28x200xf32, #tpu.memory_space<vmem>>, vector<10x8xf32>
      tpu.vector_store %arg13[%c0_252, %c152_253], %278 {strides = array<i32>} : memref<28x200xf32, #tpu.memory_space<vmem>>, vector<10x8xf32>,
      %c4_i32_254 = arith.constant 4 : i32
      %280 = arith.addi %223, %c4_i32_254 : i32
      %281 = arith.index_cast %280 : i32 to index
      %c0_255 = arith.constant 0 : index
      %c0_256 = arith.constant 0 : index
      %282 = vector.load %arg14[%281, %c0_255, %c0_256] : memref<14x14x8xf32, #tpu.memory_space<vmem>>, vector<1x14x8xf32>
      %283 = vector.shape_cast %282 : vector<1x14x8xf32> to vector<14x8xf32>
      %284 = vector.extract_strided_slice %283 {offsets = [0, 0], sizes = [10, 8], strides = [1, 1]} : vector<14x8xf32> to vector<10x8xf32>
      %c0_257 = arith.constant 0 : index
      %c160_258 = arith.constant 160 : index
      %285 = vector.load %arg13[%c0_257, %c160_258] : memref<28x200xf32, #tpu.memory_space<vmem>>, vector<10x8xf32>
      tpu.vector_store %arg13[%c0_257, %c160_258], %284 {strides = array<i32>} : memref<28x200xf32, #tpu.memory_space<vmem>>, vector<10x8xf32>,
      %286 = vector.extract_strided_slice %283 {offsets = [1, 0], sizes = [10, 8], strides = [1, 1]} : vector<14x8xf32> to vector<10x8xf32>
      %c0_259 = arith.constant 0 : index
      %c168_260 = arith.constant 168 : index
      %287 = vector.load %arg13[%c0_259, %c168_260] : memref<28x200xf32, #tpu.memory_space<vmem>>, vector<10x8xf32>
      tpu.vector_store %arg13[%c0_259, %c168_260], %286 {strides = array<i32>} : memref<28x200xf32, #tpu.memory_space<vmem>>, vector<10x8xf32>,
      %288 = vector.extract_strided_slice %283 {offsets = [2, 0], sizes = [10, 8], strides = [1, 1]} : vector<14x8xf32> to vector<10x8xf32>
      %c0_261 = arith.constant 0 : index
      %c176_262 = arith.constant 176 : index
      %289 = vector.load %arg13[%c0_261, %c176_262] : memref<28x200xf32, #tpu.memory_space<vmem>>, vector<10x8xf32>
      tpu.vector_store %arg13[%c0_261, %c176_262], %288 {strides = array<i32>} : memref<28x200xf32, #tpu.memory_space<vmem>>, vector<10x8xf32>,
      %290 = vector.extract_strided_slice %283 {offsets = [3, 0], sizes = [10, 8], strides = [1, 1]} : vector<14x8xf32> to vector<10x8xf32>
      %c0_263 = arith.constant 0 : index
      %c184_264 = arith.constant 184 : index
      %291 = vector.load %arg13[%c0_263, %c184_264] : memref<28x200xf32, #tpu.memory_space<vmem>>, vector<10x8xf32>
      tpu.vector_store %arg13[%c0_263, %c184_264], %290 {strides = array<i32>} : memref<28x200xf32, #tpu.memory_space<vmem>>, vector<10x8xf32>,
      %292 = vector.extract_strided_slice %283 {offsets = [4, 0], sizes = [10, 8], strides = [1, 1]} : vector<14x8xf32> to vector<10x8xf32>
      %c0_265 = arith.constant 0 : index
      %c192_266 = arith.constant 192 : index
      %293 = vector.load %arg13[%c0_265, %c192_266] : memref<28x200xf32, #tpu.memory_space<vmem>>, vector<10x8xf32>
      tpu.vector_store %arg13[%c0_265, %c192_266], %292 {strides = array<i32>} : memref<28x200xf32, #tpu.memory_space<vmem>>, vector<10x8xf32>,
      %c0_267 = arith.constant 0 : index
      %c0_268 = arith.constant 0 : index
      %294 = vector.load %arg13[%c0_267, %c0_268] : memref<28x200xf32, #tpu.memory_space<vmem>>, vector<10x200xf32>
      %c0_269 = arith.constant 0 : index
      %c0_270 = arith.constant 0 : index
      %295 = vector.load %arg4[%c0_269, %c0_270] : memref<200x128xf32, #tpu.memory_space<vmem>>, vector<200x128xf32>
      %cst_271 = arith.constant dense<0.000000e+00> : vector<10x128xf32>
      %296 = tpu.matmul %294, %295, %cst_271 {dimension_numbers = #tpu.dot_dimension_numbers<[1], [0], [0], [1], [0, 0, 1, 1], [], []>} : vector<10x200xf32>, vector<200x128xf32>, vector<10x128xf32> -> vector<10x128xf32>
      %c0_272 = arith.constant 0 : index
      %c0_273 = arith.constant 0 : index
      %297 = vector.load %arg5[%c0_272, %c0_273] : memref<1x128xf32, #tpu.memory_space<vmem>>, vector<1x128xf32>
      %298 = vector.broadcast %297 : vector<1x128xf32> to vector<10x128xf32>
      %299 = arith.addf %296, %298 : vector<10x128xf32>
      %cst_274 = arith.constant 0.000000e+00 : f32
      %300 = vector.broadcast %cst_274 : f32 to vector<10x128xf32>
      %301 = arith.maximumf %299, %300 : vector<10x128xf32>
      %302 = arith.maximumf %221, %301 : vector<10x128xf32>
      %303 = vector.extract_strided_slice %302 {offsets = [0, 0], sizes = [1, 128], strides = [1, 1]} : vector<10x128xf32> to vector<1x128xf32>
      %304 = vector.extract_strided_slice %302 {offsets = [1, 0], sizes = [1, 128], strides = [1, 1]} : vector<10x128xf32> to vector<1x128xf32>
      %305 = arith.maximumf %303, %304 : vector<1x128xf32>
      %306 = vector.extract_strided_slice %305 {offsets = [0, 0], sizes = [1, 16], strides = [1, 1]} : vector<1x128xf32> to vector<1x16xf32>
      %307 = arith.index_cast %arg16 : i32 to index
      %c0_275 = arith.constant 0 : index
      %c0_276 = arith.constant 0 : index
      %308 = vector.load %arg15[%307, %c0_275, %c0_276] : memref<5x5x16xf32, #tpu.memory_space<vmem>>, vector<1x1x16xf32>
      %309 = vector.shape_cast %308 : vector<1x1x16xf32> to vector<1x16xf32>
      %310 = vector.shape_cast %306 : vector<1x16xf32> to vector<1x1x16xf32>
      tpu.vector_store %arg15[%307, %c0_275, %c0_276], %310 {strides = array<i32>} : memref<5x5x16xf32, #tpu.memory_space<vmem>>, vector<1x1x16xf32>,
      %311 = vector.extract_strided_slice %302 {offsets = [2, 0], sizes = [1, 128], strides = [1, 1]} : vector<10x128xf32> to vector<1x128xf32>
      %312 = vector.extract_strided_slice %302 {offsets = [3, 0], sizes = [1, 128], strides = [1, 1]} : vector<10x128xf32> to vector<1x128xf32>
      %313 = arith.maximumf %311, %312 : vector<1x128xf32>
      %314 = vector.extract_strided_slice %313 {offsets = [0, 0], sizes = [1, 16], strides = [1, 1]} : vector<1x128xf32> to vector<1x16xf32>
      %315 = arith.index_cast %arg16 : i32 to index
      %c1_277 = arith.constant 1 : index
      %c0_278 = arith.constant 0 : index
      %316 = vector.load %arg15[%315, %c1_277, %c0_278] : memref<5x5x16xf32, #tpu.memory_space<vmem>>, vector<1x1x16xf32>
      %317 = vector.shape_cast %316 : vector<1x1x16xf32> to vector<1x16xf32>
      %318 = vector.shape_cast %314 : vector<1x16xf32> to vector<1x1x16xf32>
      tpu.vector_store %arg15[%315, %c1_277, %c0_278], %318 {strides = array<i32>} : memref<5x5x16xf32, #tpu.memory_space<vmem>>, vector<1x1x16xf32>,
      %319 = vector.extract_strided_slice %302 {offsets = [4, 0], sizes = [1, 128], strides = [1, 1]} : vector<10x128xf32> to vector<1x128xf32>
      %320 = vector.extract_strided_slice %302 {offsets = [5, 0], sizes = [1, 128], strides = [1, 1]} : vector<10x128xf32> to vector<1x128xf32>
      %321 = arith.maximumf %319, %320 : vector<1x128xf32>
      %322 = vector.extract_strided_slice %321 {offsets = [0, 0], sizes = [1, 16], strides = [1, 1]} : vector<1x128xf32> to vector<1x16xf32>
      %323 = arith.index_cast %arg16 : i32 to index
      %c2_279 = arith.constant 2 : index
      %c0_280 = arith.constant 0 : index
      %324 = vector.load %arg15[%323, %c2_279, %c0_280] : memref<5x5x16xf32, #tpu.memory_space<vmem>>, vector<1x1x16xf32>
      %325 = vector.shape_cast %324 : vector<1x1x16xf32> to vector<1x16xf32>
      %326 = vector.shape_cast %322 : vector<1x16xf32> to vector<1x1x16xf32>
      tpu.vector_store %arg15[%323, %c2_279, %c0_280], %326 {strides = array<i32>} : memref<5x5x16xf32, #tpu.memory_space<vmem>>, vector<1x1x16xf32>,
      %327 = vector.extract_strided_slice %302 {offsets = [6, 0], sizes = [1, 128], strides = [1, 1]} : vector<10x128xf32> to vector<1x128xf32>
      %328 = vector.extract_strided_slice %302 {offsets = [7, 0], sizes = [1, 128], strides = [1, 1]} : vector<10x128xf32> to vector<1x128xf32>
      %329 = arith.maximumf %327, %328 : vector<1x128xf32>
      %330 = vector.extract_strided_slice %329 {offsets = [0, 0], sizes = [1, 16], strides = [1, 1]} : vector<1x128xf32> to vector<1x16xf32>
      %331 = arith.index_cast %arg16 : i32 to index
      %c3_281 = arith.constant 3 : index
      %c0_282 = arith.constant 0 : index
      %332 = vector.load %arg15[%331, %c3_281, %c0_282] : memref<5x5x16xf32, #tpu.memory_space<vmem>>, vector<1x1x16xf32>
      %333 = vector.shape_cast %332 : vector<1x1x16xf32> to vector<1x16xf32>
      %334 = vector.shape_cast %330 : vector<1x16xf32> to vector<1x1x16xf32>
      tpu.vector_store %arg15[%331, %c3_281, %c0_282], %334 {strides = array<i32>} : memref<5x5x16xf32, #tpu.memory_space<vmem>>, vector<1x1x16xf32>,
      %335 = vector.extract_strided_slice %302 {offsets = [8, 0], sizes = [1, 128], strides = [1, 1]} : vector<10x128xf32> to vector<1x128xf32>
      %336 = vector.extract_strided_slice %302 {offsets = [9, 0], sizes = [1, 128], strides = [1, 1]} : vector<10x128xf32> to vector<1x128xf32>
      %337 = arith.maximumf %335, %336 : vector<1x128xf32>
      %338 = vector.extract_strided_slice %337 {offsets = [0, 0], sizes = [1, 16], strides = [1, 1]} : vector<1x128xf32> to vector<1x16xf32>
      %339 = arith.index_cast %arg16 : i32 to index
      %c4_283 = arith.constant 4 : index
      %c0_284 = arith.constant 0 : index
      %340 = vector.load %arg15[%339, %c4_283, %c0_284] : memref<5x5x16xf32, #tpu.memory_space<vmem>>, vector<1x1x16xf32>
      %341 = vector.shape_cast %340 : vector<1x1x16xf32> to vector<1x16xf32>
      %342 = vector.shape_cast %338 : vector<1x16xf32> to vector<1x1x16xf32>
      tpu.vector_store %arg15[%339, %c4_283, %c0_284], %342 {strides = array<i32>} : memref<5x5x16xf32, #tpu.memory_space<vmem>>, vector<1x1x16xf32>,
    }
    %c5_i32_3 = arith.constant 5 : i32
    %c0 = arith.constant 0 : index
    %c0_4 = arith.constant 0 : index
    %2 = vector.load %arg7[%c0, %c0_4] : memref<1x128xf32, #tpu.memory_space<vmem>>, vector<1x128xf32>
    %c0_5 = arith.constant 0 : index
    %c0_6 = arith.constant 0 : index
    %c0_7 = arith.constant 0 : index
    %3 = vector.load %arg15[%c0_5, %c0_6, %c0_7] : memref<5x5x16xf32, #tpu.memory_space<vmem>>, vector<1x1x16xf32>
    %4 = vector.shape_cast %3 : vector<1x1x16xf32> to vector<1x16xf32>
    %c0_8 = arith.constant 0 : index
    %c0_9 = arith.constant 0 : index
    %5 = vector.load %arg6[%c0_8, %c0_9] : memref<400x128xf32, #tpu.memory_space<vmem>>, vector<16x128xf32>
    %cst = arith.constant dense<0.000000e+00> : vector<1x128xf32>
    %6 = tpu.matmul %4, %5, %cst {dimension_numbers = #tpu.dot_dimension_numbers<[1], [0], [0], [1], [0, 0, 1, 1], [], []>} : vector<1x16xf32>, vector<16x128xf32>, vector<1x128xf32> -> vector<1x128xf32>
    %7 = arith.addf %2, %6 : vector<1x128xf32>
    %c0_10 = arith.constant 0 : index
    %c1 = arith.constant 1 : index
    %c0_11 = arith.constant 0 : index
    %8 = vector.load %arg15[%c0_10, %c1, %c0_11] : memref<5x5x16xf32, #tpu.memory_space<vmem>>, vector<1x1x16xf32>
    %9 = vector.shape_cast %8 : vector<1x1x16xf32> to vector<1x16xf32>
    %c16 = arith.constant 16 : index
    %c0_12 = arith.constant 0 : index
    %10 = vector.load %arg6[%c16, %c0_12] : memref<400x128xf32, #tpu.memory_space<vmem>>, vector<16x128xf32>
    %cst_13 = arith.constant dense<0.000000e+00> : vector<1x128xf32>
    %11 = tpu.matmul %9, %10, %cst_13 {dimension_numbers = #tpu.dot_dimension_numbers<[1], [0], [0], [1], [0, 0, 1, 1], [], []>} : vector<1x16xf32>, vector<16x128xf32>, vector<1x128xf32> -> vector<1x128xf32>
    %12 = arith.addf %7, %11 : vector<1x128xf32>
    %c0_14 = arith.constant 0 : index
    %c2 = arith.constant 2 : index
    %c0_15 = arith.constant 0 : index
    %13 = vector.load %arg15[%c0_14, %c2, %c0_15] : memref<5x5x16xf32, #tpu.memory_space<vmem>>, vector<1x1x16xf32>
    %14 = vector.shape_cast %13 : vector<1x1x16xf32> to vector<1x16xf32>
    %c32 = arith.constant 32 : index
    %c0_16 = arith.constant 0 : index
    %15 = vector.load %arg6[%c32, %c0_16] : memref<400x128xf32, #tpu.memory_space<vmem>>, vector<16x128xf32>
    %cst_17 = arith.constant dense<0.000000e+00> : vector<1x128xf32>
    %16 = tpu.matmul %14, %15, %cst_17 {dimension_numbers = #tpu.dot_dimension_numbers<[1], [0], [0], [1], [0, 0, 1, 1], [], []>} : vector<1x16xf32>, vector<16x128xf32>, vector<1x128xf32> -> vector<1x128xf32>
    %17 = arith.addf %12, %16 : vector<1x128xf32>
    %c0_18 = arith.constant 0 : index
    %c3 = arith.constant 3 : index
    %c0_19 = arith.constant 0 : index
    %18 = vector.load %arg15[%c0_18, %c3, %c0_19] : memref<5x5x16xf32, #tpu.memory_space<vmem>>, vector<1x1x16xf32>
    %19 = vector.shape_cast %18 : vector<1x1x16xf32> to vector<1x16xf32>
    %c48 = arith.constant 48 : index
    %c0_20 = arith.constant 0 : index
    %20 = vector.load %arg6[%c48, %c0_20] : memref<400x128xf32, #tpu.memory_space<vmem>>, vector<16x128xf32>
    %cst_21 = arith.constant dense<0.000000e+00> : vector<1x128xf32>
    %21 = tpu.matmul %19, %20, %cst_21 {dimension_numbers = #tpu.dot_dimension_numbers<[1], [0], [0], [1], [0, 0, 1, 1], [], []>} : vector<1x16xf32>, vector<16x128xf32>, vector<1x128xf32> -> vector<1x128xf32>
    %22 = arith.addf %17, %21 : vector<1x128xf32>
    %c0_22 = arith.constant 0 : index
    %c4 = arith.constant 4 : index
    %c0_23 = arith.constant 0 : index
    %23 = vector.load %arg15[%c0_22, %c4, %c0_23] : memref<5x5x16xf32, #tpu.memory_space<vmem>>, vector<1x1x16xf32>
    %24 = vector.shape_cast %23 : vector<1x1x16xf32> to vector<1x16xf32>
    %c64 = arith.constant 64 : index
    %c0_24 = arith.constant 0 : index
    %25 = vector.load %arg6[%c64, %c0_24] : memref<400x128xf32, #tpu.memory_space<vmem>>, vector<16x128xf32>
    %cst_25 = arith.constant dense<0.000000e+00> : vector<1x128xf32>
    %26 = tpu.matmul %24, %25, %cst_25 {dimension_numbers = #tpu.dot_dimension_numbers<[1], [0], [0], [1], [0, 0, 1, 1], [], []>} : vector<1x16xf32>, vector<16x128xf32>, vector<1x128xf32> -> vector<1x128xf32>
    %27 = arith.addf %22, %26 : vector<1x128xf32>
    %c1_26 = arith.constant 1 : index
    %c0_27 = arith.constant 0 : index
    %c0_28 = arith.constant 0 : index
    %28 = vector.load %arg15[%c1_26, %c0_27, %c0_28] : memref<5x5x16xf32, #tpu.memory_space<vmem>>, vector<1x1x16xf32>
    %29 = vector.shape_cast %28 : vector<1x1x16xf32> to vector<1x16xf32>
    %c80 = arith.constant 80 : index
    %c0_29 = arith.constant 0 : index
    %30 = vector.load %arg6[%c80, %c0_29] : memref<400x128xf32, #tpu.memory_space<vmem>>, vector<16x128xf32>
    %cst_30 = arith.constant dense<0.000000e+00> : vector<1x128xf32>
    %31 = tpu.matmul %29, %30, %cst_30 {dimension_numbers = #tpu.dot_dimension_numbers<[1], [0], [0], [1], [0, 0, 1, 1], [], []>} : vector<1x16xf32>, vector<16x128xf32>, vector<1x128xf32> -> vector<1x128xf32>
    %32 = arith.addf %27, %31 : vector<1x128xf32>
    %c1_31 = arith.constant 1 : index
    %c1_32 = arith.constant 1 : index
    %c0_33 = arith.constant 0 : index
    %33 = vector.load %arg15[%c1_31, %c1_32, %c0_33] : memref<5x5x16xf32, #tpu.memory_space<vmem>>, vector<1x1x16xf32>
    %34 = vector.shape_cast %33 : vector<1x1x16xf32> to vector<1x16xf32>
    %c96 = arith.constant 96 : index
    %c0_34 = arith.constant 0 : index
    %35 = vector.load %arg6[%c96, %c0_34] : memref<400x128xf32, #tpu.memory_space<vmem>>, vector<16x128xf32>
    %cst_35 = arith.constant dense<0.000000e+00> : vector<1x128xf32>
    %36 = tpu.matmul %34, %35, %cst_35 {dimension_numbers = #tpu.dot_dimension_numbers<[1], [0], [0], [1], [0, 0, 1, 1], [], []>} : vector<1x16xf32>, vector<16x128xf32>, vector<1x128xf32> -> vector<1x128xf32>
    %37 = arith.addf %32, %36 : vector<1x128xf32>
    %c1_36 = arith.constant 1 : index
    %c2_37 = arith.constant 2 : index
    %c0_38 = arith.constant 0 : index
    %38 = vector.load %arg15[%c1_36, %c2_37, %c0_38] : memref<5x5x16xf32, #tpu.memory_space<vmem>>, vector<1x1x16xf32>
    %39 = vector.shape_cast %38 : vector<1x1x16xf32> to vector<1x16xf32>
    %c112 = arith.constant 112 : index
    %c0_39 = arith.constant 0 : index
    %40 = vector.load %arg6[%c112, %c0_39] : memref<400x128xf32, #tpu.memory_space<vmem>>, vector<16x128xf32>
    %cst_40 = arith.constant dense<0.000000e+00> : vector<1x128xf32>
    %41 = tpu.matmul %39, %40, %cst_40 {dimension_numbers = #tpu.dot_dimension_numbers<[1], [0], [0], [1], [0, 0, 1, 1], [], []>} : vector<1x16xf32>, vector<16x128xf32>, vector<1x128xf32> -> vector<1x128xf32>
    %42 = arith.addf %37, %41 : vector<1x128xf32>
    %c1_41 = arith.constant 1 : index
    %c3_42 = arith.constant 3 : index
    %c0_43 = arith.constant 0 : index
    %43 = vector.load %arg15[%c1_41, %c3_42, %c0_43] : memref<5x5x16xf32, #tpu.memory_space<vmem>>, vector<1x1x16xf32>
    %44 = vector.shape_cast %43 : vector<1x1x16xf32> to vector<1x16xf32>
    %c128 = arith.constant 128 : index
    %c0_44 = arith.constant 0 : index
    %45 = vector.load %arg6[%c128, %c0_44] : memref<400x128xf32, #tpu.memory_space<vmem>>, vector<16x128xf32>
    %cst_45 = arith.constant dense<0.000000e+00> : vector<1x128xf32>
    %46 = tpu.matmul %44, %45, %cst_45 {dimension_numbers = #tpu.dot_dimension_numbers<[1], [0], [0], [1], [0, 0, 1, 1], [], []>} : vector<1x16xf32>, vector<16x128xf32>, vector<1x128xf32> -> vector<1x128xf32>
    %47 = arith.addf %42, %46 : vector<1x128xf32>
    %c1_46 = arith.constant 1 : index
    %c4_47 = arith.constant 4 : index
    %c0_48 = arith.constant 0 : index
    %48 = vector.load %arg15[%c1_46, %c4_47, %c0_48] : memref<5x5x16xf32, #tpu.memory_space<vmem>>, vector<1x1x16xf32>
    %49 = vector.shape_cast %48 : vector<1x1x16xf32> to vector<1x16xf32>
    %c144 = arith.constant 144 : index
    %c0_49 = arith.constant 0 : index
    %50 = vector.load %arg6[%c144, %c0_49] : memref<400x128xf32, #tpu.memory_space<vmem>>, vector<16x128xf32>
    %cst_50 = arith.constant dense<0.000000e+00> : vector<1x128xf32>
    %51 = tpu.matmul %49, %50, %cst_50 {dimension_numbers = #tpu.dot_dimension_numbers<[1], [0], [0], [1], [0, 0, 1, 1], [], []>} : vector<1x16xf32>, vector<16x128xf32>, vector<1x128xf32> -> vector<1x128xf32>
    %52 = arith.addf %47, %51 : vector<1x128xf32>
    %c2_51 = arith.constant 2 : index
    %c0_52 = arith.constant 0 : index
    %c0_53 = arith.constant 0 : index
    %53 = vector.load %arg15[%c2_51, %c0_52, %c0_53] : memref<5x5x16xf32, #tpu.memory_space<vmem>>, vector<1x1x16xf32>
    %54 = vector.shape_cast %53 : vector<1x1x16xf32> to vector<1x16xf32>
    %c160 = arith.constant 160 : index
    %c0_54 = arith.constant 0 : index
    %55 = vector.load %arg6[%c160, %c0_54] : memref<400x128xf32, #tpu.memory_space<vmem>>, vector<16x128xf32>
    %cst_55 = arith.constant dense<0.000000e+00> : vector<1x128xf32>
    %56 = tpu.matmul %54, %55, %cst_55 {dimension_numbers = #tpu.dot_dimension_numbers<[1], [0], [0], [1], [0, 0, 1, 1], [], []>} : vector<1x16xf32>, vector<16x128xf32>, vector<1x128xf32> -> vector<1x128xf32>
    %57 = arith.addf %52, %56 : vector<1x128xf32>
    %c2_56 = arith.constant 2 : index
    %c1_57 = arith.constant 1 : index
    %c0_58 = arith.constant 0 : index
    %58 = vector.load %arg15[%c2_56, %c1_57, %c0_58] : memref<5x5x16xf32, #tpu.memory_space<vmem>>, vector<1x1x16xf32>
    %59 = vector.shape_cast %58 : vector<1x1x16xf32> to vector<1x16xf32>
    %c176 = arith.constant 176 : index
    %c0_59 = arith.constant 0 : index
    %60 = vector.load %arg6[%c176, %c0_59] : memref<400x128xf32, #tpu.memory_space<vmem>>, vector<16x128xf32>
    %cst_60 = arith.constant dense<0.000000e+00> : vector<1x128xf32>
    %61 = tpu.matmul %59, %60, %cst_60 {dimension_numbers = #tpu.dot_dimension_numbers<[1], [0], [0], [1], [0, 0, 1, 1], [], []>} : vector<1x16xf32>, vector<16x128xf32>, vector<1x128xf32> -> vector<1x128xf32>
    %62 = arith.addf %57, %61 : vector<1x128xf32>
    %c2_61 = arith.constant 2 : index
    %c2_62 = arith.constant 2 : index
    %c0_63 = arith.constant 0 : index
    %63 = vector.load %arg15[%c2_61, %c2_62, %c0_63] : memref<5x5x16xf32, #tpu.memory_space<vmem>>, vector<1x1x16xf32>
    %64 = vector.shape_cast %63 : vector<1x1x16xf32> to vector<1x16xf32>
    %c192 = arith.constant 192 : index
    %c0_64 = arith.constant 0 : index
    %65 = vector.load %arg6[%c192, %c0_64] : memref<400x128xf32, #tpu.memory_space<vmem>>, vector<16x128xf32>
    %cst_65 = arith.constant dense<0.000000e+00> : vector<1x128xf32>
    %66 = tpu.matmul %64, %65, %cst_65 {dimension_numbers = #tpu.dot_dimension_numbers<[1], [0], [0], [1], [0, 0, 1, 1], [], []>} : vector<1x16xf32>, vector<16x128xf32>, vector<1x128xf32> -> vector<1x128xf32>
    %67 = arith.addf %62, %66 : vector<1x128xf32>
    %c2_66 = arith.constant 2 : index
    %c3_67 = arith.constant 3 : index
    %c0_68 = arith.constant 0 : index
    %68 = vector.load %arg15[%c2_66, %c3_67, %c0_68] : memref<5x5x16xf32, #tpu.memory_space<vmem>>, vector<1x1x16xf32>
    %69 = vector.shape_cast %68 : vector<1x1x16xf32> to vector<1x16xf32>
    %c208 = arith.constant 208 : index
    %c0_69 = arith.constant 0 : index
    %70 = vector.load %arg6[%c208, %c0_69] : memref<400x128xf32, #tpu.memory_space<vmem>>, vector<16x128xf32>
    %cst_70 = arith.constant dense<0.000000e+00> : vector<1x128xf32>
    %71 = tpu.matmul %69, %70, %cst_70 {dimension_numbers = #tpu.dot_dimension_numbers<[1], [0], [0], [1], [0, 0, 1, 1], [], []>} : vector<1x16xf32>, vector<16x128xf32>, vector<1x128xf32> -> vector<1x128xf32>
    %72 = arith.addf %67, %71 : vector<1x128xf32>
    %c2_71 = arith.constant 2 : index
    %c4_72 = arith.constant 4 : index
    %c0_73 = arith.constant 0 : index
    %73 = vector.load %arg15[%c2_71, %c4_72, %c0_73] : memref<5x5x16xf32, #tpu.memory_space<vmem>>, vector<1x1x16xf32>
    %74 = vector.shape_cast %73 : vector<1x1x16xf32> to vector<1x16xf32>
    %c224 = arith.constant 224 : index
    %c0_74 = arith.constant 0 : index
    %75 = vector.load %arg6[%c224, %c0_74] : memref<400x128xf32, #tpu.memory_space<vmem>>, vector<16x128xf32>
    %cst_75 = arith.constant dense<0.000000e+00> : vector<1x128xf32>
    %76 = tpu.matmul %74, %75, %cst_75 {dimension_numbers = #tpu.dot_dimension_numbers<[1], [0], [0], [1], [0, 0, 1, 1], [], []>} : vector<1x16xf32>, vector<16x128xf32>, vector<1x128xf32> -> vector<1x128xf32>
    %77 = arith.addf %72, %76 : vector<1x128xf32>
    %c3_76 = arith.constant 3 : index
    %c0_77 = arith.constant 0 : index
    %c0_78 = arith.constant 0 : index
    %78 = vector.load %arg15[%c3_76, %c0_77, %c0_78] : memref<5x5x16xf32, #tpu.memory_space<vmem>>, vector<1x1x16xf32>
    %79 = vector.shape_cast %78 : vector<1x1x16xf32> to vector<1x16xf32>
    %c240 = arith.constant 240 : index
    %c0_79 = arith.constant 0 : index
    %80 = vector.load %arg6[%c240, %c0_79] : memref<400x128xf32, #tpu.memory_space<vmem>>, vector<16x128xf32>
    %cst_80 = arith.constant dense<0.000000e+00> : vector<1x128xf32>
    %81 = tpu.matmul %79, %80, %cst_80 {dimension_numbers = #tpu.dot_dimension_numbers<[1], [0], [0], [1], [0, 0, 1, 1], [], []>} : vector<1x16xf32>, vector<16x128xf32>, vector<1x128xf32> -> vector<1x128xf32>
    %82 = arith.addf %77, %81 : vector<1x128xf32>
    %c3_81 = arith.constant 3 : index
    %c1_82 = arith.constant 1 : index
    %c0_83 = arith.constant 0 : index
    %83 = vector.load %arg15[%c3_81, %c1_82, %c0_83] : memref<5x5x16xf32, #tpu.memory_space<vmem>>, vector<1x1x16xf32>
    %84 = vector.shape_cast %83 : vector<1x1x16xf32> to vector<1x16xf32>
    %c256 = arith.constant 256 : index
    %c0_84 = arith.constant 0 : index
    %85 = vector.load %arg6[%c256, %c0_84] : memref<400x128xf32, #tpu.memory_space<vmem>>, vector<16x128xf32>
    %cst_85 = arith.constant dense<0.000000e+00> : vector<1x128xf32>
    %86 = tpu.matmul %84, %85, %cst_85 {dimension_numbers = #tpu.dot_dimension_numbers<[1], [0], [0], [1], [0, 0, 1, 1], [], []>} : vector<1x16xf32>, vector<16x128xf32>, vector<1x128xf32> -> vector<1x128xf32>
    %87 = arith.addf %82, %86 : vector<1x128xf32>
    %c3_86 = arith.constant 3 : index
    %c2_87 = arith.constant 2 : index
    %c0_88 = arith.constant 0 : index
    %88 = vector.load %arg15[%c3_86, %c2_87, %c0_88] : memref<5x5x16xf32, #tpu.memory_space<vmem>>, vector<1x1x16xf32>
    %89 = vector.shape_cast %88 : vector<1x1x16xf32> to vector<1x16xf32>
    %c272 = arith.constant 272 : index
    %c0_89 = arith.constant 0 : index
    %90 = vector.load %arg6[%c272, %c0_89] : memref<400x128xf32, #tpu.memory_space<vmem>>, vector<16x128xf32>
    %cst_90 = arith.constant dense<0.000000e+00> : vector<1x128xf32>
    %91 = tpu.matmul %89, %90, %cst_90 {dimension_numbers = #tpu.dot_dimension_numbers<[1], [0], [0], [1], [0, 0, 1, 1], [], []>} : vector<1x16xf32>, vector<16x128xf32>, vector<1x128xf32> -> vector<1x128xf32>
    %92 = arith.addf %87, %91 : vector<1x128xf32>
    %c3_91 = arith.constant 3 : index
    %c3_92 = arith.constant 3 : index
    %c0_93 = arith.constant 0 : index
    %93 = vector.load %arg15[%c3_91, %c3_92, %c0_93] : memref<5x5x16xf32, #tpu.memory_space<vmem>>, vector<1x1x16xf32>
    %94 = vector.shape_cast %93 : vector<1x1x16xf32> to vector<1x16xf32>
    %c288 = arith.constant 288 : index
    %c0_94 = arith.constant 0 : index
    %95 = vector.load %arg6[%c288, %c0_94] : memref<400x128xf32, #tpu.memory_space<vmem>>, vector<16x128xf32>
    %cst_95 = arith.constant dense<0.000000e+00> : vector<1x128xf32>
    %96 = tpu.matmul %94, %95, %cst_95 {dimension_numbers = #tpu.dot_dimension_numbers<[1], [0], [0], [1], [0, 0, 1, 1], [], []>} : vector<1x16xf32>, vector<16x128xf32>, vector<1x128xf32> -> vector<1x128xf32>
    %97 = arith.addf %92, %96 : vector<1x128xf32>
    %c3_96 = arith.constant 3 : index
    %c4_97 = arith.constant 4 : index
    %c0_98 = arith.constant 0 : index
    %98 = vector.load %arg15[%c3_96, %c4_97, %c0_98] : memref<5x5x16xf32, #tpu.memory_space<vmem>>, vector<1x1x16xf32>
    %99 = vector.shape_cast %98 : vector<1x1x16xf32> to vector<1x16xf32>
    %c304 = arith.constant 304 : index
    %c0_99 = arith.constant 0 : index
    %100 = vector.load %arg6[%c304, %c0_99] : memref<400x128xf32, #tpu.memory_space<vmem>>, vector<16x128xf32>
    %cst_100 = arith.constant dense<0.000000e+00> : vector<1x128xf32>
    %101 = tpu.matmul %99, %100, %cst_100 {dimension_numbers = #tpu.dot_dimension_numbers<[1], [0], [0], [1], [0, 0, 1, 1], [], []>} : vector<1x16xf32>, vector<16x128xf32>, vector<1x128xf32> -> vector<1x128xf32>
    %102 = arith.addf %97, %101 : vector<1x128xf32>
    %c4_101 = arith.constant 4 : index
    %c0_102 = arith.constant 0 : index
    %c0_103 = arith.constant 0 : index
    %103 = vector.load %arg15[%c4_101, %c0_102, %c0_103] : memref<5x5x16xf32, #tpu.memory_space<vmem>>, vector<1x1x16xf32>
    %104 = vector.shape_cast %103 : vector<1x1x16xf32> to vector<1x16xf32>
    %c320 = arith.constant 320 : index
    %c0_104 = arith.constant 0 : index
    %105 = vector.load %arg6[%c320, %c0_104] : memref<400x128xf32, #tpu.memory_space<vmem>>, vector<16x128xf32>
    %cst_105 = arith.constant dense<0.000000e+00> : vector<1x128xf32>
    %106 = tpu.matmul %104, %105, %cst_105 {dimension_numbers = #tpu.dot_dimension_numbers<[1], [0], [0], [1], [0, 0, 1, 1], [], []>} : vector<1x16xf32>, vector<16x128xf32>, vector<1x128xf32> -> vector<1x128xf32>
    %107 = arith.addf %102, %106 : vector<1x128xf32>
    %c4_106 = arith.constant 4 : index
    %c1_107 = arith.constant 1 : index
    %c0_108 = arith.constant 0 : index
    %108 = vector.load %arg15[%c4_106, %c1_107, %c0_108] : memref<5x5x16xf32, #tpu.memory_space<vmem>>, vector<1x1x16xf32>
    %109 = vector.shape_cast %108 : vector<1x1x16xf32> to vector<1x16xf32>
    %c336 = arith.constant 336 : index
    %c0_109 = arith.constant 0 : index
    %110 = vector.load %arg6[%c336, %c0_109] : memref<400x128xf32, #tpu.memory_space<vmem>>, vector<16x128xf32>
    %cst_110 = arith.constant dense<0.000000e+00> : vector<1x128xf32>
    %111 = tpu.matmul %109, %110, %cst_110 {dimension_numbers = #tpu.dot_dimension_numbers<[1], [0], [0], [1], [0, 0, 1, 1], [], []>} : vector<1x16xf32>, vector<16x128xf32>, vector<1x128xf32> -> vector<1x128xf32>
    %112 = arith.addf %107, %111 : vector<1x128xf32>
    %c4_111 = arith.constant 4 : index
    %c2_112 = arith.constant 2 : index
    %c0_113 = arith.constant 0 : index
    %113 = vector.load %arg15[%c4_111, %c2_112, %c0_113] : memref<5x5x16xf32, #tpu.memory_space<vmem>>, vector<1x1x16xf32>
    %114 = vector.shape_cast %113 : vector<1x1x16xf32> to vector<1x16xf32>
    %c352 = arith.constant 352 : index
    %c0_114 = arith.constant 0 : index
    %115 = vector.load %arg6[%c352, %c0_114] : memref<400x128xf32, #tpu.memory_space<vmem>>, vector<16x128xf32>
    %cst_115 = arith.constant dense<0.000000e+00> : vector<1x128xf32>
    %116 = tpu.matmul %114, %115, %cst_115 {dimension_numbers = #tpu.dot_dimension_numbers<[1], [0], [0], [1], [0, 0, 1, 1], [], []>} : vector<1x16xf32>, vector<16x128xf32>, vector<1x128xf32> -> vector<1x128xf32>
    %117 = arith.addf %112, %116 : vector<1x128xf32>
    %c4_116 = arith.constant 4 : index
    %c3_117 = arith.constant 3 : index
    %c0_118 = arith.constant 0 : index
    %118 = vector.load %arg15[%c4_116, %c3_117, %c0_118] : memref<5x5x16xf32, #tpu.memory_space<vmem>>, vector<1x1x16xf32>
    %119 = vector.shape_cast %118 : vector<1x1x16xf32> to vector<1x16xf32>
    %c368 = arith.constant 368 : index
    %c0_119 = arith.constant 0 : index
    %120 = vector.load %arg6[%c368, %c0_119] : memref<400x128xf32, #tpu.memory_space<vmem>>, vector<16x128xf32>
    %cst_120 = arith.constant dense<0.000000e+00> : vector<1x128xf32>
    %121 = tpu.matmul %119, %120, %cst_120 {dimension_numbers = #tpu.dot_dimension_numbers<[1], [0], [0], [1], [0, 0, 1, 1], [], []>} : vector<1x16xf32>, vector<16x128xf32>, vector<1x128xf32> -> vector<1x128xf32>
    %122 = arith.addf %117, %121 : vector<1x128xf32>
    %c4_121 = arith.constant 4 : index
    %c4_122 = arith.constant 4 : index
    %c0_123 = arith.constant 0 : index
    %123 = vector.load %arg15[%c4_121, %c4_122, %c0_123] : memref<5x5x16xf32, #tpu.memory_space<vmem>>, vector<1x1x16xf32>
    %124 = vector.shape_cast %123 : vector<1x1x16xf32> to vector<1x16xf32>
    %c384 = arith.constant 384 : index
    %c0_124 = arith.constant 0 : index
    %125 = vector.load %arg6[%c384, %c0_124] : memref<400x128xf32, #tpu.memory_space<vmem>>, vector<16x128xf32>
    %cst_125 = arith.constant dense<0.000000e+00> : vector<1x128xf32>
    %126 = tpu.matmul %124, %125, %cst_125 {dimension_numbers = #tpu.dot_dimension_numbers<[1], [0], [0], [1], [0, 0, 1, 1], [], []>} : vector<1x16xf32>, vector<16x128xf32>, vector<1x128xf32> -> vector<1x128xf32>
    %127 = arith.addf %122, %126 : vector<1x128xf32>
    %cst_126 = arith.constant 0.000000e+00 : f32
    %128 = vector.broadcast %cst_126 : f32 to vector<1x128xf32>
    %129 = arith.maximumf %127, %128 : vector<1x128xf32>
    %c0_127 = arith.constant 0 : index
    %c0_128 = arith.constant 0 : index
    %130 = vector.load %arg8[%c0_127, %c0_128] : memref<128x128xf32, #tpu.memory_space<vmem>>, vector<128x128xf32>
    %cst_129 = arith.constant dense<0.000000e+00> : vector<1x128xf32>
    %131 = tpu.matmul %129, %130, %cst_129 {dimension_numbers = #tpu.dot_dimension_numbers<[1], [0], [0], [1], [0, 0, 1, 1], [], []>} : vector<1x128xf32>, vector<128x128xf32>, vector<1x128xf32> -> vector<1x128xf32>
    %c0_130 = arith.constant 0 : index
    %c0_131 = arith.constant 0 : index
    %132 = vector.load %arg9[%c0_130, %c0_131] : memref<1x128xf32, #tpu.memory_space<vmem>>, vector<1x128xf32>
    %133 = arith.addf %131, %132 : vector<1x128xf32>
    %cst_132 = arith.constant 0.000000e+00 : f32
    %134 = vector.broadcast %cst_132 : f32 to vector<1x128xf32>
    %135 = arith.maximumf %133, %134 : vector<1x128xf32>
    %c0_133 = arith.constant 0 : index
    %c0_134 = arith.constant 0 : index
    %136 = vector.load %arg10[%c0_133, %c0_134] : memref<128x128xf32, #tpu.memory_space<vmem>>, vector<128x128xf32>
    %cst_135 = arith.constant dense<0.000000e+00> : vector<1x128xf32>
    %137 = tpu.matmul %135, %136, %cst_135 {dimension_numbers = #tpu.dot_dimension_numbers<[1], [0], [0], [1], [0, 0, 1, 1], [], []>} : vector<1x128xf32>, vector<128x128xf32>, vector<1x128xf32> -> vector<1x128xf32>
    %c0_136 = arith.constant 0 : index
    %c0_137 = arith.constant 0 : index
    %138 = vector.load %arg11[%c0_136, %c0_137] : memref<1x128xf32, #tpu.memory_space<vmem>>, vector<1x128xf32>
    %139 = arith.addf %137, %138 : vector<1x128xf32>
    %c0_138 = arith.constant 0 : index
    %c0_139 = arith.constant 0 : index
    %c0_140 = arith.constant 0 : index
    %140 = vector.load %arg12[%c0_138, %c0_139, %c0_140] : memref<1x1x128xf32, #tpu.memory_space<vmem>>, vector<1x1x128xf32>
    %141 = vector.shape_cast %140 : vector<1x1x128xf32> to vector<1x128xf32>
    %142 = vector.shape_cast %139 : vector<1x128xf32> to vector<1x1x128xf32>
    tpu.vector_store %arg12[%c0_138, %c0_139, %c0_140], %142 {strides = array<i32>} : memref<1x1x128xf32, #tpu.memory_space<vmem>>, vector<1x1x128xf32>,
    return
  }
  func.func @transform_0(%arg0: i32) -> (i32, i32, i32, i32) {
    %c0_i32 = arith.constant 0 : i32
    %c0_i32_0 = arith.constant 0 : i32
    %c0_i32_1 = arith.constant 0 : i32
    %c0_i32_2 = arith.constant 0 : i32
    return %arg0, %c0_i32, %c0_i32_0, %c0_i32_1 : i32, i32, i32, i32
  }
  func.func @transform_1(%arg0: i32) -> (i32, i32) {
    %c0_i32 = arith.constant 0 : i32
    %c0_i32_0 = arith.constant 0 : i32
    %c0_i32_1 = arith.constant 0 : i32
    return %c0_i32, %c0_i32_0 : i32, i32
  }
  func.func @transform_2(%arg0: i32) -> (i32, i32) {
    %c0_i32 = arith.constant 0 : i32
    %c0_i32_0 = arith.constant 0 : i32
    %c0_i32_1 = arith.constant 0 : i32
    return %c0_i32, %c0_i32_0 : i32, i32
  }
  func.func @transform_3(%arg0: i32) -> (i32, i32) {
    %c0_i32 = arith.constant 0 : i32
    %c0_i32_0 = arith.constant 0 : i32
    %c0_i32_1 = arith.constant 0 : i32
    return %c0_i32, %c0_i32_0 : i32, i32
  }
  func.func @transform_4(%arg0: i32) -> (i32, i32) {
    %c0_i32 = arith.constant 0 : i32
    %c0_i32_0 = arith.constant 0 : i32
    %c0_i32_1 = arith.constant 0 : i32
    return %c0_i32, %c0_i32_0 : i32, i32
  }
  func.func @transform_5(%arg0: i32) -> (i32, i32) {
    %c0_i32 = arith.constant 0 : i32
    %c0_i32_0 = arith.constant 0 : i32
    %c0_i32_1 = arith.constant 0 : i32
    return %c0_i32, %c0_i32_0 : i32, i32
  }
  func.func @transform_6(%arg0: i32) -> (i32, i32) {
    %c0_i32 = arith.constant 0 : i32
    %c0_i32_0 = arith.constant 0 : i32
    %c0_i32_1 = arith.constant 0 : i32
    return %c0_i32, %c0_i32_0 : i32, i32
  }
  func.func @transform_7(%arg0: i32) -> (i32, i32) {
    %c0_i32 = arith.constant 0 : i32
    %c0_i32_0 = arith.constant 0 : i32
    %c0_i32_1 = arith.constant 0 : i32
    return %c0_i32, %c0_i32_0 : i32, i32
  }
  func.func @transform_8(%arg0: i32) -> (i32, i32) {
    %c0_i32 = arith.constant 0 : i32
    %c0_i32_0 = arith.constant 0 : i32
    %c0_i32_1 = arith.constant 0 : i32
    return %c0_i32, %c0_i32_0 : i32, i32
  }
  func.func @transform_9(%arg0: i32) -> (i32, i32) {
    %c0_i32 = arith.constant 0 : i32
    %c0_i32_0 = arith.constant 0 : i32
    %c0_i32_1 = arith.constant 0 : i32
    return %c0_i32, %c0_i32_0 : i32, i32
  }
  func.func @transform_10(%arg0: i32) -> (i32, i32) {
    %c0_i32 = arith.constant 0 : i32
    %c0_i32_0 = arith.constant 0 : i32
    %c0_i32_1 = arith.constant 0 : i32
    return %c0_i32, %c0_i32_0 : i32, i32
  }
  func.func @transform_11(%arg0: i32) -> (i32, i32, i32) {
    %c0_i32 = arith.constant 0 : i32
    %c0_i32_0 = arith.constant 0 : i32
    %c0_i32_1 = arith.constant 0 : i32
    return %arg0, %c0_i32, %c0_i32_0 : i32, i32, i32
  }
}

</mosaic_0001>

<llo_original>
// kernel: net_forward.1
$region0: #{net_forward.1}
  #allocation0 [shape = 'u32[]', space=smem, size = 0x4, offset = 0x4, fixed_abs, tag = 'smem constant byte address 0x4 - core index']
  #allocation1 [shape = 'u32[72,128]{1,0:T(1,128)}', space=vmem, size = 0x9000, scoped, tag = 'internal scratch']
  #allocation2 [shape = 'f32[28,200]{1,0:T(8,128)}', space=vmem, size = 0x8000, scoped, tag = 'scratch operand']
  #allocation3 [shape = 'f32[14,14,8]{2,1,0:T(8,128)}', space=vmem, size = 0x1c000, scoped, tag = 'scratch operand']
  #allocation4 [shape = 'f32[5,5,16]{2,1,0:T(8,128)}', space=vmem, size = 0x5000, scoped, tag = 'scratch operand']
  %s0 = inlined_call_operand.vmem [shape: f32[2,32,32,8], index: 0, kind: input, shape index: {}]
  %s1 = inlined_call_operand.vmem [shape: f32[200,128], index: 1, kind: input, shape index: {}]
  %s2 = inlined_call_operand.vmem [shape: f32[1,128], index: 2, kind: input, shape index: {}]
  %s3 = inlined_call_operand.vmem [shape: f32[200,128], index: 3, kind: input, shape index: {}]
  %s4 = inlined_call_operand.vmem [shape: f32[1,128], index: 4, kind: input, shape index: {}]
  %s5 = inlined_call_operand.vmem [shape: f32[400,128], index: 5, kind: input, shape index: {}]
  %s6 = inlined_call_operand.vmem [shape: f32[1,128], index: 6, kind: input, shape index: {}]
  %s7 = inlined_call_operand.vmem [shape: f32[128,128], index: 7, kind: input, shape index: {}]
  %s8 = inlined_call_operand.vmem [shape: f32[1,128], index: 8, kind: input, shape index: {}]
  %s9 = inlined_call_operand.vmem [shape: f32[128,128], index: 9, kind: input, shape index: {}]
  %s10 = inlined_call_operand.vmem [shape: f32[1,128], index: 10, kind: input, shape index: {}]
  %s11 = inlined_call_operand.hbm [shape: f32[2,1,128], index: 11, kind: output, shape index: {}]
  %s12 = sld [smem:[#allocation0]]
  $region91: #{net_forward.1} parent=0
    _
  %s14 = ssub.s32 1, %s12
  %s15 = scalar_select 0, %s14, %s12
  $region1: #{net_forward.1} parent=0
    #allocation5 [shape = 'u8[1024]{0}', space=vmem, size = 0x400, scoped, tag = 'output window, operand 0']
    #allocation6 [shape = 's32[2]{0}', space=sflag, size = 0x8, scoped, tag = 'scoped memory for net_forward.1']
    %16 = vsyncpa [#allocation6], 0
    %s17 = scalar_lea.sflag [#allocation6], 1
    %18 = vsyncpa %s17, 0
    loop: start=0, step=1, limit=4
    $region2: #{net_forward.1} parent=1 // loop_pre_header
      _
    $region3: #{net_forward.1} parent=1 // loop_header
      %s20 = sphi 0, %s24
      %p21 = scmp.ge.s32.totalorder %s20, 4
      %s30 = sphi 0, %s32
      %s33 = sphi 0, %s30
      %s34 = sphi 0, %s33
      %s50 = sphi 0, %s34
      %s54 = sphi 0, %s54
      %s56 = sphi 0, %s54
      %s57 = sphi 0, %s56
      %s71 = sphi 0, %s57
      %s75 = sphi 0, %s75
      %s77 = sphi 0, %s75
      %s78 = sphi 0, %s77
      %s92 = sphi 0, %s78
      %s96 = sphi 0, %s96
      %s98 = sphi 0, %s96
      %s99 = sphi 0, %s98
      %s113 = sphi 0, %s99
      %s117 = sphi 0, %s117
      %s119 = sphi 0, %s117
      %s120 = sphi 0, %s119
      %s134 = sphi 0, %s120
      %s138 = sphi 0, %s138
      %s140 = sphi 0, %s138
      %s141 = sphi 0, %s140
      %s155 = sphi 0, %s141
      %s159 = sphi 0, %s159
      %s161 = sphi 0, %s159
      %s162 = sphi 0, %s161
      %s176 = sphi 0, %s162
      %s180 = sphi 0, %s180
      %s182 = sphi 0, %s180
      %s183 = sphi 0, %s182
      %s197 = sphi 0, %s183
      %s201 = sphi 0, %s201
      %s203 = sphi 0, %s201
      %s204 = sphi 0, %s203
      %s218 = sphi 0, %s204
      %s222 = sphi 0, %s222
      %s224 = sphi 0, %s222
      %s225 = sphi 0, %s224
      %s239 = sphi 0, %s225
      %s243 = sphi 0, %s243
      %s245 = sphi 0, %s243
      %s246 = sphi 0, %s245
      %s260 = sphi 0, %s246
      %s266 = sphi 0, %s268
      %s269 = sphi 0, %s266
      %s270 = sphi 0, %s269
      %s286 = sphi 0, %s270
    $region4: #{net_forward.1} parent=1 // loop_header_branch
      %23 = sbr.rel (%p21) target = $region8
    $region5: #{net_forward.1} parent=1 // loop_body
      %s25 = ssub.s32 %s20, 1
      %s26 = ssub.s32 %s20, 2
      %s27 = sadd.s32 %s20, 1
      %s28 = ssub.s32 %s20, %s27
      %p29 = scmp.eq.s32.totalorder %s28, 0
      %s31 = sadd.s32 %s30, 1
      %s32 = scalar_select %p29, %s30, %s31
      %p35 = pneg %p29
      %p36 = scmp.eq.s32.totalorder %s20, 1
      %p37 = por %p35, %p36
      %p38 = scmp.ne.s32.totalorder %s30, %s33
      %p39 = scmp.eq.s32.totalorder %s20, 0
      %p40 = por %p38, %p39
      %p41 = scmp.ne.s32.totalorder %s30, %s33
      %p42 = scmp.eq.s32.totalorder %s25, 1
      %p43 = por %p41, %p42
      %p44 = scmp.ne.s32.totalorder %s33, %s34
      %p45 = scmp.eq.s32.totalorder %s25, 0
      %p46 = por %p44, %p45
      %p47 = scmp.ne.s32.totalorder %s33, %s34
      %p48 = scmp.eq.s32.totalorder %s26, 1
      %p49 = por %p47, %p48
      %p51 = scmp.ne.s32.totalorder %s34, %s50
      %p52 = scmp.eq.s32.totalorder %s26, 0
      %p53 = por %p51, %p52
      %s55 = sadd.s32 %s54, 1
      %p58 = scmp.eq.s32.totalorder %s20, 1
      %p59 = scmp.ne.s32.totalorder %s54, %s56
      %p60 = scmp.eq.s32.totalorder %s20, 0
      %p61 = por %p59, %p60
      %p62 = scmp.ne.s32.totalorder %s54, %s56
      %p63 = scmp.eq.s32.totalorder %s25, 1
      %p64 = por %p62, %p63
      %p65 = scmp.ne.s32.totalorder %s56, %s57
      %p66 = scmp.eq.s32.totalorder %s25, 0
      %p67 = por %p65, %p66
      %p68 = scmp.ne.s32.totalorder %s56, %s57
      %p69 = scmp.eq.s32.totalorder %s26, 1
      %p70 = por %p68, %p69
      %p72 = scmp.ne.s32.totalorder %s57, %s71
      %p73 = scmp.eq.s32.totalorder %s26, 0
      %p74 = por %p72, %p73
      %s76 = sadd.s32 %s75, 1
      %p79 = scmp.eq.s32.totalorder %s20, 1
      %p80 = scmp.ne.s32.totalorder %s75, %s77
      %p81 = scmp.eq.s32.totalorder %s20, 0
      %p82 = por %p80, %p81
      %p83 = scmp.ne.s32.totalorder %s75, %s77
      %p84 = scmp.eq.s32.totalorder %s25, 1
      %p85 = por %p83, %p84
      %p86 = scmp.ne.s32.totalorder %s77, %s78
      %p87 = scmp.eq.s32.totalorder %s25, 0
      %p88 = por %p86, %p87
      %p89 = scmp.ne.s32.totalorder %s77, %s78
      %p90 = scmp.eq.s32.totalorder %s26, 1
      %p91 = por %p89, %p90
      %p93 = scmp.ne.s32.totalorder %s78, %s92
      %p94 = scmp.eq.s32.totalorder %s26, 0
      %p95 = por %p93, %p94
      %s97 = sadd.s32 %s96, 1
      %p100 = scmp.eq.s32.totalorder %s20, 1
      %p101 = scmp.ne.s32.totalorder %s96, %s98
      %p102 = scmp.eq.s32.totalorder %s20, 0
      %p103 = por %p101, %p102
      %p104 = scmp.ne.s32.totalorder %s96, %s98
      %p105 = scmp.eq.s32.totalorder %s25, 1
      %p106 = por %p104, %p105
      %p107 = scmp.ne.s32.totalorder %s98, %s99
      %p108 = scmp.eq.s32.totalorder %s25, 0
      %p109 = por %p107, %p108
      %p110 = scmp.ne.s32.totalorder %s98, %s99
      %p111 = scmp.eq.s32.totalorder %s26, 1
      %p112 = por %p110, %p111
      %p114 = scmp.ne.s32.totalorder %s99, %s113
      %p115 = scmp.eq.s32.totalorder %s26, 0
      %p116 = por %p114, %p115
      %s118 = sadd.s32 %s117, 1
      %p121 = scmp.eq.s32.totalorder %s20, 1
      %p122 = scmp.ne.s32.totalorder %s117, %s119
      %p123 = scmp.eq.s32.totalorder %s20, 0
      %p124 = por %p122, %p123
      %p125 = scmp.ne.s32.totalorder %s117, %s119
      %p126 = scmp.eq.s32.totalorder %s25, 1
      %p127 = por %p125, %p126
      %p128 = scmp.ne.s32.totalorder %s119, %s120
      %p129 = scmp.eq.s32.totalorder %s25, 0
      %p130 = por %p128, %p129
      %p131 = scmp.ne.s32.totalorder %s119, %s120
      %p132 = scmp.eq.s32.totalorder %s26, 1
      %p133 = por %p131, %p132
      %p135 = scmp.ne.s32.totalorder %s120, %s134
      %p136 = scmp.eq.s32.totalorder %s26, 0
      %p137 = por %p135, %p136
      %s139 = sadd.s32 %s138, 1
      %p142 = scmp.eq.s32.totalorder %s20, 1
      %p143 = scmp.ne.s32.totalorder %s138, %s140
      %p144 = scmp.eq.s32.totalorder %s20, 0
      %p145 = por %p143, %p144
      %p146 = scmp.ne.s32.totalorder %s138, %s140
      %p147 = scmp.eq.s32.totalorder %s25, 1
      %p148 = por %p146, %p147
      %p149 = scmp.ne.s32.totalorder %s140, %s141
      %p150 = scmp.eq.s32.totalorder %s25, 0
      %p151 = por %p149, %p150
      %p152 = scmp.ne.s32.totalorder %s140, %s141
      %p153 = scmp.eq.s32.totalorder %s26, 1
      %p154 = por %p152, %p153
      %p156 = scmp.ne.s32.totalorder %s141, %s155
      %p157 = scmp.eq.s32.totalorder %s26, 0
      %p158 = por %p156, %p157
      %s160 = sadd.s32 %s159, 1
      %p163 = scmp.eq.s32.totalorder %s20, 1
      %p164 = scmp.ne.s32.totalorder %s159, %s161
      %p165 = scmp.eq.s32.totalorder %s20, 0
      %p166 = por %p164, %p165
      %p167 = scmp.ne.s32.totalorder %s159, %s161
      %p168 = scmp.eq.s32.totalorder %s25, 1
      %p169 = por %p167, %p168
      %p170 = scmp.ne.s32.totalorder %s161, %s162
      %p171 = scmp.eq.s32.totalorder %s25, 0
      %p172 = por %p170, %p171
      %p173 = scmp.ne.s32.totalorder %s161, %s162
      %p174 = scmp.eq.s32.totalorder %s26, 1
      %p175 = por %p173, %p174
      %p177 = scmp.ne.s32.totalorder %s162, %s176
      %p178 = scmp.eq.s32.totalorder %s26, 0
      %p179 = por %p177, %p178
      %s181 = sadd.s32 %s180, 1
      %p184 = scmp.eq.s32.totalorder %s20, 1
      %p185 = scmp.ne.s32.totalorder %s180, %s182
      %p186 = scmp.eq.s32.totalorder %s20, 0
      %p187 = por %p185, %p186
      %p188 = scmp.ne.s32.totalorder %s180, %s182
      %p189 = scmp.eq.s32.totalorder %s25, 1
      %p190 = por %p188, %p189
      %p191 = scmp.ne.s32.totalorder %s182, %s183
      %p192 = scmp.eq.s32.totalorder %s25, 0
      %p193 = por %p191, %p192
      %p194 = scmp.ne.s32.totalorder %s182, %s183
      %p195 = scmp.eq.s32.totalorder %s26, 1
      %p196 = por %p194, %p195
      %p198 = scmp.ne.s32.totalorder %s183, %s197
      %p199 = scmp.eq.s32.totalorder %s26, 0
      %p200 = por %p198, %p199
      %s202 = sadd.s32 %s201, 1
      %p205 = scmp.eq.s32.totalorder %s20, 1
      %p206 = scmp.ne.s32.totalorder %s201, %s203
      %p207 = scmp.eq.s32.totalorder %s20, 0
      %p208 = por %p206, %p207
      %p209 = scmp.ne.s32.totalorder %s201, %s203
      %p210 = scmp.eq.s32.totalorder %s25, 1
      %p211 = por %p209, %p210
      %p212 = scmp.ne.s32.totalorder %s203, %s204
      %p213 = scmp.eq.s32.totalorder %s25, 0
      %p214 = por %p212, %p213
      %p215 = scmp.ne.s32.totalorder %s203, %s204
      %p216 = scmp.eq.s32.totalorder %s26, 1
      %p217 = por %p215, %p216
      %p219 = scmp.ne.s32.totalorder %s204, %s218
      %p220 = scmp.eq.s32.totalorder %s26, 0
      %p221 = por %p219, %p220
      %s223 = sadd.s32 %s222, 1
      %p226 = scmp.eq.s32.totalorder %s20, 1
      %p227 = scmp.ne.s32.totalorder %s222, %s224
      %p228 = scmp.eq.s32.totalorder %s20, 0
      %p229 = por %p227, %p228
      %p230 = scmp.ne.s32.totalorder %s222, %s224
      %p231 = scmp.eq.s32.totalorder %s25, 1
      %p232 = por %p230, %p231
      %p233 = scmp.ne.s32.totalorder %s224, %s225
      %p234 = scmp.eq.s32.totalorder %s25, 0
      %p235 = por %p233, %p234
      %p236 = scmp.ne.s32.totalorder %s224, %s225
      %p237 = scmp.eq.s32.totalorder %s26, 1
      %p238 = por %p236, %p237
      %p240 = scmp.ne.s32.totalorder %s225, %s239
      %p241 = scmp.eq.s32.totalorder %s26, 0
      %p242 = por %p240, %p241
      %s244 = sadd.s32 %s243, 1
      %p247 = scmp.eq.s32.totalorder %s20, 1
      %p248 = scmp.ne.s32.totalorder %s243, %s245
      %p249 = scmp.eq.s32.totalorder %s20, 0
      %p250 = por %p248, %p249
      %p251 = scmp.ne.s32.totalorder %s243, %s245
      %p252 = scmp.eq.s32.totalorder %s25, 1
      %p253 = por %p251, %p252
      %p254 = scmp.ne.s32.totalorder %s245, %s246
      %p255 = scmp.eq.s32.totalorder %s25, 0
      %p256 = por %p254, %p255
      %p257 = scmp.ne.s32.totalorder %s245, %s246
      %p258 = scmp.eq.s32.totalorder %s26, 1
      %p259 = por %p257, %p258
      %p261 = scmp.ne.s32.totalorder %s246, %s260
      %p262 = scmp.eq.s32.totalorder %s26, 0
      %p263 = por %p261, %p262
      %s264 = ssub.s32 %s20, %s27
      %p265 = scmp.eq.s32.totalorder %s264, 0
      %s267 = sadd.s32 %s266, 1
      %s268 = scalar_select %p265, %s266, %s267
      %p271 = pneg %p265
      %p272 = scmp.eq.s32.totalorder %s20, 1
      %p273 = por %p271, %p272
      %p274 = scmp.ne.s32.totalorder %s266, %s269
      %p275 = scmp.eq.s32.totalorder %s20, 0
      %p276 = por %p274, %p275
      %p277 = scmp.ne.s32.totalorder %s266, %s269
      %p278 = scmp.eq.s32.totalorder %s25, 1
      %p279 = por %p277, %p278
      %p280 = scmp.ne.s32.totalorder %s269, %s270
      %p281 = scmp.eq.s32.totalorder %s25, 0
      %p282 = por %p280, %p281
      %p283 = scmp.ne.s32.totalorder %s269, %s270
      %p284 = scmp.eq.s32.totalorder %s26, 1
      %p285 = por %p283, %p284
      %p287 = scmp.ne.s32.totalorder %s270, %s286
      %p288 = scmp.eq.s32.totalorder %s26, 0
      %p289 = por %p287, %p288
      %p290 = scmp.le.s32.totalorder 1, %s20
      %p291 = scmp.lt.s32.totalorder %s20, 3
      %p292 = pnand %p290, %p291
      %p293 = pneg %p292
      // Predicated region
      $region9: #{net_forward.1} parent=5 // pred_check
        _
      $region10: #{net_forward.1} parent=5 // pred_check_branch
        %295 = sbr.rel (%p292) target = $region12
      $region11: #{net_forward.1} parent=5 // pred_region
        %s296 = ssub.s32 %s20, 1
        // Predicated region
        $region13: #{net_forward.1} parent=11 // pred_check
          %p297 = pneg %p67
        $region14: #{net_forward.1} parent=11 // pred_check_branch
          %299 = sbr.rel (%p297) target = $region16
        $region15: #{net_forward.1} parent=11 // pred_region
          _
        $region16: #{net_forward.1} parent=11 // pred_fallthru
          _
        // Predicated region
        $region17: #{net_forward.1} parent=11 // pred_check
          %p300 = pneg %p88
        $region18: #{net_forward.1} parent=11 // pred_check_branch
          %302 = sbr.rel (%p300) target = $region20
        $region19: #{net_forward.1} parent=11 // pred_region
          _
        $region20: #{net_forward.1} parent=11 // pred_fallthru
          _
        // Predicated region
        $region21: #{net_forward.1} parent=11 // pred_check
          %p303 = pneg %p109
        $region22: #{net_forward.1} parent=11 // pred_check_branch
          %305 = sbr.rel (%p303) target = $region24
        $region23: #{net_forward.1} parent=11 // pred_region
          _
        $region24: #{net_forward.1} parent=11 // pred_fallthru
          _
        // Predicated region
        $region25: #{net_forward.1} parent=11 // pred_check
          %p306 = pneg %p130
        $region26: #{net_forward.1} parent=11 // pred_check_branch
          %308 = sbr.rel (%p306) target = $region28
        $region27: #{net_forward.1} parent=11 // pred_region
          _
        $region28: #{net_forward.1} parent=11 // pred_fallthru
          _
        // Predicated region
        $region29: #{net_forward.1} parent=11 // pred_check
          %p309 = pneg %p151
        $region30: #{net_forward.1} parent=11 // pred_check_branch
          %311 = sbr.rel (%p309) target = $region32
        $region31: #{net_forward.1} parent=11 // pred_region
          _
        $region32: #{net_forward.1} parent=11 // pred_fallthru
          _
        // Predicated region
        $region33: #{net_forward.1} parent=11 // pred_check
          %p312 = pneg %p172
        $region34: #{net_forward.1} parent=11 // pred_check_branch
          %314 = sbr.rel (%p312) target = $region36
        $region35: #{net_forward.1} parent=11 // pred_region
          _
        $region36: #{net_forward.1} parent=11 // pred_fallthru
          _
        // Predicated region
        $region37: #{net_forward.1} parent=11 // pred_check
          %p315 = pneg %p193
        $region38: #{net_forward.1} parent=11 // pred_check_branch
          %317 = sbr.rel (%p315) target = $region40
        $region39: #{net_forward.1} parent=11 // pred_region
          _
        $region40: #{net_forward.1} parent=11 // pred_fallthru
          _
        // Predicated region
        $region41: #{net_forward.1} parent=11 // pred_check
          %p318 = pneg %p214
        $region42: #{net_forward.1} parent=11 // pred_check_branch
          %320 = sbr.rel (%p318) target = $region44
        $region43: #{net_forward.1} parent=11 // pred_region
          _
        $region44: #{net_forward.1} parent=11 // pred_fallthru
          _
        // Predicated region
        $region45: #{net_forward.1} parent=11 // pred_check
          %p321 = pneg %p235
        $region46: #{net_forward.1} parent=11 // pred_check_branch
          %323 = sbr.rel (%p321) target = $region48
        $region47: #{net_forward.1} parent=11 // pred_region
          _
        $region48: #{net_forward.1} parent=11 // pred_fallthru
          _
        // Predicated region
        $region49: #{net_forward.1} parent=11 // pred_check
          %p324 = pneg %p256
        $region50: #{net_forward.1} parent=11 // pred_check_branch
          %326 = sbr.rel (%p324) target = $region52
        $region51: #{net_forward.1} parent=11 // pred_region
          _
        $region52: #{net_forward.1} parent=11 // pred_fallthru
          _
      $region12: #{net_forward.1} parent=5 // pred_fallthru
        _
      %p327 = scmp.lt.s32.totalorder %s20, 2
      // Predicated region
      $region53: #{net_forward.1} parent=5 // pred_check
        %p328 = pneg %p327
      $region54: #{net_forward.1} parent=5 // pred_check_branch
        %330 = sbr.rel (%p328) target = $region56
      $region55: #{net_forward.1} parent=5 // pred_region
        // Predicated region
        $region57: #{net_forward.1} parent=55 // pred_check
          %p331 = pneg %p40
        $region58: #{net_forward.1} parent=55 // pred_check_branch
          %333 = sbr.rel (%p331) target = $region60
        $region59: #{net_forward.1} parent=55 // pred_region
          %p334 = scmp.lt.s32.totalorder %s20, 1
          %s335 = scalar_select %p334, %s20, 1
          %s336 = smul.addr %s335, 128
          %s337 = smul.addr %s336, 8
          %s338 = scalar_lea.vmem %s0, %s337
        $region60: #{net_forward.1} parent=55 // pred_fallthru
          _
      $region56: #{net_forward.1} parent=5 // pred_fallthru
        _
      %p339 = scmp.le.s32.totalorder 1, %s20
      %p340 = scmp.lt.s32.totalorder %s20, 3
      %p341 = pnand %p339, %p340
      %p342 = pneg %p341
      // Predicated region
      $region61: #{net_forward.1} parent=5 // pred_check
        _
      $region62: #{net_forward.1} parent=5 // pred_check_branch
        %344 = sbr.rel (%p341) target = $region64
      $region63: #{net_forward.1} parent=5 // pred_region
        %s345 = ssub.s32 %s20, 1
        %p346 = scmp.lt.s32.totalorder %s25, 1
        %s347 = scalar_select %p346, %s25, 1
        %s348 = smul.addr %s347, 128
        %s349 = smul.addr %s348, 8
        %s350 = scalar_lea.vmem %s0, %s349
        %p351 = pneg %p46
        %p352 = pneg %p43
        %p353 = pneg %p67
        %p354 = pneg %p64
        %p355 = pneg %p88
        %p356 = pneg %p85
        %p357 = pneg %p109
        %p358 = pneg %p106
        %p359 = pneg %p130
        %p360 = pneg %p127
        %p361 = pneg %p151
        %p362 = pneg %p148
        %p363 = pneg %p172
        %p364 = pneg %p169
        %p365 = pneg %p193
        %p366 = pneg %p190
        %p367 = pneg %p214
        %p368 = pneg %p211
        %p369 = pneg %p235
        %p370 = pneg %p232
        %p371 = pneg %p256
        %p372 = pneg %p253
        %p373 = pneg %p282
        %p374 = pneg %p279
        %s375 = sand.u32 %s269, 1
        %s376 = scalar_lea.sflag [#allocation6], %s375
        %s377 = sand.u32 %s269, 1
        %s378 = scalar_lea.vmem [#allocation5], %s377
        %p379 = scmp.lt.s32.totalorder %s25, 1
        %s380 = scalar_select %p379, %s25, 1
        %s381 = smul.addr %s380, 128
        %s382 = smul.addr %s381, 8
        %s383 = scalar_lea.vmem %s0, %s382
        loop: start=0, step=1, limit=14
        $region65: #{net_forward.1} parent=63 // loop_pre_header
          _
        $region66: #{net_forward.1} parent=63 // loop_header
          %s385 = sphi 0, %s389
          %p386 = scmp.ge.s32.totalorder %s385, 14
        $region67: #{net_forward.1} parent=63 // loop_header_branch
          %388 = sbr.rel (%p386) target = $region71
        $region68: #{net_forward.1} parent=63 // loop_body
          %s390 = smul.u32 %s385, 2
          %s391 = smul.u32 %s390, 32
          %s392 = scalar_lea.vmem %s383, %s391
          %v393 = vld [vmem:[%s392] sm:$0xff]
          %v394 = vld [vmem:[%s392 + $0x8] sm:$0xff]
          %v395 = vld [vmem:[%s392 + $0x10] sm:$0xff]
          %v396 = vld [vmem:[%s392 + $0x18] sm:$0xff]
          %vm397 = vcmask 64512
          %398 = vst.msk [vmem:[#allocation2] sm:$0xff] %vm397, %v393
          %399 = vst.msk [vmem:[#allocation2 + $0x10] sm:$0xff] %vm397, %v394
          %400 = vst.msk [vmem:[#allocation2 + $0x20] sm:$0xff] %vm397, %v395
          %vm401 = vcmask 60416
          %402 = vst.msk [vmem:[#allocation2 + $0x30] sm:$0xf] %vm401, %v396
          %vm407 = vcmask 1046528
          %v408 = vrot.slane %v393, 1
          %v409 = vrot.slane %v394, 1
          %v410 = vsel %vm407, %v408, %v409
          %v411 = vrot.slane %v395, 1
          %v412 = vsel %vm407, %v409, %v411
          %v413 = vrot.slane %v396, 1
          %v414 = vsel %vm407, %v411, %v413
          %415 = vrot.lane.b32.xlu0 %v410, 8
          %v416 = vpop.permute.xlu0 %415
          %417 = vrot.lane.b32.xlu0 %v412, 8
          %v418 = vpop.permute.xlu0 %417
          %419 = vrot.lane.b32.xlu0 %v414, 8
          %v420 = vpop.permute.xlu0 %419
          %421 = vrot.lane.b32.xlu0 %v413, 8
          %v422 = vpop.permute.xlu0 %421
          %vm427 = vcmask 130112
          %428 = vst.msk [vmem:[#allocation2] sm:$0xff] %vm427, %v416
          %429 = vst.msk [vmem:[#allocation2 + $0x10] sm:$0xff] %vm427, %v418
          %430 = vst.msk [vmem:[#allocation2 + $0x20] sm:$0xff] %vm427, %v420
          %vm431 = vcmask 126016
          %432 = vst.msk [vmem:[#allocation2 + $0x30] sm:$0xf] %vm431, %v422
          %vm433 = vcmask 1045504
          %v434 = vrot.slane %v393, 2
          %v435 = vrot.slane %v394, 2
          %v436 = vsel %vm433, %v434, %v435
          %v437 = vrot.slane %v395, 2
          %v438 = vsel %vm433, %v435, %v437
          %v439 = vrot.slane %v396, 2
          %v440 = vsel %vm433, %v437, %v439
          %441 = vrot.lane.b32.xlu0 %v436, 16
          %v442 = vpop.permute.xlu0 %441
          %443 = vrot.lane.b32.xlu0 %v438, 16
          %v444 = vpop.permute.xlu0 %443
          %445 = vrot.lane.b32.xlu0 %v440, 16
          %v446 = vpop.permute.xlu0 %445
          %447 = vrot.lane.b32.xlu0 %v439, 16
          %v448 = vpop.permute.xlu0 %447
          %vm453 = vcmask 195712
          %454 = vst.msk [vmem:[#allocation2] sm:$0xff] %vm453, %v442
          %455 = vst.msk [vmem:[#allocation2 + $0x10] sm:$0xff] %vm453, %v444
          %456 = vst.msk [vmem:[#allocation2 + $0x20] sm:$0xff] %vm453, %v446
          %vm457 = vcmask 191616
          %458 = vst.msk [vmem:[#allocation2 + $0x30] sm:$0xf] %vm457, %v448
          %vm459 = vcmask 1044480
          %v460 = vrot.slane %v393, 3
          %v461 = vrot.slane %v394, 3
          %v462 = vsel %vm459, %v460, %v461
          %v463 = vrot.slane %v395, 3
          %v464 = vsel %vm459, %v461, %v463
          %v465 = vrot.slane %v396, 3
          %v466 = vsel %vm459, %v463, %v465
          %467 = vrot.lane.b32.xlu0 %v462, 24
          %v468 = vpop.permute.xlu0 %467
          %469 = vrot.lane.b32.xlu0 %v464, 24
          %v470 = vpop.permute.xlu0 %469
          %471 = vrot.lane.b32.xlu0 %v466, 24
          %v472 = vpop.permute.xlu0 %471
          %473 = vrot.lane.b32.xlu0 %v465, 24
          %v474 = vpop.permute.xlu0 %473
          %vm479 = vcmask 261312
          %480 = vst.msk [vmem:[#allocation2] sm:$0xff] %vm479, %v468
          %481 = vst.msk [vmem:[#allocation2 + $0x10] sm:$0xff] %vm479, %v470
          %482 = vst.msk [vmem:[#allocation2 + $0x20] sm:$0xff] %vm479, %v472
          %vm483 = vcmask 257216
          %484 = vst.msk [vmem:[#allocation2 + $0x30] sm:$0xf] %vm483, %v474
          %vm485 = vcmask 1043456
          %v486 = vrot.slane %v393, 4
          %v487 = vrot.slane %v394, 4
          %v488 = vsel %vm485, %v486, %v487
          %v489 = vrot.slane %v395, 4
          %v490 = vsel %vm485, %v487, %v489
          %v491 = vrot.slane %v396, 4
          %v492 = vsel %vm485, %v489, %v491
          %493 = vrot.lane.b32.xlu0 %v488, 32
          %v494 = vpop.permute.xlu0 %493
          %495 = vrot.lane.b32.xlu0 %v490, 32
          %v496 = vpop.permute.xlu0 %495
          %497 = vrot.lane.b32.xlu0 %v492, 32
          %v498 = vpop.permute.xlu0 %497
          %499 = vrot.lane.b32.xlu0 %v491, 32
          %v500 = vpop.permute.xlu0 %499
          %vm505 = vcmask 326912
          %506 = vst.msk [vmem:[#allocation2] sm:$0xff] %vm505, %v494
          %507 = vst.msk [vmem:[#allocation2 + $0x10] sm:$0xff] %vm505, %v496
          %508 = vst.msk [vmem:[#allocation2 + $0x20] sm:$0xff] %vm505, %v498
          %vm509 = vcmask 322816
          %510 = vst.msk [vmem:[#allocation2 + $0x30] sm:$0xf] %vm509, %v500
          %s511 = sadd.s32 %s390, 1
          %s512 = smul.u32 %s511, 32
          %s513 = scalar_lea.vmem %s383, %s512
          %v514 = vld [vmem:[%s513] sm:$0xff]
          %v515 = vld [vmem:[%s513 + $0x8] sm:$0xff]
          %v516 = vld [vmem:[%s513 + $0x10] sm:$0xff]
          %v517 = vld [vmem:[%s513 + $0x18] sm:$0xff]
          %522 = vrot.lane.b32.xlu0 %v514, 40
          %v523 = vpop.permute.xlu0 %522
          %524 = vrot.lane.b32.xlu0 %v515, 40
          %v525 = vpop.permute.xlu0 %524
          %526 = vrot.lane.b32.xlu0 %v516, 40
          %v527 = vpop.permute.xlu0 %526
          %528 = vrot.lane.b32.xlu0 %v517, 40
          %v529 = vpop.permute.xlu0 %528
          %vm534 = vcmask 392512
          %535 = vst.msk [vmem:[#allocation2] sm:$0xff] %vm534, %v523
          %536 = vst.msk [vmem:[#allocation2 + $0x10] sm:$0xff] %vm534, %v525
          %537 = vst.msk [vmem:[#allocation2 + $0x20] sm:$0xff] %vm534, %v527
          %vm538 = vcmask 388416
          %539 = vst.msk [vmem:[#allocation2 + $0x30] sm:$0xf] %vm538, %v529
          %v540 = vrot.slane %v514, 1
          %v541 = vrot.slane %v515, 1
          %v542 = vsel %vm407, %v540, %v541
          %v543 = vrot.slane %v516, 1
          %v544 = vsel %vm407, %v541, %v543
          %v545 = vrot.slane %v517, 1
          %v546 = vsel %vm407, %v543, %v545
          %547 = vrot.lane.b32.xlu0 %v542, 48
          %v548 = vpop.permute.xlu0 %547
          %549 = vrot.lane.b32.xlu0 %v544, 48
          %v550 = vpop.permute.xlu0 %549
          %551 = vrot.lane.b32.xlu0 %v546, 48
          %v552 = vpop.permute.xlu0 %551
          %553 = vrot.lane.b32.xlu0 %v545, 48
          %v554 = vpop.permute.xlu0 %553
          %vm559 = vcmask 458112
          %560 = vst.msk [vmem:[#allocation2] sm:$0xff] %vm559, %v548
          %561 = vst.msk [vmem:[#allocation2 + $0x10] sm:$0xff] %vm559, %v550
          %562 = vst.msk [vmem:[#allocation2 + $0x20] sm:$0xff] %vm559, %v552
          %vm563 = vcmask 454016
          %564 = vst.msk [vmem:[#allocation2 + $0x30] sm:$0xf] %vm563, %v554
          %v565 = vrot.slane %v514, 2
          %v566 = vrot.slane %v515, 2
          %v567 = vsel %vm433, %v565, %v566
          %v568 = vrot.slane %v516, 2
          %v569 = vsel %vm433, %v566, %v568
          %v570 = vrot.slane %v517, 2
          %v571 = vsel %vm433, %v568, %v570
          %572 = vrot.lane.b32.xlu0 %v567, 56
          %v573 = vpop.permute.xlu0 %572
          %574 = vrot.lane.b32.xlu0 %v569, 56
          %v575 = vpop.permute.xlu0 %574
          %576 = vrot.lane.b32.xlu0 %v571, 56
          %v577 = vpop.permute.xlu0 %576
          %578 = vrot.lane.b32.xlu0 %v570, 56
          %v579 = vpop.permute.xlu0 %578
          %vm584 = vcmask 523712
          %585 = vst.msk [vmem:[#allocation2] sm:$0xff] %vm584, %v573
          %586 = vst.msk [vmem:[#allocation2 + $0x10] sm:$0xff] %vm584, %v575
          %587 = vst.msk [vmem:[#allocation2 + $0x20] sm:$0xff] %vm584, %v577
          %vm588 = vcmask 519616
          %589 = vst.msk [vmem:[#allocation2 + $0x30] sm:$0xf] %vm588, %v579
          %v590 = vrot.slane %v514, 3
          %v591 = vrot.slane %v515, 3
          %v592 = vsel %vm459, %v590, %v591
          %v593 = vrot.slane %v516, 3
          %v594 = vsel %vm459, %v591, %v593
          %v595 = vrot.slane %v517, 3
          %v596 = vsel %vm459, %v593, %v595
          %597 = vrot.lane.b32.xlu0 %v592, 64
          %v598 = vpop.permute.xlu0 %597
          %599 = vrot.lane.b32.xlu0 %v594, 64
          %v600 = vpop.permute.xlu0 %599
          %601 = vrot.lane.b32.xlu0 %v596, 64
          %v602 = vpop.permute.xlu0 %601
          %603 = vrot.lane.b32.xlu0 %v595, 64
          %v604 = vpop.permute.xlu0 %603
          %vm609 = vcmask 589312
          %610 = vst.msk [vmem:[#allocation2] sm:$0xff] %vm609, %v598
          %611 = vst.msk [vmem:[#allocation2 + $0x10] sm:$0xff] %vm609, %v600
          %612 = vst.msk [vmem:[#allocation2 + $0x20] sm:$0xff] %vm609, %v602
          %vm613 = vcmask 585216
          %614 = vst.msk [vmem:[#allocation2 + $0x30] sm:$0xf] %vm613, %v604
          %v615 = vrot.slane %v514, 4
          %v616 = vrot.slane %v515, 4
          %v617 = vsel %vm485, %v615, %v616
          %v618 = vrot.slane %v516, 4
          %v619 = vsel %vm485, %v616, %v618
          %v620 = vrot.slane %v517, 4
          %v621 = vsel %vm485, %v618, %v620
          %622 = vrot.lane.b32.xlu0 %v617, 72
          %v623 = vpop.permute.xlu0 %622
          %624 = vrot.lane.b32.xlu0 %v619, 72
          %v625 = vpop.permute.xlu0 %624
          %626 = vrot.lane.b32.xlu0 %v621, 72
          %v627 = vpop.permute.xlu0 %626
          %628 = vrot.lane.b32.xlu0 %v620, 72
          %v629 = vpop.permute.xlu0 %628
          %vm634 = vcmask 654912
          %635 = vst.msk [vmem:[#allocation2] sm:$0xff] %vm634, %v623
          %636 = vst.msk [vmem:[#allocation2 + $0x10] sm:$0xff] %vm634, %v625
          %637 = vst.msk [vmem:[#allocation2 + $0x20] sm:$0xff] %vm634, %v627
          %vm638 = vcmask 650816
          %639 = vst.msk [vmem:[#allocation2 + $0x30] sm:$0xf] %vm638, %v629
          %s640 = sadd.s32 %s390, 2
          %s641 = smul.u32 %s640, 32
          %s642 = scalar_lea.vmem %s383, %s641
          %v643 = vld [vmem:[%s642] sm:$0xff]
          %v644 = vld [vmem:[%s642 + $0x8] sm:$0xff]
          %v645 = vld [vmem:[%s642 + $0x10] sm:$0xff]
          %v646 = vld [vmem:[%s642 + $0x18] sm:$0xff]
          %651 = vrot.lane.b32.xlu0 %v643, 80
          %v652 = vpop.permute.xlu0 %651
          %653 = vrot.lane.b32.xlu0 %v644, 80
          %v654 = vpop.permute.xlu0 %653
          %655 = vrot.lane.b32.xlu0 %v645, 80
          %v656 = vpop.permute.xlu0 %655
          %657 = vrot.lane.b32.xlu0 %v646, 80
          %v658 = vpop.permute.xlu0 %657
          %vm663 = vcmask 720512
          %664 = vst.msk [vmem:[#allocation2] sm:$0xff] %vm663, %v652
          %665 = vst.msk [vmem:[#allocation2 + $0x10] sm:$0xff] %vm663, %v654
          %666 = vst.msk [vmem:[#allocation2 + $0x20] sm:$0xff] %vm663, %v656
          %vm667 = vcmask 716416
          %668 = vst.msk [vmem:[#allocation2 + $0x30] sm:$0xf] %vm667, %v658
          %v669 = vrot.slane %v643, 1
          %v670 = vrot.slane %v644, 1
          %v671 = vsel %vm407, %v669, %v670
          %v672 = vrot.slane %v645, 1
          %v673 = vsel %vm407, %v670, %v672
          %v674 = vrot.slane %v646, 1
          %v675 = vsel %vm407, %v672, %v674
          %676 = vrot.lane.b32.xlu0 %v671, 88
          %v677 = vpop.permute.xlu0 %676
          %678 = vrot.lane.b32.xlu0 %v673, 88
          %v679 = vpop.permute.xlu0 %678
          %680 = vrot.lane.b32.xlu0 %v675, 88
          %v681 = vpop.permute.xlu0 %680
          %682 = vrot.lane.b32.xlu0 %v674, 88
          %v683 = vpop.permute.xlu0 %682
          %vm688 = vcmask 786112
          %689 = vst.msk [vmem:[#allocation2] sm:$0xff] %vm688, %v677
          %690 = vst.msk [vmem:[#allocation2 + $0x10] sm:$0xff] %vm688, %v679
          %691 = vst.msk [vmem:[#allocation2 + $0x20] sm:$0xff] %vm688, %v681
          %vm692 = vcmask 782016
          %693 = vst.msk [vmem:[#allocation2 + $0x30] sm:$0xf] %vm692, %v683
          %v694 = vrot.slane %v643, 2
          %v695 = vrot.slane %v644, 2
          %v696 = vsel %vm433, %v694, %v695
          %v697 = vrot.slane %v645, 2
          %v698 = vsel %vm433, %v695, %v697
          %v699 = vrot.slane %v646, 2
          %v700 = vsel %vm433, %v697, %v699
          %701 = vrot.lane.b32.xlu0 %v696, 96
          %v702 = vpop.permute.xlu0 %701
          %703 = vrot.lane.b32.xlu0 %v698, 96
          %v704 = vpop.permute.xlu0 %703
          %705 = vrot.lane.b32.xlu0 %v700, 96
          %v706 = vpop.permute.xlu0 %705
          %707 = vrot.lane.b32.xlu0 %v699, 96
          %v708 = vpop.permute.xlu0 %707
          %vm713 = vcmask 851712
          %714 = vst.msk [vmem:[#allocation2] sm:$0xff] %vm713, %v702
          %715 = vst.msk [vmem:[#allocation2 + $0x10] sm:$0xff] %vm713, %v704
          %716 = vst.msk [vmem:[#allocation2 + $0x20] sm:$0xff] %vm713, %v706
          %vm717 = vcmask 847616
          %718 = vst.msk [vmem:[#allocation2 + $0x30] sm:$0xf] %vm717, %v708
          %v719 = vrot.slane %v643, 3
          %v720 = vrot.slane %v644, 3
          %v721 = vsel %vm459, %v719, %v720
          %v722 = vrot.slane %v645, 3
          %v723 = vsel %vm459, %v720, %v722
          %v724 = vrot.slane %v646, 3
          %v725 = vsel %vm459, %v722, %v724
          %726 = vrot.lane.b32.xlu0 %v721, 104
          %v727 = vpop.permute.xlu0 %726
          %728 = vrot.lane.b32.xlu0 %v723, 104
          %v729 = vpop.permute.xlu0 %728
          %730 = vrot.lane.b32.xlu0 %v725, 104
          %v731 = vpop.permute.xlu0 %730
          %732 = vrot.lane.b32.xlu0 %v724, 104
          %v733 = vpop.permute.xlu0 %732
          %vm738 = vcmask 917312
          %739 = vst.msk [vmem:[#allocation2] sm:$0xff] %vm738, %v727
          %740 = vst.msk [vmem:[#allocation2 + $0x10] sm:$0xff] %vm738, %v729
          %741 = vst.msk [vmem:[#allocation2 + $0x20] sm:$0xff] %vm738, %v731
          %vm742 = vcmask 913216
          %743 = vst.msk [vmem:[#allocation2 + $0x30] sm:$0xf] %vm742, %v733
          %v744 = vrot.slane %v643, 4
          %v745 = vrot.slane %v644, 4
          %v746 = vsel %vm485, %v744, %v745
          %v747 = vrot.slane %v645, 4
          %v748 = vsel %vm485, %v745, %v747
          %v749 = vrot.slane %v646, 4
          %v750 = vsel %vm485, %v747, %v749
          %751 = vrot.lane.b32.xlu0 %v746, 112
          %v752 = vpop.permute.xlu0 %751
          %753 = vrot.lane.b32.xlu0 %v748, 112
          %v754 = vpop.permute.xlu0 %753
          %755 = vrot.lane.b32.xlu0 %v750, 112
          %v756 = vpop.permute.xlu0 %755
          %757 = vrot.lane.b32.xlu0 %v749, 112
          %v758 = vpop.permute.xlu0 %757
          %vm763 = vcmask 982912
          %764 = vst.msk [vmem:[#allocation2] sm:$0xff] %vm763, %v752
          %765 = vst.msk [vmem:[#allocation2 + $0x10] sm:$0xff] %vm763, %v754
          %766 = vst.msk [vmem:[#allocation2 + $0x20] sm:$0xff] %vm763, %v756
          %vm767 = vcmask 978816
          %768 = vst.msk [vmem:[#allocation2 + $0x30] sm:$0xf] %vm767, %v758
          %s769 = sadd.s32 %s390, 3
          %s770 = smul.u32 %s769, 32
          %s771 = scalar_lea.vmem %s383, %s770
          %v772 = vld [vmem:[%s771] sm:$0xff]
          %v773 = vld [vmem:[%s771 + $0x8] sm:$0xff]
          %v774 = vld [vmem:[%s771 + $0x10] sm:$0xff]
          %v775 = vld [vmem:[%s771 + $0x18] sm:$0xff]
          %780 = vrot.lane.b32.xlu0 %v772, 120
          %v781 = vpop.permute.xlu0 %780
          %782 = vrot.lane.b32.xlu0 %v773, 120
          %v783 = vpop.permute.xlu0 %782
          %784 = vrot.lane.b32.xlu0 %v774, 120
          %v785 = vpop.permute.xlu0 %784
          %786 = vrot.lane.b32.xlu0 %v775, 120
          %v787 = vpop.permute.xlu0 %786
          %vm792 = vcmask 1048512
          %793 = vst.msk [vmem:[#allocation2] sm:$0xff] %vm792, %v781
          %794 = vst.msk [vmem:[#allocation2 + $0x10] sm:$0xff] %vm792, %v783
          %795 = vst.msk [vmem:[#allocation2 + $0x20] sm:$0xff] %vm792, %v785
          %vm796 = vcmask 1044416
          %797 = vst.msk [vmem:[#allocation2 + $0x30] sm:$0xf] %vm796, %v787
          %v798 = vrot.slane %v772, 1
          %v799 = vrot.slane %v773, 1
          %v800 = vsel %vm407, %v798, %v799
          %v801 = vrot.slane %v774, 1
          %v802 = vsel %vm407, %v799, %v801
          %v803 = vrot.slane %v775, 1
          %v804 = vsel %vm407, %v801, %v803
          %809 = vst.msk [vmem:[#allocation2 + $0x8] sm:$0xff] %vm397, %v800
          %810 = vst.msk [vmem:[#allocation2 + $0x18] sm:$0xff] %vm397, %v802
          %811 = vst.msk [vmem:[#allocation2 + $0x28] sm:$0xff] %vm397, %v804
          %812 = vst.msk [vmem:[#allocation2 + $0x38] sm:$0xf] %vm401, %v803
          %v813 = vrot.slane %v772, 2
          %v814 = vrot.slane %v773, 2
          %v815 = vsel %vm433, %v813, %v814
          %v816 = vrot.slane %v774, 2
          %v817 = vsel %vm433, %v814, %v816
          %v818 = vrot.slane %v775, 2
          %v819 = vsel %vm433, %v816, %v818
          %820 = vrot.lane.b32.xlu0 %v815, 8
          %v821 = vpop.permute.xlu0 %820
          %822 = vrot.lane.b32.xlu0 %v817, 8
          %v823 = vpop.permute.xlu0 %822
          %824 = vrot.lane.b32.xlu0 %v819, 8
          %v825 = vpop.permute.xlu0 %824
          %826 = vrot.lane.b32.xlu0 %v818, 8
          %v827 = vpop.permute.xlu0 %826
          %832 = vst.msk [vmem:[#allocation2 + $0x8] sm:$0xff] %vm427, %v821
          %833 = vst.msk [vmem:[#allocation2 + $0x18] sm:$0xff] %vm427, %v823
          %834 = vst.msk [vmem:[#allocation2 + $0x28] sm:$0xff] %vm427, %v825
          %835 = vst.msk [vmem:[#allocation2 + $0x38] sm:$0xf] %vm431, %v827
          %v836 = vrot.slane %v772, 3
          %v837 = vrot.slane %v773, 3
          %v838 = vsel %vm459, %v836, %v837
          %v839 = vrot.slane %v774, 3
          %v840 = vsel %vm459, %v837, %v839
          %v841 = vrot.slane %v775, 3
          %v842 = vsel %vm459, %v839, %v841
          %843 = vrot.lane.b32.xlu0 %v838, 16
          %v844 = vpop.permute.xlu0 %843
          %845 = vrot.lane.b32.xlu0 %v840, 16
          %v846 = vpop.permute.xlu0 %845
          %847 = vrot.lane.b32.xlu0 %v842, 16
          %v848 = vpop.permute.xlu0 %847
          %849 = vrot.lane.b32.xlu0 %v841, 16
          %v850 = vpop.permute.xlu0 %849
          %855 = vst.msk [vmem:[#allocation2 + $0x8] sm:$0xff] %vm453, %v844
          %856 = vst.msk [vmem:[#allocation2 + $0x18] sm:$0xff] %vm453, %v846
          %857 = vst.msk [vmem:[#allocation2 + $0x28] sm:$0xff] %vm453, %v848
          %858 = vst.msk [vmem:[#allocation2 + $0x38] sm:$0xf] %vm457, %v850
          %v859 = vrot.slane %v772, 4
          %v860 = vrot.slane %v773, 4
          %v861 = vsel %vm485, %v859, %v860
          %v862 = vrot.slane %v774, 4
          %v863 = vsel %vm485, %v860, %v862
          %v864 = vrot.slane %v775, 4
          %v865 = vsel %vm485, %v862, %v864
          %866 = vrot.lane.b32.xlu0 %v861, 24
          %v867 = vpop.permute.xlu0 %866
          %868 = vrot.lane.b32.xlu0 %v863, 24
          %v869 = vpop.permute.xlu0 %868
          %870 = vrot.lane.b32.xlu0 %v865, 24
          %v871 = vpop.permute.xlu0 %870
          %872 = vrot.lane.b32.xlu0 %v864, 24
          %v873 = vpop.permute.xlu0 %872
          %878 = vst.msk [vmem:[#allocation2 + $0x8] sm:$0xff] %vm479, %v867
          %879 = vst.msk [vmem:[#allocation2 + $0x18] sm:$0xff] %vm479, %v869
          %880 = vst.msk [vmem:[#allocation2 + $0x28] sm:$0xff] %vm479, %v871
          %881 = vst.msk [vmem:[#allocation2 + $0x38] sm:$0xf] %vm483, %v873
          %s882 = sadd.s32 %s390, 4
          %s883 = smul.u32 %s882, 32
          %s884 = scalar_lea.vmem %s383, %s883
          %v885 = vld [vmem:[%s884] sm:$0xff]
          %v886 = vld [vmem:[%s884 + $0x8] sm:$0xff]
          %v887 = vld [vmem:[%s884 + $0x10] sm:$0xff]
          %v888 = vld [vmem:[%s884 + $0x18] sm:$0xff]
          %893 = vrot.lane.b32.xlu0 %v885, 32
          %v894 = vpop.permute.xlu0 %893
          %895 = vrot.lane.b32.xlu0 %v886, 32
          %v896 = vpop.permute.xlu0 %895
          %897 = vrot.lane.b32.xlu0 %v887, 32
          %v898 = vpop.permute.xlu0 %897
          %899 = vrot.lane.b32.xlu0 %v888, 32
          %v900 = vpop.permute.xlu0 %899
          %905 = vst.msk [vmem:[#allocation2 + $0x8] sm:$0xff] %vm505, %v894
          %906 = vst.msk [vmem:[#allocation2 + $0x18] sm:$0xff] %vm505, %v896
          %907 = vst.msk [vmem:[#allocation2 + $0x28] sm:$0xff] %vm505, %v898
          %908 = vst.msk [vmem:[#allocation2 + $0x38] sm:$0xf] %vm509, %v900
          %v909 = vrot.slane %v885, 1
          %v910 = vrot.slane %v886, 1
          %v911 = vsel %vm407, %v909, %v910
          %v912 = vrot.slane %v887, 1
          %v913 = vsel %vm407, %v910, %v912
          %v914 = vrot.slane %v888, 1
          %v915 = vsel %vm407, %v912, %v914
          %916 = vrot.lane.b32.xlu0 %v911, 40
          %v917 = vpop.permute.xlu0 %916
          %918 = vrot.lane.b32.xlu0 %v913, 40
          %v919 = vpop.permute.xlu0 %918
          %920 = vrot.lane.b32.xlu0 %v915, 40
          %v921 = vpop.permute.xlu0 %920
          %922 = vrot.lane.b32.xlu0 %v914, 40
          %v923 = vpop.permute.xlu0 %922
          %928 = vst.msk [vmem:[#allocation2 + $0x8] sm:$0xff] %vm534, %v917
          %929 = vst.msk [vmem:[#allocation2 + $0x18] sm:$0xff] %vm534, %v919
          %930 = vst.msk [vmem:[#allocation2 + $0x28] sm:$0xff] %vm534, %v921
          %931 = vst.msk [vmem:[#allocation2 + $0x38] sm:$0xf] %vm538, %v923
          %v932 = vrot.slane %v885, 2
          %v933 = vrot.slane %v886, 2
          %v934 = vsel %vm433, %v932, %v933
          %v935 = vrot.slane %v887, 2
          %v936 = vsel %vm433, %v933, %v935
          %v937 = vrot.slane %v888, 2
          %v938 = vsel %vm433, %v935, %v937
          %939 = vrot.lane.b32.xlu0 %v934, 48
          %v940 = vpop.permute.xlu0 %939
          %941 = vrot.lane.b32.xlu0 %v936, 48
          %v942 = vpop.permute.xlu0 %941
          %943 = vrot.lane.b32.xlu0 %v938, 48
          %v944 = vpop.permute.xlu0 %943
          %945 = vrot.lane.b32.xlu0 %v937, 48
          %v946 = vpop.permute.xlu0 %945
          %951 = vst.msk [vmem:[#allocation2 + $0x8] sm:$0xff] %vm559, %v940
          %952 = vst.msk [vmem:[#allocation2 + $0x18] sm:$0xff] %vm559, %v942
          %953 = vst.msk [vmem:[#allocation2 + $0x28] sm:$0xff] %vm559, %v944
          %954 = vst.msk [vmem:[#allocation2 + $0x38] sm:$0xf] %vm563, %v946
          %v955 = vrot.slane %v885, 3
          %v956 = vrot.slane %v886, 3
          %v957 = vsel %vm459, %v955, %v956
          %v958 = vrot.slane %v887, 3
          %v959 = vsel %vm459, %v956, %v958
          %v960 = vrot.slane %v888, 3
          %v961 = vsel %vm459, %v958, %v960
          %962 = vrot.lane.b32.xlu0 %v957, 56
          %v963 = vpop.permute.xlu0 %962
          %964 = vrot.lane.b32.xlu0 %v959, 56
          %v965 = vpop.permute.xlu0 %964
          %966 = vrot.lane.b32.xlu0 %v961, 56
          %v967 = vpop.permute.xlu0 %966
          %968 = vrot.lane.b32.xlu0 %v960, 56
          %v969 = vpop.permute.xlu0 %968
          %974 = vst.msk [vmem:[#allocation2 + $0x8] sm:$0xff] %vm584, %v963
          %975 = vst.msk [vmem:[#allocation2 + $0x18] sm:$0xff] %vm584, %v965
          %976 = vst.msk [vmem:[#allocation2 + $0x28] sm:$0xff] %vm584, %v967
          %977 = vst.msk [vmem:[#allocation2 + $0x38] sm:$0xf] %vm588, %v969
          %v978 = vrot.slane %v885, 4
          %v979 = vrot.slane %v886, 4
          %v980 = vsel %vm485, %v978, %v979
          %v981 = vrot.slane %v887, 4
          %v982 = vsel %vm485, %v979, %v981
          %v983 = vrot.slane %v888, 4
          %v984 = vsel %vm485, %v981, %v983
          %985 = vrot.lane.b32.xlu0 %v980, 64
          %v986 = vpop.permute.xlu0 %985
          %987 = vrot.lane.b32.xlu0 %v982, 64
          %v988 = vpop.permute.xlu0 %987
          %989 = vrot.lane.b32.xlu0 %v984, 64
          %v990 = vpop.permute.xlu0 %989
          %991 = vrot.lane.b32.xlu0 %v983, 64
          %v992 = vpop.permute.xlu0 %991
          %997 = vst.msk [vmem:[#allocation2 + $0x8] sm:$0xff] %vm609, %v986
          %998 = vst.msk [vmem:[#allocation2 + $0x18] sm:$0xff] %vm609, %v988
          %999 = vst.msk [vmem:[#allocation2 + $0x28] sm:$0xff] %vm609, %v990
          %1000 = vst.msk [vmem:[#allocation2 + $0x38] sm:$0xf] %vm613, %v992
          %v1001 = vld [vmem:[#allocation2] sm:$0xff]
          %v1002 = vld [vmem:[#allocation2 + $0x8] sm:$0xff]
          %v1003 = vld [vmem:[#allocation2 + $0x10] sm:$0xff]
          %v1004 = vld [vmem:[#allocation2 + $0x18] sm:$0xff]
          %v1005 = vld [vmem:[#allocation2 + $0x20] sm:$0xff]
          %v1006 = vld [vmem:[#allocation2 + $0x28] sm:$0xff]
          %v1007 = vld [vmem:[#allocation2 + $0x30] sm:$0xf]
          %v1008 = vld [vmem:[#allocation2 + $0x38] sm:$0xf]
          %v1009 = vld [vmem:[%s1] sm:$0xff]
          %v1010 = vld [vmem:[%s1 + $0x8] sm:$0xff]
          %v1011 = vld [vmem:[%s1 + $0x10] sm:$0xff]
          %v1012 = vld [vmem:[%s1 + $0x18] sm:$0xff]
          %v1013 = vld [vmem:[%s1 + $0x20] sm:$0xff]
          %v1014 = vld [vmem:[%s1 + $0x28] sm:$0xff]
          %v1015 = vld [vmem:[%s1 + $0x30] sm:$0xff]
          %v1016 = vld [vmem:[%s1 + $0x38] sm:$0xff]
          %v1017 = vld [vmem:[%s1 + $0x40] sm:$0xff]
          %v1018 = vld [vmem:[%s1 + $0x48] sm:$0xff]
          %v1019 = vld [vmem:[%s1 + $0x50] sm:$0xff]
          %v1020 = vld [vmem:[%s1 + $0x58] sm:$0xff]
          %v1021 = vld [vmem:[%s1 + $0x60] sm:$0xff]
          %v1022 = vld [vmem:[%s1 + $0x68] sm:$0xff]
          %v1023 = vld [vmem:[%s1 + $0x70] sm:$0xff]
          %v1024 = vld [vmem:[%s1 + $0x78] sm:$0xff]
          %v1025 = vld [vmem:[%s1 + $0x80] sm:$0xff]
          %v1026 = vld [vmem:[%s1 + $0x88] sm:$0xff]
          %v1027 = vld [vmem:[%s1 + $0x90] sm:$0xff]
          %v1028 = vld [vmem:[%s1 + $0x98] sm:$0xff]
          %v1029 = vld [vmem:[%s1 + $0xa0] sm:$0xff]
          %v1030 = vld [vmem:[%s1 + $0xa8] sm:$0xff]
          %v1031 = vld [vmem:[%s1 + $0xb0] sm:$0xff]
          %v1032 = vld [vmem:[%s1 + $0xb8] sm:$0xff]
          %v1033 = vld [vmem:[%s1 + $0xc0] sm:$0xff]
          %v1034 = vld [vmem:[%s2] sm:$0x1]
          %v1036 = vperm.slane %v1034, 0
          %vm1038 = vcmask 588800
          %v1040 = vsel %vm1038, %v1002, 0
          %v1043 = vsel %vm1038, %v1004, 0
          %v1046 = vsel %vm1038, %v1006, 0
          %v1049 = vsel %vm1038, %v1008, 0
          %1051 = vmatpush.msra.mxu0 %v1024
          %1052 = vmatpush.msra.mxu0 %v1023
          %1053 = vmatpush.msra.mxu0 %v1022
          %1054 = vmatpush.msra.mxu0 %v1021
          %1055 = vmatpush.msra.mxu0 %v1020
          %1056 = vmatpush.msra.mxu0 %v1019
          %1057 = vmatpush.msra.mxu0 %v1018
          %1058 = vmatpush.msra.mxu0 %v1017
          %1059 = vmatpush.msra.mxu0 %v1016
          %1060 = vmatpush.msra.mxu0 %v1015
          %1061 = vmatpush.msra.mxu0 %v1014
          %1062 = vmatpush.msra.mxu0 %v1013
          %1063 = vmatpush.msra.mxu0 %v1012
          %1064 = vmatpush.msra.mxu0 %v1011
          %1065 = vmatpush.msra.mxu0 %v1010
          %1066 = vmatpush.msra.mxu0 %v1009
          %1067 = vmatmul.f32.gmra.mxu0 %v1001
          %v1068 = vpop.f32.mrf.mxu0
          %v1069 = vadd.f32 %v1036, %v1068
          %1070 = vmatmul.f32.gmra.mxu0 %v1003
          %v1071 = vpop.f32.mrf.mxu0
          %v1072 = vadd.f32 %v1036, %v1071
          %1073 = vmatmul.f32.gmra.mxu0 %v1005
          %v1074 = vpop.f32.mrf.mxu0
          %v1075 = vadd.f32 %v1036, %v1074
          %1076 = vmatmul.f32.gmra.mxu0 %v1007
          %v1077 = vpop.f32.mrf.mxu0
          %v1078 = vadd.f32 %v1036, %v1077
          %1079 = vdwg.mxu0
          %1080 = vmatpush.msra.mxu0 0.0
          %1081 = vmatpush.msra.mxu0 0.0
          %1082 = vmatpush.msra.mxu0 0.0
          %1083 = vmatpush.msra.mxu0 0.0
          %1084 = vmatpush.msra.mxu0 0.0
          %1085 = vmatpush.msra.mxu0 0.0
          %1086 = vmatpush.msra.mxu0 0.0
          %1087 = vmatpush.msra.mxu0 %v1033
          %1088 = vmatpush.msra.mxu0 %v1032
          %1089 = vmatpush.msra.mxu0 %v1031
          %1090 = vmatpush.msra.mxu0 %v1030
          %1091 = vmatpush.msra.mxu0 %v1029
          %1092 = vmatpush.msra.mxu0 %v1028
          %1093 = vmatpush.msra.mxu0 %v1027
          %1094 = vmatpush.msra.mxu0 %v1026
          %1095 = vmatpush.msra.mxu0 %v1025
          %1096 = vmatmul.f32.gmra.mxu0 %v1040
          %v1097 = vpop.f32.mrf.mxu0
          %v1098 = vadd.f32 %v1069, %v1097
          %1099 = vmatmul.f32.gmra.mxu0 %v1043
          %v1100 = vpop.f32.mrf.mxu0
          %v1101 = vadd.f32 %v1072, %v1100
          %1102 = vmatmul.f32.gmra.mxu0 %v1046
          %v1103 = vpop.f32.mrf.mxu0
          %v1104 = vadd.f32 %v1075, %v1103
          %1105 = vmatmul.f32.gmra.mxu0 %v1049
          %v1106 = vpop.f32.mrf.mxu0
          %v1107 = vadd.f32 %v1078, %v1106
          %1108 = vdwg.mxu0
          %v1109 = vmax.f32 %v1098, 0.0
          %v1110 = vmax.f32 %v1101, 0.0
          %v1111 = vmax.f32 %v1104, 0.0
          %v1112 = vmax.f32 %v1107, 0.0
          %v1113 = vld [vmem:[%s513] sm:$0xff]
          %v1114 = vld [vmem:[%s513 + $0x8] sm:$0xff]
          %v1115 = vld [vmem:[%s513 + $0x10] sm:$0xff]
          %v1116 = vld [vmem:[%s513 + $0x18] sm:$0xff]
          %1117 = vst.msk [vmem:[#allocation2] sm:$0xff] %vm397, %v1113
          %1118 = vst.msk [vmem:[#allocation2 + $0x10] sm:$0xff] %vm397, %v1114
          %1119 = vst.msk [vmem:[#allocation2 + $0x20] sm:$0xff] %vm397, %v1115
          %1120 = vst.msk [vmem:[#allocation2 + $0x30] sm:$0xf] %vm401, %v1116
          %v1125 = vrot.slane %v1113, 1
          %v1126 = vrot.slane %v1114, 1
          %v1127 = vsel %vm407, %v1125, %v1126
          %v1128 = vrot.slane %v1115, 1
          %v1129 = vsel %vm407, %v1126, %v1128
          %v1130 = vrot.slane %v1116, 1
          %v1131 = vsel %vm407, %v1128, %v1130
          %1132 = vrot.lane.b32.xlu0 %v1127, 8
          %v1133 = vpop.permute.xlu0 %1132
          %1134 = vrot.lane.b32.xlu0 %v1129, 8
          %v1135 = vpop.permute.xlu0 %1134
          %1136 = vrot.lane.b32.xlu0 %v1131, 8
          %v1137 = vpop.permute.xlu0 %1136
          %1138 = vrot.lane.b32.xlu0 %v1130, 8
          %v1139 = vpop.permute.xlu0 %1138
          %1144 = vst.msk [vmem:[#allocation2] sm:$0xff] %vm427, %v1133
          %1145 = vst.msk [vmem:[#allocation2 + $0x10] sm:$0xff] %vm427, %v1135
          %1146 = vst.msk [vmem:[#allocation2 + $0x20] sm:$0xff] %vm427, %v1137
          %1147 = vst.msk [vmem:[#allocation2 + $0x30] sm:$0xf] %vm431, %v1139
          %v1148 = vrot.slane %v1113, 2
          %v1149 = vrot.slane %v1114, 2
          %v1150 = vsel %vm433, %v1148, %v1149
          %v1151 = vrot.slane %v1115, 2
          %v1152 = vsel %vm433, %v1149, %v1151
          %v1153 = vrot.slane %v1116, 2
          %v1154 = vsel %vm433, %v1151, %v1153
          %1155 = vrot.lane.b32.xlu0 %v1150, 16
          %v1156 = vpop.permute.xlu0 %1155
          %1157 = vrot.lane.b32.xlu0 %v1152, 16
          %v1158 = vpop.permute.xlu0 %1157
          %1159 = vrot.lane.b32.xlu0 %v1154, 16
          %v1160 = vpop.permute.xlu0 %1159
          %1161 = vrot.lane.b32.xlu0 %v1153, 16
          %v1162 = vpop.permute.xlu0 %1161
          %1167 = vst.msk [vmem:[#allocation2] sm:$0xff] %vm453, %v1156
          %1168 = vst.msk [vmem:[#allocation2 + $0x10] sm:$0xff] %vm453, %v1158
          %1169 = vst.msk [vmem:[#allocation2 + $0x20] sm:$0xff] %vm453, %v1160
          %1170 = vst.msk [vmem:[#allocation2 + $0x30] sm:$0xf] %vm457, %v1162
          %v1171 = vrot.slane %v1113, 3
          %v1172 = vrot.slane %v1114, 3
          %v1173 = vsel %vm459, %v1171, %v1172
          %v1174 = vrot.slane %v1115, 3
          %v1175 = vsel %vm459, %v1172, %v1174
          %v1176 = vrot.slane %v1116, 3
          %v1177 = vsel %vm459, %v1174, %v1176
          %1178 = vrot.lane.b32.xlu0 %v1173, 24
          %v1179 = vpop.permute.xlu0 %1178
          %1180 = vrot.lane.b32.xlu0 %v1175, 24
          %v1181 = vpop.permute.xlu0 %1180
          %1182 = vrot.lane.b32.xlu0 %v1177, 24
          %v1183 = vpop.permute.xlu0 %1182
          %1184 = vrot.lane.b32.xlu0 %v1176, 24
          %v1185 = vpop.permute.xlu0 %1184
          %1190 = vst.msk [vmem:[#allocation2] sm:$0xff] %vm479, %v1179
          %1191 = vst.msk [vmem:[#allocation2 + $0x10] sm:$0xff] %vm479, %v1181
          %1192 = vst.msk [vmem:[#allocation2 + $0x20] sm:$0xff] %vm479, %v1183
          %1193 = vst.msk [vmem:[#allocation2 + $0x30] sm:$0xf] %vm483, %v1185
          %v1194 = vrot.slane %v1113, 4
          %v1195 = vrot.slane %v1114, 4
          %v1196 = vsel %vm485, %v1194, %v1195
          %v1197 = vrot.slane %v1115, 4
          %v1198 = vsel %vm485, %v1195, %v1197
          %v1199 = vrot.slane %v1116, 4
          %v1200 = vsel %vm485, %v1197, %v1199
          %1201 = vrot.lane.b32.xlu0 %v1196, 32
          %v1202 = vpop.permute.xlu0 %1201
          %1203 = vrot.lane.b32.xlu0 %v1198, 32
          %v1204 = vpop.permute.xlu0 %1203
          %1205 = vrot.lane.b32.xlu0 %v1200, 32
          %v1206 = vpop.permute.xlu0 %1205
          %1207 = vrot.lane.b32.xlu0 %v1199, 32
          %v1208 = vpop.permute.xlu0 %1207
          %1213 = vst.msk [vmem:[#allocation2] sm:$0xff] %vm505, %v1202
          %1214 = vst.msk [vmem:[#allocation2 + $0x10] sm:$0xff] %vm505, %v1204
          %1215 = vst.msk [vmem:[#allocation2 + $0x20] sm:$0xff] %vm505, %v1206
          %1216 = vst.msk [vmem:[#allocation2 + $0x30] sm:$0xf] %vm509, %v1208
          %v1217 = vld [vmem:[%s642] sm:$0xff]
          %v1218 = vld [vmem:[%s642 + $0x8] sm:$0xff]
          %v1219 = vld [vmem:[%s642 + $0x10] sm:$0xff]
          %v1220 = vld [vmem:[%s642 + $0x18] sm:$0xff]
          %1225 = vrot.lane.b32.xlu0 %v1217, 40
          %v1226 = vpop.permute.xlu0 %1225
          %1227 = vrot.lane.b32.xlu0 %v1218, 40
          %v1228 = vpop.permute.xlu0 %1227
          %1229 = vrot.lane.b32.xlu0 %v1219, 40
          %v1230 = vpop.permute.xlu0 %1229
          %1231 = vrot.lane.b32.xlu0 %v1220, 40
          %v1232 = vpop.permute.xlu0 %1231
          %1237 = vst.msk [vmem:[#allocation2] sm:$0xff] %vm534, %v1226
          %1238 = vst.msk [vmem:[#allocation2 + $0x10] sm:$0xff] %vm534, %v1228
          %1239 = vst.msk [vmem:[#allocation2 + $0x20] sm:$0xff] %vm534, %v1230
          %1240 = vst.msk [vmem:[#allocation2 + $0x30] sm:$0xf] %vm538, %v1232
          %v1241 = vrot.slane %v1217, 1
          %v1242 = vrot.slane %v1218, 1
          %v1243 = vsel %vm407, %v1241, %v1242
          %v1244 = vrot.slane %v1219, 1
          %v1245 = vsel %vm407, %v1242, %v1244
          %v1246 = vrot.slane %v1220, 1
          %v1247 = vsel %vm407, %v1244, %v1246
          %1248 = vrot.lane.b32.xlu0 %v1243, 48
          %v1249 = vpop.permute.xlu0 %1248
          %1250 = vrot.lane.b32.xlu0 %v1245, 48
          %v1251 = vpop.permute.xlu0 %1250
          %1252 = vrot.lane.b32.xlu0 %v1247, 48
          %v1253 = vpop.permute.xlu0 %1252
          %1254 = vrot.lane.b32.xlu0 %v1246, 48
          %v1255 = vpop.permute.xlu0 %1254
          %1260 = vst.msk [vmem:[#allocation2] sm:$0xff] %vm559, %v1249
          %1261 = vst.msk [vmem:[#allocation2 + $0x10] sm:$0xff] %vm559, %v1251
          %1262 = vst.msk [vmem:[#allocation2 + $0x20] sm:$0xff] %vm559, %v1253
          %1263 = vst.msk [vmem:[#allocation2 + $0x30] sm:$0xf] %vm563, %v1255
          %v1264 = vrot.slane %v1217, 2
          %v1265 = vrot.slane %v1218, 2
          %v1266 = vsel %vm433, %v1264, %v1265
          %v1267 = vrot.slane %v1219, 2
          %v1268 = vsel %vm433, %v1265, %v1267
          %v1269 = vrot.slane %v1220, 2
          %v1270 = vsel %vm433, %v1267, %v1269
          %1271 = vrot.lane.b32.xlu0 %v1266, 56
          %v1272 = vpop.permute.xlu0 %1271
          %1273 = vrot.lane.b32.xlu0 %v1268, 56
          %v1274 = vpop.permute.xlu0 %1273
          %1275 = vrot.lane.b32.xlu0 %v1270, 56
          %v1276 = vpop.permute.xlu0 %1275
          %1277 = vrot.lane.b32.xlu0 %v1269, 56
          %v1278 = vpop.permute.xlu0 %1277
          %1283 = vst.msk [vmem:[#allocation2] sm:$0xff] %vm584, %v1272
          %1284 = vst.msk [vmem:[#allocation2 + $0x10] sm:$0xff] %vm584, %v1274
          %1285 = vst.msk [vmem:[#allocation2 + $0x20] sm:$0xff] %vm584, %v1276
          %1286 = vst.msk [vmem:[#allocation2 + $0x30] sm:$0xf] %vm588, %v1278
          %v1287 = vrot.slane %v1217, 3
          %v1288 = vrot.slane %v1218, 3
          %v1289 = vsel %vm459, %v1287, %v1288
          %v1290 = vrot.slane %v1219, 3
          %v1291 = vsel %vm459, %v1288, %v1290
          %v1292 = vrot.slane %v1220, 3
          %v1293 = vsel %vm459, %v1290, %v1292
          %1294 = vrot.lane.b32.xlu0 %v1289, 64
          %v1295 = vpop.permute.xlu0 %1294
          %1296 = vrot.lane.b32.xlu0 %v1291, 64
          %v1297 = vpop.permute.xlu0 %1296
          %1298 = vrot.lane.b32.xlu0 %v1293, 64
          %v1299 = vpop.permute.xlu0 %1298
          %1300 = vrot.lane.b32.xlu0 %v1292, 64
          %v1301 = vpop.permute.xlu0 %1300
          %1306 = vst.msk [vmem:[#allocation2] sm:$0xff] %vm609, %v1295
          %1307 = vst.msk [vmem:[#allocation2 + $0x10] sm:$0xff] %vm609, %v1297
          %1308 = vst.msk [vmem:[#allocation2 + $0x20] sm:$0xff] %vm609, %v1299
          %1309 = vst.msk [vmem:[#allocation2 + $0x30] sm:$0xf] %vm613, %v1301
          %v1310 = vrot.slane %v1217, 4
          %v1311 = vrot.slane %v1218, 4
          %v1312 = vsel %vm485, %v1310, %v1311
          %v1313 = vrot.slane %v1219, 4
          %v1314 = vsel %vm485, %v1311, %v1313
          %v1315 = vrot.slane %v1220, 4
          %v1316 = vsel %vm485, %v1313, %v1315
          %1317 = vrot.lane.b32.xlu0 %v1312, 72
          %v1318 = vpop.permute.xlu0 %1317
          %1319 = vrot.lane.b32.xlu0 %v1314, 72
          %v1320 = vpop.permute.xlu0 %1319
          %1321 = vrot.lane.b32.xlu0 %v1316, 72
          %v1322 = vpop.permute.xlu0 %1321
          %1323 = vrot.lane.b32.xlu0 %v1315, 72
          %v1324 = vpop.permute.xlu0 %1323
          %1329 = vst.msk [vmem:[#allocation2] sm:$0xff] %vm634, %v1318
          %1330 = vst.msk [vmem:[#allocation2 + $0x10] sm:$0xff] %vm634, %v1320
          %1331 = vst.msk [vmem:[#allocation2 + $0x20] sm:$0xff] %vm634, %v1322
          %1332 = vst.msk [vmem:[#allocation2 + $0x30] sm:$0xf] %vm638, %v1324
          %v1333 = vld [vmem:[%s771] sm:$0xff]
          %v1334 = vld [vmem:[%s771 + $0x8] sm:$0xff]
          %v1335 = vld [vmem:[%s771 + $0x10] sm:$0xff]
          %v1336 = vld [vmem:[%s771 + $0x18] sm:$0xff]
          %1341 = vrot.lane.b32.xlu0 %v1333, 80
          %v1342 = vpop.permute.xlu0 %1341
          %1343 = vrot.lane.b32.xlu0 %v1334, 80
          %v1344 = vpop.permute.xlu0 %1343
          %1345 = vrot.lane.b32.xlu0 %v1335, 80
          %v1346 = vpop.permute.xlu0 %1345
          %1347 = vrot.lane.b32.xlu0 %v1336, 80
          %v1348 = vpop.permute.xlu0 %1347
          %1353 = vst.msk [vmem:[#allocation2] sm:$0xff] %vm663, %v1342
          %1354 = vst.msk [vmem:[#allocation2 + $0x10] sm:$0xff] %vm663, %v1344
          %1355 = vst.msk [vmem:[#allocation2 + $0x20] sm:$0xff] %vm663, %v1346
          %1356 = vst.msk [vmem:[#allocation2 + $0x30] sm:$0xf] %vm667, %v1348
          %v1357 = vrot.slane %v1333, 1
          %v1358 = vrot.slane %v1334, 1
          %v1359 = vsel %vm407, %v1357, %v1358
          %v1360 = vrot.slane %v1335, 1
          %v1361 = vsel %vm407, %v1358, %v1360
          %v1362 = vrot.slane %v1336, 1
          %v1363 = vsel %vm407, %v1360, %v1362
          %1364 = vrot.lane.b32.xlu0 %v1359, 88
          %v1365 = vpop.permute.xlu0 %1364
          %1366 = vrot.lane.b32.xlu0 %v1361, 88
          %v1367 = vpop.permute.xlu0 %1366
          %1368 = vrot.lane.b32.xlu0 %v1363, 88
          %v1369 = vpop.permute.xlu0 %1368
          %1370 = vrot.lane.b32.xlu0 %v1362, 88
          %v1371 = vpop.permute.xlu0 %1370
          %1376 = vst.msk [vmem:[#allocation2] sm:$0xff] %vm688, %v1365
          %1377 = vst.msk [vmem:[#allocation2 + $0x10] sm:$0xff] %vm688, %v1367
          %1378 = vst.msk [vmem:[#allocation2 + $0x20] sm:$0xff] %vm688, %v1369
          %1379 = vst.msk [vmem:[#allocation2 + $0x30] sm:$0xf] %vm692, %v1371
          %v1380 = vrot.slane %v1333, 2
          %v1381 = vrot.slane %v1334, 2
          %v1382 = vsel %vm433, %v1380, %v1381
          %v1383 = vrot.slane %v1335, 2
          %v1384 = vsel %vm433, %v1381, %v1383
          %v1385 = vrot.slane %v1336, 2
          %v1386 = vsel %vm433, %v1383, %v1385
          %1387 = vrot.lane.b32.xlu0 %v1382, 96
          %v1388 = vpop.permute.xlu0 %1387
          %1389 = vrot.lane.b32.xlu0 %v1384, 96
          %v1390 = vpop.permute.xlu0 %1389
          %1391 = vrot.lane.b32.xlu0 %v1386, 96
          %v1392 = vpop.permute.xlu0 %1391
          %1393 = vrot.lane.b32.xlu0 %v1385, 96
          %v1394 = vpop.permute.xlu0 %1393
          %1399 = vst.msk [vmem:[#allocation2] sm:$0xff] %vm713, %v1388
          %1400 = vst.msk [vmem:[#allocation2 + $0x10] sm:$0xff] %vm713, %v1390
          %1401 = vst.msk [vmem:[#allocation2 + $0x20] sm:$0xff] %vm713, %v1392
          %1402 = vst.msk [vmem:[#allocation2 + $0x30] sm:$0xf] %vm717, %v1394
          %v1403 = vrot.slane %v1333, 3
          %v1404 = vrot.slane %v1334, 3
          %v1405 = vsel %vm459, %v1403, %v1404
          %v1406 = vrot.slane %v1335, 3
          %v1407 = vsel %vm459, %v1404, %v1406
          %v1408 = vrot.slane %v1336, 3
          %v1409 = vsel %vm459, %v1406, %v1408
          %1410 = vrot.lane.b32.xlu0 %v1405, 104
          %v1411 = vpop.permute.xlu0 %1410
          %1412 = vrot.lane.b32.xlu0 %v1407, 104
          %v1413 = vpop.permute.xlu0 %1412
          %1414 = vrot.lane.b32.xlu0 %v1409, 104
          %v1415 = vpop.permute.xlu0 %1414
          %1416 = vrot.lane.b32.xlu0 %v1408, 104
          %v1417 = vpop.permute.xlu0 %1416
          %1422 = vst.msk [vmem:[#allocation2] sm:$0xff] %vm738, %v1411
          %1423 = vst.msk [vmem:[#allocation2 + $0x10] sm:$0xff] %vm738, %v1413
          %1424 = vst.msk [vmem:[#allocation2 + $0x20] sm:$0xff] %vm738, %v1415
          %1425 = vst.msk [vmem:[#allocation2 + $0x30] sm:$0xf] %vm742, %v1417
          %v1426 = vrot.slane %v1333, 4
          %v1427 = vrot.slane %v1334, 4
          %v1428 = vsel %vm485, %v1426, %v1427
          %v1429 = vrot.slane %v1335, 4
          %v1430 = vsel %vm485, %v1427, %v1429
          %v1431 = vrot.slane %v1336, 4
          %v1432 = vsel %vm485, %v1429, %v1431
          %1433 = vrot.lane.b32.xlu0 %v1428, 112
          %v1434 = vpop.permute.xlu0 %1433
          %1435 = vrot.lane.b32.xlu0 %v1430, 112
          %v1436 = vpop.permute.xlu0 %1435
          %1437 = vrot.lane.b32.xlu0 %v1432, 112
          %v1438 = vpop.permute.xlu0 %1437
          %1439 = vrot.lane.b32.xlu0 %v1431, 112
          %v1440 = vpop.permute.xlu0 %1439
          %1445 = vst.msk [vmem:[#allocation2] sm:$0xff] %vm763, %v1434
          %1446 = vst.msk [vmem:[#allocation2 + $0x10] sm:$0xff] %vm763, %v1436
          %1447 = vst.msk [vmem:[#allocation2 + $0x20] sm:$0xff] %vm763, %v1438
          %1448 = vst.msk [vmem:[#allocation2 + $0x30] sm:$0xf] %vm767, %v1440
          %v1449 = vld [vmem:[%s884] sm:$0xff]
          %v1450 = vld [vmem:[%s884 + $0x8] sm:$0xff]
          %v1451 = vld [vmem:[%s884 + $0x10] sm:$0xff]
          %v1452 = vld [vmem:[%s884 + $0x18] sm:$0xff]
          %1457 = vrot.lane.b32.xlu0 %v1449, 120
          %v1458 = vpop.permute.xlu0 %1457
          %1459 = vrot.lane.b32.xlu0 %v1450, 120
          %v1460 = vpop.permute.xlu0 %1459
          %1461 = vrot.lane.b32.xlu0 %v1451, 120
          %v1462 = vpop.permute.xlu0 %1461
          %1463 = vrot.lane.b32.xlu0 %v1452, 120
          %v1464 = vpop.permute.xlu0 %1463
          %1469 = vst.msk [vmem:[#allocation2] sm:$0xff] %vm792, %v1458
          %1470 = vst.msk [vmem:[#allocation2 + $0x10] sm:$0xff] %vm792, %v1460
          %1471 = vst.msk [vmem:[#allocation2 + $0x20] sm:$0xff] %vm792, %v1462
          %1472 = vst.msk [vmem:[#allocation2 + $0x30] sm:$0xf] %vm796, %v1464
          %v1473 = vrot.slane %v1449, 1
          %v1474 = vrot.slane %v1450, 1
          %v1475 = vsel %vm407, %v1473, %v1474
          %v1476 = vrot.slane %v1451, 1
          %v1477 = vsel %vm407, %v1474, %v1476
          %v1478 = vrot.slane %v1452, 1
          %v1479 = vsel %vm407, %v1476, %v1478
          %1484 = vst.msk [vmem:[#allocation2 + $0x8] sm:$0xff] %vm397, %v1475
          %1485 = vst.msk [vmem:[#allocation2 + $0x18] sm:$0xff] %vm397, %v1477
          %1486 = vst.msk [vmem:[#allocation2 + $0x28] sm:$0xff] %vm397, %v1479
          %1487 = vst.msk [vmem:[#allocation2 + $0x38] sm:$0xf] %vm401, %v1478
          %v1488 = vrot.slane %v1449, 2
          %v1489 = vrot.slane %v1450, 2
          %v1490 = vsel %vm433, %v1488, %v1489
          %v1491 = vrot.slane %v1451, 2
          %v1492 = vsel %vm433, %v1489, %v1491
          %v1493 = vrot.slane %v1452, 2
          %v1494 = vsel %vm433, %v1491, %v1493
          %1495 = vrot.lane.b32.xlu0 %v1490, 8
          %v1496 = vpop.permute.xlu0 %1495
          %1497 = vrot.lane.b32.xlu0 %v1492, 8
          %v1498 = vpop.permute.xlu0 %1497
          %1499 = vrot.lane.b32.xlu0 %v1494, 8
          %v1500 = vpop.permute.xlu0 %1499
          %1501 = vrot.lane.b32.xlu0 %v1493, 8
          %v1502 = vpop.permute.xlu0 %1501
          %1507 = vst.msk [vmem:[#allocation2 + $0x8] sm:$0xff] %vm427, %v1496
          %1508 = vst.msk [vmem:[#allocation2 + $0x18] sm:$0xff] %vm427, %v1498
          %1509 = vst.msk [vmem:[#allocation2 + $0x28] sm:$0xff] %vm427, %v1500
          %1510 = vst.msk [vmem:[#allocation2 + $0x38] sm:$0xf] %vm431, %v1502
          %v1511 = vrot.slane %v1449, 3
          %v1512 = vrot.slane %v1450, 3
          %v1513 = vsel %vm459, %v1511, %v1512
          %v1514 = vrot.slane %v1451, 3
          %v1515 = vsel %vm459, %v1512, %v1514
          %v1516 = vrot.slane %v1452, 3
          %v1517 = vsel %vm459, %v1514, %v1516
          %1518 = vrot.lane.b32.xlu0 %v1513, 16
          %v1519 = vpop.permute.xlu0 %1518
          %1520 = vrot.lane.b32.xlu0 %v1515, 16
          %v1521 = vpop.permute.xlu0 %1520
          %1522 = vrot.lane.b32.xlu0 %v1517, 16
          %v1523 = vpop.permute.xlu0 %1522
          %1524 = vrot.lane.b32.xlu0 %v1516, 16
          %v1525 = vpop.permute.xlu0 %1524
          %1530 = vst.msk [vmem:[#allocation2 + $0x8] sm:$0xff] %vm453, %v1519
          %1531 = vst.msk [vmem:[#allocation2 + $0x18] sm:$0xff] %vm453, %v1521
          %1532 = vst.msk [vmem:[#allocation2 + $0x28] sm:$0xff] %vm453, %v1523
          %1533 = vst.msk [vmem:[#allocation2 + $0x38] sm:$0xf] %vm457, %v1525
          %v1534 = vrot.slane %v1449, 4
          %v1535 = vrot.slane %v1450, 4
          %v1536 = vsel %vm485, %v1534, %v1535
          %v1537 = vrot.slane %v1451, 4
          %v1538 = vsel %vm485, %v1535, %v1537
          %v1539 = vrot.slane %v1452, 4
          %v1540 = vsel %vm485, %v1537, %v1539
          %1541 = vrot.lane.b32.xlu0 %v1536, 24
          %v1542 = vpop.permute.xlu0 %1541
          %1543 = vrot.lane.b32.xlu0 %v1538, 24
          %v1544 = vpop.permute.xlu0 %1543
          %1545 = vrot.lane.b32.xlu0 %v1540, 24
          %v1546 = vpop.permute.xlu0 %1545
          %1547 = vrot.lane.b32.xlu0 %v1539, 24
          %v1548 = vpop.permute.xlu0 %1547
          %1553 = vst.msk [vmem:[#allocation2 + $0x8] sm:$0xff] %vm479, %v1542
          %1554 = vst.msk [vmem:[#allocation2 + $0x18] sm:$0xff] %vm479, %v1544
          %1555 = vst.msk [vmem:[#allocation2 + $0x28] sm:$0xff] %vm479, %v1546
          %1556 = vst.msk [vmem:[#allocation2 + $0x38] sm:$0xf] %vm483, %v1548
          %s1557 = sadd.s32 %s390, 5
          %s1558 = smul.u32 %s1557, 32
          %s1559 = scalar_lea.vmem %s383, %s1558
          %v1560 = vld [vmem:[%s1559] sm:$0xff]
          %v1561 = vld [vmem:[%s1559 + $0x8] sm:$0xff]
          %v1562 = vld [vmem:[%s1559 + $0x10] sm:$0xff]
          %v1563 = vld [vmem:[%s1559 + $0x18] sm:$0xff]
          %1568 = vrot.lane.b32.xlu0 %v1560, 32
          %v1569 = vpop.permute.xlu0 %1568
          %1570 = vrot.lane.b32.xlu0 %v1561, 32
          %v1571 = vpop.permute.xlu0 %1570
          %1572 = vrot.lane.b32.xlu0 %v1562, 32
          %v1573 = vpop.permute.xlu0 %1572
          %1574 = vrot.lane.b32.xlu0 %v1563, 32
          %v1575 = vpop.permute.xlu0 %1574
          %1580 = vst.msk [vmem:[#allocation2 + $0x8] sm:$0xff] %vm505, %v1569
          %1581 = vst.msk [vmem:[#allocation2 + $0x18] sm:$0xff] %vm505, %v1571
          %1582 = vst.msk [vmem:[#allocation2 + $0x28] sm:$0xff] %vm505, %v1573
          %1583 = vst.msk [vmem:[#allocation2 + $0x38] sm:$0xf] %vm509, %v1575
          %v1584 = vrot.slane %v1560, 1
          %v1585 = vrot.slane %v1561, 1
          %v1586 = vsel %vm407, %v1584, %v1585
          %v1587 = vrot.slane %v1562, 1
          %v1588 = vsel %vm407, %v1585, %v1587
          %v1589 = vrot.slane %v1563, 1
          %v1590 = vsel %vm407, %v1587, %v1589
          %1591 = vrot.lane.b32.xlu0 %v1586, 40
          %v1592 = vpop.permute.xlu0 %1591
          %1593 = vrot.lane.b32.xlu0 %v1588, 40
          %v1594 = vpop.permute.xlu0 %1593
          %1595 = vrot.lane.b32.xlu0 %v1590, 40
          %v1596 = vpop.permute.xlu0 %1595
          %1597 = vrot.lane.b32.xlu0 %v1589, 40
          %v1598 = vpop.permute.xlu0 %1597
          %1603 = vst.msk [vmem:[#allocation2 + $0x8] sm:$0xff] %vm534, %v1592
          %1604 = vst.msk [vmem:[#allocation2 + $0x18] sm:$0xff] %vm534, %v1594
          %1605 = vst.msk [vmem:[#allocation2 + $0x28] sm:$0xff] %vm534, %v1596
          %1606 = vst.msk [vmem:[#allocation2 + $0x38] sm:$0xf] %vm538, %v1598
          %v1607 = vrot.slane %v1560, 2
          %v1608 = vrot.slane %v1561, 2
          %v1609 = vsel %vm433, %v1607, %v1608
          %v1610 = vrot.slane %v1562, 2
          %v1611 = vsel %vm433, %v1608, %v1610
          %v1612 = vrot.slane %v1563, 2
          %v1613 = vsel %vm433, %v1610, %v1612
          %1614 = vrot.lane.b32.xlu0 %v1609, 48
          %v1615 = vpop.permute.xlu0 %1614
          %1616 = vrot.lane.b32.xlu0 %v1611, 48
          %v1617 = vpop.permute.xlu0 %1616
          %1618 = vrot.lane.b32.xlu0 %v1613, 48
          %v1619 = vpop.permute.xlu0 %1618
          %1620 = vrot.lane.b32.xlu0 %v1612, 48
          %v1621 = vpop.permute.xlu0 %1620
          %1626 = vst.msk [vmem:[#allocation2 + $0x8] sm:$0xff] %vm559, %v1615
          %1627 = vst.msk [vmem:[#allocation2 + $0x18] sm:$0xff] %vm559, %v1617
          %1628 = vst.msk [vmem:[#allocation2 + $0x28] sm:$0xff] %vm559, %v1619
          %1629 = vst.msk [vmem:[#allocation2 + $0x38] sm:$0xf] %vm563, %v1621
          %v1630 = vrot.slane %v1560, 3
          %v1631 = vrot.slane %v1561, 3
          %v1632 = vsel %vm459, %v1630, %v1631
          %v1633 = vrot.slane %v1562, 3
          %v1634 = vsel %vm459, %v1631, %v1633
          %v1635 = vrot.slane %v1563, 3
          %v1636 = vsel %vm459, %v1633, %v1635
          %1637 = vrot.lane.b32.xlu0 %v1632, 56
          %v1638 = vpop.permute.xlu0 %1637
          %1639 = vrot.lane.b32.xlu0 %v1634, 56
          %v1640 = vpop.permute.xlu0 %1639
          %1641 = vrot.lane.b32.xlu0 %v1636, 56
          %v1642 = vpop.permute.xlu0 %1641
          %1643 = vrot.lane.b32.xlu0 %v1635, 56
          %v1644 = vpop.permute.xlu0 %1643
          %1649 = vst.msk [vmem:[#allocation2 + $0x8] sm:$0xff] %vm584, %v1638
          %1650 = vst.msk [vmem:[#allocation2 + $0x18] sm:$0xff] %vm584, %v1640
          %1651 = vst.msk [vmem:[#allocation2 + $0x28] sm:$0xff] %vm584, %v1642
          %1652 = vst.msk [vmem:[#allocation2 + $0x38] sm:$0xf] %vm588, %v1644
          %v1653 = vrot.slane %v1560, 4
          %v1654 = vrot.slane %v1561, 4
          %v1655 = vsel %vm485, %v1653, %v1654
          %v1656 = vrot.slane %v1562, 4
          %v1657 = vsel %vm485, %v1654, %v1656
          %v1658 = vrot.slane %v1563, 4
          %v1659 = vsel %vm485, %v1656, %v1658
          %1660 = vrot.lane.b32.xlu0 %v1655, 64
          %v1661 = vpop.permute.xlu0 %1660
          %1662 = vrot.lane.b32.xlu0 %v1657, 64
          %v1663 = vpop.permute.xlu0 %1662
          %1664 = vrot.lane.b32.xlu0 %v1659, 64
          %v1665 = vpop.permute.xlu0 %1664
          %1666 = vrot.lane.b32.xlu0 %v1658, 64
          %v1667 = vpop.permute.xlu0 %1666
          %1672 = vst.msk [vmem:[#allocation2 + $0x8] sm:$0xff] %vm609, %v1661
          %1673 = vst.msk [vmem:[#allocation2 + $0x18] sm:$0xff] %vm609, %v1663
          %1674 = vst.msk [vmem:[#allocation2 + $0x28] sm:$0xff] %vm609, %v1665
          %1675 = vst.msk [vmem:[#allocation2 + $0x38] sm:$0xf] %vm613, %v1667
          %v1676 = vld [vmem:[#allocation2] sm:$0xff]
          %v1677 = vld [vmem:[#allocation2 + $0x8] sm:$0xff]
          %v1678 = vld [vmem:[#allocation2 + $0x10] sm:$0xff]
          %v1679 = vld [vmem:[#allocation2 + $0x18] sm:$0xff]
          %v1680 = vld [vmem:[#allocation2 + $0x20] sm:$0xff]
          %v1681 = vld [vmem:[#allocation2 + $0x28] sm:$0xff]
          %v1682 = vld [vmem:[#allocation2 + $0x30] sm:$0xf]
          %v1683 = vld [vmem:[#allocation2 + $0x38] sm:$0xf]
          %v1684 = vld [vmem:[%s1] sm:$0xff]
          %v1685 = vld [vmem:[%s1 + $0x8] sm:$0xff]
          %v1686 = vld [vmem:[%s1 + $0x10] sm:$0xff]
          %v1687 = vld [vmem:[%s1 + $0x18] sm:$0xff]
          %v1688 = vld [vmem:[%s1 + $0x20] sm:$0xff]
          %v1689 = vld [vmem:[%s1 + $0x28] sm:$0xff]
          %v1690 = vld [vmem:[%s1 + $0x30] sm:$0xff]
          %v1691 = vld [vmem:[%s1 + $0x38] sm:$0xff]
          %v1692 = vld [vmem:[%s1 + $0x40] sm:$0xff]
          %v1693 = vld [vmem:[%s1 + $0x48] sm:$0xff]
          %v1694 = vld [vmem:[%s1 + $0x50] sm:$0xff]
          %v1695 = vld [vmem:[%s1 + $0x58] sm:$0xff]
          %v1696 = vld [vmem:[%s1 + $0x60] sm:$0xff]
          %v1697 = vld [vmem:[%s1 + $0x68] sm:$0xff]
          %v1698 = vld [vmem:[%s1 + $0x70] sm:$0xff]
          %v1699 = vld [vmem:[%s1 + $0x78] sm:$0xff]
          %v1700 = vld [vmem:[%s1 + $0x80] sm:$0xff]
          %v1701 = vld [vmem:[%s1 + $0x88] sm:$0xff]
          %v1702 = vld [vmem:[%s1 + $0x90] sm:$0xff]
          %v1703 = vld [vmem:[%s1 + $0x98] sm:$0xff]
          %v1704 = vld [vmem:[%s1 + $0xa0] sm:$0xff]
          %v1705 = vld [vmem:[%s1 + $0xa8] sm:$0xff]
          %v1706 = vld [vmem:[%s1 + $0xb0] sm:$0xff]
          %v1707 = vld [vmem:[%s1 + $0xb8] sm:$0xff]
          %v1708 = vld [vmem:[%s1 + $0xc0] sm:$0xff]
          %v1709 = vld [vmem:[%s2] sm:$0x1]
          %v1711 = vperm.slane %v1709, 0
          %v1714 = vsel %vm1038, %v1677, 0
          %v1717 = vsel %vm1038, %v1679, 0
          %v1720 = vsel %vm1038, %v1681, 0
          %v1723 = vsel %vm1038, %v1683, 0
          %1725 = vmatpush.msra.mxu0 %v1699
          %1726 = vmatpush.msra.mxu0 %v1698
          %1727 = vmatpush.msra.mxu0 %v1697
          %1728 = vmatpush.msra.mxu0 %v1696
          %1729 = vmatpush.msra.mxu0 %v1695
          %1730 = vmatpush.msra.mxu0 %v1694
          %1731 = vmatpush.msra.mxu0 %v1693
          %1732 = vmatpush.msra.mxu0 %v1692
          %1733 = vmatpush.msra.mxu0 %v1691
          %1734 = vmatpush.msra.mxu0 %v1690
          %1735 = vmatpush.msra.mxu0 %v1689
          %1736 = vmatpush.msra.mxu0 %v1688
          %1737 = vmatpush.msra.mxu0 %v1687
          %1738 = vmatpush.msra.mxu0 %v1686
          %1739 = vmatpush.msra.mxu0 %v1685
          %1740 = vmatpush.msra.mxu0 %v1684
          %1741 = vmatmul.f32.gmra.mxu0 %v1676
          %v1742 = vpop.f32.mrf.mxu0
          %v1743 = vadd.f32 %v1711, %v1742
          %1744 = vmatmul.f32.gmra.mxu0 %v1678
          %v1745 = vpop.f32.mrf.mxu0
          %v1746 = vadd.f32 %v1711, %v1745
          %1747 = vmatmul.f32.gmra.mxu0 %v1680
          %v1748 = vpop.f32.mrf.mxu0
          %v1749 = vadd.f32 %v1711, %v1748
          %1750 = vmatmul.f32.gmra.mxu0 %v1682
          %v1751 = vpop.f32.mrf.mxu0
          %v1752 = vadd.f32 %v1711, %v1751
          %1753 = vdwg.mxu0
          %1754 = vmatpush.msra.mxu0 0.0
          %1755 = vmatpush.msra.mxu0 0.0
          %1756 = vmatpush.msra.mxu0 0.0
          %1757 = vmatpush.msra.mxu0 0.0
          %1758 = vmatpush.msra.mxu0 0.0
          %1759 = vmatpush.msra.mxu0 0.0
          %1760 = vmatpush.msra.mxu0 0.0
          %1761 = vmatpush.msra.mxu0 %v1708
          %1762 = vmatpush.msra.mxu0 %v1707
          %1763 = vmatpush.msra.mxu0 %v1706
          %1764 = vmatpush.msra.mxu0 %v1705
          %1765 = vmatpush.msra.mxu0 %v1704
          %1766 = vmatpush.msra.mxu0 %v1703
          %1767 = vmatpush.msra.mxu0 %v1702
          %1768 = vmatpush.msra.mxu0 %v1701
          %1769 = vmatpush.msra.mxu0 %v1700
          %1770 = vmatmul.f32.gmra.mxu0 %v1714
          %v1771 = vpop.f32.mrf.mxu0
          %v1772 = vadd.f32 %v1743, %v1771
          %1773 = vmatmul.f32.gmra.mxu0 %v1717
          %v1774 = vpop.f32.mrf.mxu0
          %v1775 = vadd.f32 %v1746, %v1774
          %1776 = vmatmul.f32.gmra.mxu0 %v1720
          %v1777 = vpop.f32.mrf.mxu0
          %v1778 = vadd.f32 %v1749, %v1777
          %1779 = vmatmul.f32.gmra.mxu0 %v1723
          %v1780 = vpop.f32.mrf.mxu0
          %v1781 = vadd.f32 %v1752, %v1780
          %1782 = vdwg.mxu0
          %v1783 = vmax.f32 %v1772, 0.0
          %v1784 = vmax.f32 %v1775, 0.0
          %v1785 = vmax.f32 %v1778, 0.0
          %v1786 = vmax.f32 %v1781, 0.0
          %v1787 = vmax.f32 %v1109, %v1783
          %v1788 = vmax.f32 %v1110, %v1784
          %v1789 = vmax.f32 %v1111, %v1785
          %v1790 = vmax.f32 %v1112, %v1786
          %v1792 = vrot.slane %v1787, 1
          %v1794 = vmax.f32 %v1787, %v1792
          %s1795 = smul.u32 %s385, 16
          %s1796 = scalar_lea.vmem [#allocation3], %s1795
          %vm1797 = vcmask 57344
          %1798 = vst.msk [vmem:[%s1796] sm:$0x1] %vm1797, %v1794
          %vm1799 = vcmask 59394
          %1800 = vst.msk [vmem:[%s1796 - $0x1] sm:$0x4] %vm1799, %v1794
          %vm1801 = vcmask 61444
          %1802 = vst.msk [vmem:[%s1796 - $0x2] sm:$0x10] %vm1801, %v1794
          %vm1803 = vcmask 63494
          %1804 = vst.msk [vmem:[%s1796 - $0x3] sm:$0x40] %vm1803, %v1794
          %v1806 = vrot.slane %v1788, 1
          %v1808 = vmax.f32 %v1788, %v1806
          %1809 = vst.msk [vmem:[%s1796 + $0x4] sm:$0x1] %vm1797, %v1808
          %1810 = vst.msk [vmem:[%s1796 + $0x3] sm:$0x4] %vm1799, %v1808
          %1811 = vst.msk [vmem:[%s1796 + $0x2] sm:$0x10] %vm1801, %v1808
          %1812 = vst.msk [vmem:[%s1796 + $0x1] sm:$0x40] %vm1803, %v1808
          %v1814 = vrot.slane %v1789, 1
          %v1816 = vmax.f32 %v1789, %v1814
          %1817 = vst.msk [vmem:[%s1796 + $0x8] sm:$0x1] %vm1797, %v1816
          %1818 = vst.msk [vmem:[%s1796 + $0x7] sm:$0x4] %vm1799, %v1816
          %1819 = vst.msk [vmem:[%s1796 + $0x6] sm:$0x10] %vm1801, %v1816
          %1820 = vst.msk [vmem:[%s1796 + $0x5] sm:$0x40] %vm1803, %v1816
          %v1822 = vrot.slane %v1790, 1
          %v1824 = vmax.f32 %v1790, %v1822
          %1825 = vst.msk [vmem:[%s1796 + $0xc] sm:$0x1] %vm1797, %v1824
          %1826 = vst.msk [vmem:[%s1796 + $0xb] sm:$0x4] %vm1799, %v1824
        $region69: #{net_forward.1} parent=63 // loop_footer
          %s389 = sadd.s32 1, %s385
        $region70: #{net_forward.1} parent=63 // loop_footer_branch
          %384 = sbr.rel target = $region66
        $region71: #{net_forward.1} parent=63 // loop_exit
          _
        loop: start=0, step=1, limit=5
        $region72: #{net_forward.1} parent=63 // loop_pre_header
          _
        $region73: #{net_forward.1} parent=63 // loop_header
          %s1828 = sphi 0, %s1832
          %p1829 = scmp.ge.s32.totalorder %s1828, 5
        $region74: #{net_forward.1} parent=63 // loop_header_branch
          %1831 = sbr.rel (%p1829) target = $region78
        $region75: #{net_forward.1} parent=63 // loop_body
          %s1833 = smul.u32 %s1828, 2
          %s1834 = smul.u32 %s1833, 16
          %s1835 = scalar_lea.vmem [#allocation3], %s1834
          %v1836 = vld [vmem:[%s1835] sm:$0xff]
          %v1837 = vld [vmem:[%s1835 + $0x8] sm:$0x3f]
          %vm1838 = vcmask 64512
          %1839 = vst.msk [vmem:[#allocation2] sm:$0xff] %vm1838, %v1836
          %vm1840 = vcmask 58368
          %1841 = vst.msk [vmem:[#allocation2 + $0x10] sm:$0x3] %vm1840, %v1837
          %vm1844 = vcmask 1046528
          %v1845 = vrot.slane %v1836, 1
          %v1846 = vrot.slane %v1837, 1
          %v1847 = vsel %vm1844, %v1845, %v1846
          %1848 = vrot.lane.b32.xlu0 %v1847, 8
          %v1849 = vpop.permute.xlu0 %1848
          %1850 = vrot.lane.b32.xlu0 %v1846, 8
          %v1851 = vpop.permute.xlu0 %1850
          %vm1854 = vcmask 130112
          %1855 = vst.msk [vmem:[#allocation2] sm:$0xff] %vm1854, %v1849
          %vm1856 = vcmask 123968
          %1857 = vst.msk [vmem:[#allocation2 + $0x10] sm:$0x3] %vm1856, %v1851
          %vm1858 = vcmask 1045504
          %v1859 = vrot.slane %v1836, 2
          %v1860 = vrot.slane %v1837, 2
          %v1861 = vsel %vm1858, %v1859, %v1860
          %1862 = vrot.lane.b32.xlu0 %v1861, 16
          %v1863 = vpop.permute.xlu0 %1862
          %1864 = vrot.lane.b32.xlu0 %v1860, 16
          %v1865 = vpop.permute.xlu0 %1864
          %vm1868 = vcmask 195712
          %1869 = vst.msk [vmem:[#allocation2] sm:$0xff] %vm1868, %v1863
          %vm1870 = vcmask 189568
          %1871 = vst.msk [vmem:[#allocation2 + $0x10] sm:$0x3] %vm1870, %v1865
          %vm1872 = vcmask 1044480
          %v1873 = vrot.slane %v1836, 3
          %v1874 = vrot.slane %v1837, 3
          %v1875 = vsel %vm1872, %v1873, %v1874
          %1876 = vrot.lane.b32.xlu0 %v1875, 24
          %v1877 = vpop.permute.xlu0 %1876
          %1878 = vrot.lane.b32.xlu0 %v1874, 24
          %v1879 = vpop.permute.xlu0 %1878
          %vm1882 = vcmask 261312
          %1883 = vst.msk [vmem:[#allocation2] sm:$0xff] %vm1882, %v1877
          %vm1884 = vcmask 255168
          %1885 = vst.msk [vmem:[#allocation2 + $0x10] sm:$0x3] %vm1884, %v1879
          %vm1886 = vcmask 1043456
          %v1887 = vrot.slane %v1836, 4
          %v1888 = vrot.slane %v1837, 4
          %v1889 = vsel %vm1886, %v1887, %v1888
          %1890 = vrot.lane.b32.xlu0 %v1889, 32
          %v1891 = vpop.permute.xlu0 %1890
          %1892 = vrot.lane.b32.xlu0 %v1888, 32
          %v1893 = vpop.permute.xlu0 %1892
          %vm1896 = vcmask 326912
          %1897 = vst.msk [vmem:[#allocation2] sm:$0xff] %vm1896, %v1891
          %vm1898 = vcmask 320768
          %1899 = vst.msk [vmem:[#allocation2 + $0x10] sm:$0x3] %vm1898, %v1893
          %s1900 = sadd.s32 %s1833, 1
          %s1901 = smul.u32 %s1900, 16
          %s1902 = scalar_lea.vmem [#allocation3], %s1901
          %v1903 = vld [vmem:[%s1902] sm:$0xff]
          %v1904 = vld [vmem:[%s1902 + $0x8] sm:$0x3f]
          %1907 = vrot.lane.b32.xlu0 %v1903, 40
          %v1908 = vpop.permute.xlu0 %1907
          %1909 = vrot.lane.b32.xlu0 %v1904, 40
          %v1910 = vpop.permute.xlu0 %1909
          %vm1913 = vcmask 392512
          %1914 = vst.msk [vmem:[#allocation2] sm:$0xff] %vm1913, %v1908
          %vm1915 = vcmask 386368
          %1916 = vst.msk [vmem:[#allocation2 + $0x10] sm:$0x3] %vm1915, %v1910
          %v1917 = vrot.slane %v1903, 1
          %v1918 = vrot.slane %v1904, 1
          %v1919 = vsel %vm1844, %v1917, %v1918
          %1920 = vrot.lane.b32.xlu0 %v1919, 48
          %v1921 = vpop.permute.xlu0 %1920
          %1922 = vrot.lane.b32.xlu0 %v1918, 48
          %v1923 = vpop.permute.xlu0 %1922
          %vm1926 = vcmask 458112
          %1927 = vst.msk [vmem:[#allocation2] sm:$0xff] %vm1926, %v1921
          %vm1928 = vcmask 451968
          %1929 = vst.msk [vmem:[#allocation2 + $0x10] sm:$0x3] %vm1928, %v1923
          %v1930 = vrot.slane %v1903, 2
          %v1931 = vrot.slane %v1904, 2
          %v1932 = vsel %vm1858, %v1930, %v1931
          %1933 = vrot.lane.b32.xlu0 %v1932, 56
          %v1934 = vpop.permute.xlu0 %1933
          %1935 = vrot.lane.b32.xlu0 %v1931, 56
          %v1936 = vpop.permute.xlu0 %1935
          %vm1939 = vcmask 523712
          %1940 = vst.msk [vmem:[#allocation2] sm:$0xff] %vm1939, %v1934
          %vm1941 = vcmask 517568
          %1942 = vst.msk [vmem:[#allocation2 + $0x10] sm:$0x3] %vm1941, %v1936
          %v1943 = vrot.slane %v1903, 3
          %v1944 = vrot.slane %v1904, 3
          %v1945 = vsel %vm1872, %v1943, %v1944
          %1946 = vrot.lane.b32.xlu0 %v1945, 64
          %v1947 = vpop.permute.xlu0 %1946
          %1948 = vrot.lane.b32.xlu0 %v1944, 64
          %v1949 = vpop.permute.xlu0 %1948
          %vm1952 = vcmask 589312
          %1953 = vst.msk [vmem:[#allocation2] sm:$0xff] %vm1952, %v1947
          %vm1954 = vcmask 583168
          %1955 = vst.msk [vmem:[#allocation2 + $0x10] sm:$0x3] %vm1954, %v1949
          %v1956 = vrot.slane %v1903, 4
          %v1957 = vrot.slane %v1904, 4
          %v1958 = vsel %vm1886, %v1956, %v1957
          %1959 = vrot.lane.b32.xlu0 %v1958, 72
          %v1960 = vpop.permute.xlu0 %1959
          %1961 = vrot.lane.b32.xlu0 %v1957, 72
          %v1962 = vpop.permute.xlu0 %1961
          %vm1965 = vcmask 654912
          %1966 = vst.msk [vmem:[#allocation2] sm:$0xff] %vm1965, %v1960
          %vm1967 = vcmask 648768
          %1968 = vst.msk [vmem:[#allocation2 + $0x10] sm:$0x3] %vm1967, %v1962
          %s1969 = sadd.s32 %s1833, 2
          %s1970 = smul.u32 %s1969, 16
          %s1971 = scalar_lea.vmem [#allocation3], %s1970
          %v1972 = vld [vmem:[%s1971] sm:$0xff]
          %v1973 = vld [vmem:[%s1971 + $0x8] sm:$0x3f]
          %1976 = vrot.lane.b32.xlu0 %v1972, 80
          %v1977 = vpop.permute.xlu0 %1976
          %1978 = vrot.lane.b32.xlu0 %v1973, 80
          %v1979 = vpop.permute.xlu0 %1978
          %vm1982 = vcmask 720512
          %1983 = vst.msk [vmem:[#allocation2] sm:$0xff] %vm1982, %v1977
          %vm1984 = vcmask 714368
          %1985 = vst.msk [vmem:[#allocation2 + $0x10] sm:$0x3] %vm1984, %v1979
          %v1986 = vrot.slane %v1972, 1
          %v1987 = vrot.slane %v1973, 1
          %v1988 = vsel %vm1844, %v1986, %v1987
          %1989 = vrot.lane.b32.xlu0 %v1988, 88
          %v1990 = vpop.permute.xlu0 %1989
          %1991 = vrot.lane.b32.xlu0 %v1987, 88
          %v1992 = vpop.permute.xlu0 %1991
          %vm1995 = vcmask 786112
          %1996 = vst.msk [vmem:[#allocation2] sm:$0xff] %vm1995, %v1990
          %vm1997 = vcmask 779968
          %1998 = vst.msk [vmem:[#allocation2 + $0x10] sm:$0x3] %vm1997, %v1992
          %v1999 = vrot.slane %v1972, 2
          %v2000 = vrot.slane %v1973, 2
          %v2001 = vsel %vm1858, %v1999, %v2000
          %2002 = vrot.lane.b32.xlu0 %v2001, 96
          %v2003 = vpop.permute.xlu0 %2002
          %2004 = vrot.lane.b32.xlu0 %v2000, 96
          %v2005 = vpop.permute.xlu0 %2004
          %vm2008 = vcmask 851712
          %2009 = vst.msk [vmem:[#allocation2] sm:$0xff] %vm2008, %v2003
          %vm2010 = vcmask 845568
          %2011 = vst.msk [vmem:[#allocation2 + $0x10] sm:$0x3] %vm2010, %v2005
          %v2012 = vrot.slane %v1972, 3
          %v2013 = vrot.slane %v1973, 3
          %v2014 = vsel %vm1872, %v2012, %v2013
          %2015 = vrot.lane.b32.xlu0 %v2014, 104
          %v2016 = vpop.permute.xlu0 %2015
          %2017 = vrot.lane.b32.xlu0 %v2013, 104
          %v2018 = vpop.permute.xlu0 %2017
          %vm2021 = vcmask 917312
          %2022 = vst.msk [vmem:[#allocation2] sm:$0xff] %vm2021, %v2016
          %vm2023 = vcmask 911168
          %2024 = vst.msk [vmem:[#allocation2 + $0x10] sm:$0x3] %vm2023, %v2018
          %v2025 = vrot.slane %v1972, 4
          %v2026 = vrot.slane %v1973, 4
          %v2027 = vsel %vm1886, %v2025, %v2026
          %2028 = vrot.lane.b32.xlu0 %v2027, 112
          %v2029 = vpop.permute.xlu0 %2028
          %2030 = vrot.lane.b32.xlu0 %v2026, 112
          %v2031 = vpop.permute.xlu0 %2030
          %vm2034 = vcmask 982912
          %2035 = vst.msk [vmem:[#allocation2] sm:$0xff] %vm2034, %v2029
          %vm2036 = vcmask 976768
          %2037 = vst.msk [vmem:[#allocation2 + $0x10] sm:$0x3] %vm2036, %v2031
          %s2038 = sadd.s32 %s1833, 3
          %s2039 = smul.u32 %s2038, 16
          %s2040 = scalar_lea.vmem [#allocation3], %s2039
          %v2041 = vld [vmem:[%s2040] sm:$0xff]
          %v2042 = vld [vmem:[%s2040 + $0x8] sm:$0x3f]
          %2045 = vrot.lane.b32.xlu0 %v2041, 120
          %v2046 = vpop.permute.xlu0 %2045
          %2047 = vrot.lane.b32.xlu0 %v2042, 120
          %v2048 = vpop.permute.xlu0 %2047
          %vm2051 = vcmask 1048512
          %2052 = vst.msk [vmem:[#allocation2] sm:$0xff] %vm2051, %v2046
          %vm2053 = vcmask 1042368
          %2054 = vst.msk [vmem:[#allocation2 + $0x10] sm:$0x3] %vm2053, %v2048
          %v2055 = vrot.slane %v2041, 1
          %v2056 = vrot.slane %v2042, 1
          %v2057 = vsel %vm1844, %v2055, %v2056
          %2060 = vst.msk [vmem:[#allocation2 + $0x8] sm:$0xff] %vm1838, %v2057
          %2061 = vst.msk [vmem:[#allocation2 + $0x18] sm:$0x3] %vm1840, %v2056
          %v2062 = vrot.slane %v2041, 2
          %v2063 = vrot.slane %v2042, 2
          %v2064 = vsel %vm1858, %v2062, %v2063
          %2065 = vrot.lane.b32.xlu0 %v2064, 8
          %v2066 = vpop.permute.xlu0 %2065
          %2067 = vrot.lane.b32.xlu0 %v2063, 8
          %v2068 = vpop.permute.xlu0 %2067
          %2071 = vst.msk [vmem:[#allocation2 + $0x8] sm:$0xff] %vm1854, %v2066
          %2072 = vst.msk [vmem:[#allocation2 + $0x18] sm:$0x3] %vm1856, %v2068
          %v2073 = vrot.slane %v2041, 3
          %v2074 = vrot.slane %v2042, 3
          %v2075 = vsel %vm1872, %v2073, %v2074
          %2076 = vrot.lane.b32.xlu0 %v2075, 16
          %v2077 = vpop.permute.xlu0 %2076
          %2078 = vrot.lane.b32.xlu0 %v2074, 16
          %v2079 = vpop.permute.xlu0 %2078
          %2082 = vst.msk [vmem:[#allocation2 + $0x8] sm:$0xff] %vm1868, %v2077
          %2083 = vst.msk [vmem:[#allocation2 + $0x18] sm:$0x3] %vm1870, %v2079
          %v2084 = vrot.slane %v2041, 4
          %v2085 = vrot.slane %v2042, 4
          %v2086 = vsel %vm1886, %v2084, %v2085
          %2087 = vrot.lane.b32.xlu0 %v2086, 24
          %v2088 = vpop.permute.xlu0 %2087
          %2089 = vrot.lane.b32.xlu0 %v2085, 24
          %v2090 = vpop.permute.xlu0 %2089
          %2093 = vst.msk [vmem:[#allocation2 + $0x8] sm:$0xff] %vm1882, %v2088
          %2094 = vst.msk [vmem:[#allocation2 + $0x18] sm:$0x3] %vm1884, %v2090
          %s2095 = sadd.s32 %s1833, 4
          %s2096 = smul.u32 %s2095, 16
          %s2097 = scalar_lea.vmem [#allocation3], %s2096
          %v2098 = vld [vmem:[%s2097] sm:$0xff]
          %v2099 = vld [vmem:[%s2097 + $0x8] sm:$0x3f]
          %2102 = vrot.lane.b32.xlu0 %v2098, 32
          %v2103 = vpop.permute.xlu0 %2102
          %2104 = vrot.lane.b32.xlu0 %v2099, 32
          %v2105 = vpop.permute.xlu0 %2104
          %2108 = vst.msk [vmem:[#allocation2 + $0x8] sm:$0xff] %vm1896, %v2103
          %2109 = vst.msk [vmem:[#allocation2 + $0x18] sm:$0x3] %vm1898, %v2105
          %v2110 = vrot.slane %v2098, 1
          %v2111 = vrot.slane %v2099, 1
          %v2112 = vsel %vm1844, %v2110, %v2111
          %2113 = vrot.lane.b32.xlu0 %v2112, 40
          %v2114 = vpop.permute.xlu0 %2113
          %2115 = vrot.lane.b32.xlu0 %v2111, 40
          %v2116 = vpop.permute.xlu0 %2115
          %2119 = vst.msk [vmem:[#allocation2 + $0x8] sm:$0xff] %vm1913, %v2114
          %2120 = vst.msk [vmem:[#allocation2 + $0x18] sm:$0x3] %vm1915, %v2116
          %v2121 = vrot.slane %v2098, 2
          %v2122 = vrot.slane %v2099, 2
          %v2123 = vsel %vm1858, %v2121, %v2122
          %2124 = vrot.lane.b32.xlu0 %v2123, 48
          %v2125 = vpop.permute.xlu0 %2124
          %2126 = vrot.lane.b32.xlu0 %v2122, 48
          %v2127 = vpop.permute.xlu0 %2126
          %2130 = vst.msk [vmem:[#allocation2 + $0x8] sm:$0xff] %vm1926, %v2125
          %2131 = vst.msk [vmem:[#allocation2 + $0x18] sm:$0x3] %vm1928, %v2127
          %v2132 = vrot.slane %v2098, 3
          %v2133 = vrot.slane %v2099, 3
          %v2134 = vsel %vm1872, %v2132, %v2133
          %2135 = vrot.lane.b32.xlu0 %v2134, 56
          %v2136 = vpop.permute.xlu0 %2135
          %2137 = vrot.lane.b32.xlu0 %v2133, 56
          %v2138 = vpop.permute.xlu0 %2137
          %2141 = vst.msk [vmem:[#allocation2 + $0x8] sm:$0xff] %vm1939, %v2136
          %2142 = vst.msk [vmem:[#allocation2 + $0x18] sm:$0x3] %vm1941, %v2138
          %v2143 = vrot.slane %v2098, 4
          %v2144 = vrot.slane %v2099, 4
          %v2145 = vsel %vm1886, %v2143, %v2144
          %2146 = vrot.lane.b32.xlu0 %v2145, 64
          %v2147 = vpop.permute.xlu0 %2146
          %2148 = vrot.lane.b32.xlu0 %v2144, 64
          %v2149 = vpop.permute.xlu0 %2148
          %2152 = vst.msk [vmem:[#allocation2 + $0x8] sm:$0xff] %vm1952, %v2147
          %2153 = vst.msk [vmem:[#allocation2 + $0x18] sm:$0x3] %vm1954, %v2149
          %v2154 = vld [vmem:[#allocation2] sm:$0xff]
          %v2155 = vld [vmem:[#allocation2 + $0x8] sm:$0xff]
          %v2156 = vld [vmem:[#allocation2 + $0x10] sm:$0x3]
          %v2157 = vld [vmem:[#allocation2 + $0x18] sm:$0x3]
          %v2158 = vld [vmem:[%s3] sm:$0xff]
          %v2159 = vld [vmem:[%s3 + $0x8] sm:$0xff]
          %v2160 = vld [vmem:[%s3 + $0x10] sm:$0xff]
          %v2161 = vld [vmem:[%s3 + $0x18] sm:$0xff]
          %v2162 = vld [vmem:[%s3 + $0x20] sm:$0xff]
          %v2163 = vld [vmem:[%s3 + $0x28] sm:$0xff]
          %v2164 = vld [vmem:[%s3 + $0x30] sm:$0xff]
          %v2165 = vld [vmem:[%s3 + $0x38] sm:$0xff]
          %v2166 = vld [vmem:[%s3 + $0x40] sm:$0xff]
          %v2167 = vld [vmem:[%s3 + $0x48] sm:$0xff]
          %v2168 = vld [vmem:[%s3 + $0x50] sm:$0xff]
          %v2169 = vld [vmem:[%s3 + $0x58] sm:$0xff]
          %v2170 = vld [vmem:[%s3 + $0x60] sm:$0xff]
          %v2171 = vld [vmem:[%s3 + $0x68] sm:$0xff]
          %v2172 = vld [vmem:[%s3 + $0x70] sm:$0xff]
          %v2173 = vld [vmem:[%s3 + $0x78] sm:$0xff]
          %v2174 = vld [vmem:[%s3 + $0x80] sm:$0xff]
          %v2175 = vld [vmem:[%s3 + $0x88] sm:$0xff]
          %v2176 = vld [vmem:[%s3 + $0x90] sm:$0xff]
          %v2177 = vld [vmem:[%s3 + $0x98] sm:$0xff]
          %v2178 = vld [vmem:[%s3 + $0xa0] sm:$0xff]
          %v2179 = vld [vmem:[%s3 + $0xa8] sm:$0xff]
          %v2180 = vld [vmem:[%s3 + $0xb0] sm:$0xff]
          %v2181 = vld [vmem:[%s3 + $0xb8] sm:$0xff]
          %v2182 = vld [vmem:[%s3 + $0xc0] sm:$0xff]
          %v2183 = vld [vmem:[%s4] sm:$0x1]
          %v2185 = vperm.slane %v2183, 0
          %vm2187 = vcmask 588800
          %v2189 = vsel %vm2187, %v2155, 0
          %v2192 = vsel %vm2187, %v2157, 0
          %2194 = vmatpush.msra.mxu0 %v2173
          %2195 = vmatpush.msra.mxu0 %v2172
          %2196 = vmatpush.msra.mxu0 %v2171
          %2197 = vmatpush.msra.mxu0 %v2170
          %2198 = vmatpush.msra.mxu0 %v2169
          %2199 = vmatpush.msra.mxu0 %v2168
          %2200 = vmatpush.msra.mxu0 %v2167
          %2201 = vmatpush.msra.mxu0 %v2166
          %2202 = vmatpush.msra.mxu0 %v2165
          %2203 = vmatpush.msra.mxu0 %v2164
          %2204 = vmatpush.msra.mxu0 %v2163
          %2205 = vmatpush.msra.mxu0 %v2162
          %2206 = vmatpush.msra.mxu0 %v2161
          %2207 = vmatpush.msra.mxu0 %v2160
          %2208 = vmatpush.msra.mxu0 %v2159
          %2209 = vmatpush.msra.mxu0 %v2158
          %2210 = vmatmul.f32.gmra.mxu0 %v2154
          %v2211 = vpop.f32.mrf.mxu0
          %v2212 = vadd.f32 %v2185, %v2211
          %2213 = vmatmul.f32.gmra.mxu0 %v2156
          %v2214 = vpop.f32.mrf.mxu0
          %v2215 = vadd.f32 %v2185, %v2214
          %2216 = vdwg.mxu0
          %2217 = vmatpush.msra.mxu0 0.0
          %2218 = vmatpush.msra.mxu0 0.0
          %2219 = vmatpush.msra.mxu0 0.0
          %2220 = vmatpush.msra.mxu0 0.0
          %2221 = vmatpush.msra.mxu0 0.0
          %2222 = vmatpush.msra.mxu0 0.0
          %2223 = vmatpush.msra.mxu0 0.0
          %2224 = vmatpush.msra.mxu0 %v2182
          %2225 = vmatpush.msra.mxu0 %v2181
          %2226 = vmatpush.msra.mxu0 %v2180
          %2227 = vmatpush.msra.mxu0 %v2179
          %2228 = vmatpush.msra.mxu0 %v2178
          %2229 = vmatpush.msra.mxu0 %v2177
          %2230 = vmatpush.msra.mxu0 %v2176
          %2231 = vmatpush.msra.mxu0 %v2175
          %2232 = vmatpush.msra.mxu0 %v2174
          %2233 = vmatmul.f32.gmra.mxu0 %v2189
          %v2234 = vpop.f32.mrf.mxu0
          %v2235 = vadd.f32 %v2212, %v2234
          %2236 = vmatmul.f32.gmra.mxu0 %v2192
          %v2237 = vpop.f32.mrf.mxu0
          %v2238 = vadd.f32 %v2215, %v2237
          %2239 = vdwg.mxu0
          %v2240 = vmax.f32 %v2235, 0.0
          %v2241 = vmax.f32 %v2238, 0.0
          %v2242 = vld [vmem:[%s1902] sm:$0xff]
          %v2243 = vld [vmem:[%s1902 + $0x8] sm:$0x3f]
          %2244 = vst.msk [vmem:[#allocation2] sm:$0xff] %vm1838, %v2242
          %2245 = vst.msk [vmem:[#allocation2 + $0x10] sm:$0x3] %vm1840, %v2243
          %v2248 = vrot.slane %v2242, 1
          %v2249 = vrot.slane %v2243, 1
          %v2250 = vsel %vm1844, %v2248, %v2249
          %2251 = vrot.lane.b32.xlu0 %v2250, 8
          %v2252 = vpop.permute.xlu0 %2251
          %2253 = vrot.lane.b32.xlu0 %v2249, 8
          %v2254 = vpop.permute.xlu0 %2253
          %2257 = vst.msk [vmem:[#allocation2] sm:$0xff] %vm1854, %v2252
          %2258 = vst.msk [vmem:[#allocation2 + $0x10] sm:$0x3] %vm1856, %v2254
          %v2259 = vrot.slane %v2242, 2
          %v2260 = vrot.slane %v2243, 2
          %v2261 = vsel %vm1858, %v2259, %v2260
          %2262 = vrot.lane.b32.xlu0 %v2261, 16
          %v2263 = vpop.permute.xlu0 %2262
          %2264 = vrot.lane.b32.xlu0 %v2260, 16
          %v2265 = vpop.permute.xlu0 %2264
          %2268 = vst.msk [vmem:[#allocation2] sm:$0xff] %vm1868, %v2263
          %2269 = vst.msk [vmem:[#allocation2 + $0x10] sm:$0x3] %vm1870, %v2265
          %v2270 = vrot.slane %v2242, 3
          %v2271 = vrot.slane %v2243, 3
          %v2272 = vsel %vm1872, %v2270, %v2271
          %2273 = vrot.lane.b32.xlu0 %v2272, 24
          %v2274 = vpop.permute.xlu0 %2273
          %2275 = vrot.lane.b32.xlu0 %v2271, 24
          %v2276 = vpop.permute.xlu0 %2275
          %2279 = vst.msk [vmem:[#allocation2] sm:$0xff] %vm1882, %v2274
          %2280 = vst.msk [vmem:[#allocation2 + $0x10] sm:$0x3] %vm1884, %v2276
          %v2281 = vrot.slane %v2242, 4
          %v2282 = vrot.slane %v2243, 4
          %v2283 = vsel %vm1886, %v2281, %v2282
          %2284 = vrot.lane.b32.xlu0 %v2283, 32
          %v2285 = vpop.permute.xlu0 %2284
          %2286 = vrot.lane.b32.xlu0 %v2282, 32
          %v2287 = vpop.permute.xlu0 %2286
          %2290 = vst.msk [vmem:[#allocation2] sm:$0xff] %vm1896, %v2285
          %2291 = vst.msk [vmem:[#allocation2 + $0x10] sm:$0x3] %vm1898, %v2287
          %v2292 = vld [vmem:[%s1971] sm:$0xff]
          %v2293 = vld [vmem:[%s1971 + $0x8] sm:$0x3f]
          %2296 = vrot.lane.b32.xlu0 %v2292, 40
          %v2297 = vpop.permute.xlu0 %2296
          %2298 = vrot.lane.b32.xlu0 %v2293, 40
          %v2299 = vpop.permute.xlu0 %2298
          %2302 = vst.msk [vmem:[#allocation2] sm:$0xff] %vm1913, %v2297
          %2303 = vst.msk [vmem:[#allocation2 + $0x10] sm:$0x3] %vm1915, %v2299
          %v2304 = vrot.slane %v2292, 1
          %v2305 = vrot.slane %v2293, 1
          %v2306 = vsel %vm1844, %v2304, %v2305
          %2307 = vrot.lane.b32.xlu0 %v2306, 48
          %v2308 = vpop.permute.xlu0 %2307
          %2309 = vrot.lane.b32.xlu0 %v2305, 48
          %v2310 = vpop.permute.xlu0 %2309
          %2313 = vst.msk [vmem:[#allocation2] sm:$0xff] %vm1926, %v2308
          %2314 = vst.msk [vmem:[#allocation2 + $0x10] sm:$0x3] %vm1928, %v2310
          %v2315 = vrot.slane %v2292, 2
          %v2316 = vrot.slane %v2293, 2
          %v2317 = vsel %vm1858, %v2315, %v2316
          %2318 = vrot.lane.b32.xlu0 %v2317, 56
          %v2319 = vpop.permute.xlu0 %2318
          %2320 = vrot.lane.b32.xlu0 %v2316, 56
          %v2321 = vpop.permute.xlu0 %2320
          %2324 = vst.msk [vmem:[#allocation2] sm:$0xff] %vm1939, %v2319
          %2325 = vst.msk [vmem:[#allocation2 + $0x10] sm:$0x3] %vm1941, %v2321
          %v2326 = vrot.slane %v2292, 3
          %v2327 = vrot.slane %v2293, 3
          %v2328 = vsel %vm1872, %v2326, %v2327
          %2329 = vrot.lane.b32.xlu0 %v2328, 64
          %v2330 = vpop.permute.xlu0 %2329
          %2331 = vrot.lane.b32.xlu0 %v2327, 64
          %v2332 = vpop.permute.xlu0 %2331
          %2335 = vst.msk [vmem:[#allocation2] sm:$0xff] %vm1952, %v2330
          %2336 = vst.msk [vmem:[#allocation2 + $0x10] sm:$0x3] %vm1954, %v2332
          %v2337 = vrot.slane %v2292, 4
          %v2338 = vrot.slane %v2293, 4
          %v2339 = vsel %vm1886, %v2337, %v2338
          %2340 = vrot.lane.b32.xlu0 %v2339, 72
          %v2341 = vpop.permute.xlu0 %2340
          %2342 = vrot.lane.b32.xlu0 %v2338, 72
          %v2343 = vpop.permute.xlu0 %2342
          %2346 = vst.msk [vmem:[#allocation2] sm:$0xff] %vm1965, %v2341
          %2347 = vst.msk [vmem:[#allocation2 + $0x10] sm:$0x3] %vm1967, %v2343
          %v2348 = vld [vmem:[%s2040] sm:$0xff]
          %v2349 = vld [vmem:[%s2040 + $0x8] sm:$0x3f]
          %2352 = vrot.lane.b32.xlu0 %v2348, 80
          %v2353 = vpop.permute.xlu0 %2352
          %2354 = vrot.lane.b32.xlu0 %v2349, 80
          %v2355 = vpop.permute.xlu0 %2354
          %2358 = vst.msk [vmem:[#allocation2] sm:$0xff] %vm1982, %v2353
          %2359 = vst.msk [vmem:[#allocation2 + $0x10] sm:$0x3] %vm1984, %v2355
          %v2360 = vrot.slane %v2348, 1
          %v2361 = vrot.slane %v2349, 1
          %v2362 = vsel %vm1844, %v2360, %v2361
          %2363 = vrot.lane.b32.xlu0 %v2362, 88
          %v2364 = vpop.permute.xlu0 %2363
          %2365 = vrot.lane.b32.xlu0 %v2361, 88
          %v2366 = vpop.permute.xlu0 %2365
          %2369 = vst.msk [vmem:[#allocation2] sm:$0xff] %vm1995, %v2364
          %2370 = vst.msk [vmem:[#allocation2 + $0x10] sm:$0x3] %vm1997, %v2366
          %v2371 = vrot.slane %v2348, 2
          %v2372 = vrot.slane %v2349, 2
          %v2373 = vsel %vm1858, %v2371, %v2372
          %2374 = vrot.lane.b32.xlu0 %v2373, 96
          %v2375 = vpop.permute.xlu0 %2374
          %2376 = vrot.lane.b32.xlu0 %v2372, 96
          %v2377 = vpop.permute.xlu0 %2376
          %2380 = vst.msk [vmem:[#allocation2] sm:$0xff] %vm2008, %v2375
          %2381 = vst.msk [vmem:[#allocation2 + $0x10] sm:$0x3] %vm2010, %v2377
          %v2382 = vrot.slane %v2348, 3
          %v2383 = vrot.slane %v2349, 3
          %v2384 = vsel %vm1872, %v2382, %v2383
          %2385 = vrot.lane.b32.xlu0 %v2384, 104
          %v2386 = vpop.permute.xlu0 %2385
          %2387 = vrot.lane.b32.xlu0 %v2383, 104
          %v2388 = vpop.permute.xlu0 %2387
          %2391 = vst.msk [vmem:[#allocation2] sm:$0xff] %vm2021, %v2386
          %2392 = vst.msk [vmem:[#allocation2 + $0x10] sm:$0x3] %vm2023, %v2388
          %v2393 = vrot.slane %v2348, 4
          %v2394 = vrot.slane %v2349, 4
          %v2395 = vsel %vm1886, %v2393, %v2394
          %2396 = vrot.lane.b32.xlu0 %v2395, 112
          %v2397 = vpop.permute.xlu0 %2396
          %2398 = vrot.lane.b32.xlu0 %v2394, 112
          %v2399 = vpop.permute.xlu0 %2398
          %2402 = vst.msk [vmem:[#allocation2] sm:$0xff] %vm2034, %v2397
          %2403 = vst.msk [vmem:[#allocation2 + $0x10] sm:$0x3] %vm2036, %v2399
          %v2404 = vld [vmem:[%s2097] sm:$0xff]
          %v2405 = vld [vmem:[%s2097 + $0x8] sm:$0x3f]
          %2408 = vrot.lane.b32.xlu0 %v2404, 120
          %v2409 = vpop.permute.xlu0 %2408
          %2410 = vrot.lane.b32.xlu0 %v2405, 120
          %v2411 = vpop.permute.xlu0 %2410
          %2414 = vst.msk [vmem:[#allocation2] sm:$0xff] %vm2051, %v2409
          %2415 = vst.msk [vmem:[#allocation2 + $0x10] sm:$0x3] %vm2053, %v2411
          %v2416 = vrot.slane %v2404, 1
          %v2417 = vrot.slane %v2405, 1
          %v2418 = vsel %vm1844, %v2416, %v2417
          %2421 = vst.msk [vmem:[#allocation2 + $0x8] sm:$0xff] %vm1838, %v2418
          %2422 = vst.msk [vmem:[#allocation2 + $0x18] sm:$0x3] %vm1840, %v2417
          %v2423 = vrot.slane %v2404, 2
          %v2424 = vrot.slane %v2405, 2
          %v2425 = vsel %vm1858, %v2423, %v2424
          %2426 = vrot.lane.b32.xlu0 %v2425, 8
          %v2427 = vpop.permute.xlu0 %2426
          %2428 = vrot.lane.b32.xlu0 %v2424, 8
          %v2429 = vpop.permute.xlu0 %2428
          %2432 = vst.msk [vmem:[#allocation2 + $0x8] sm:$0xff] %vm1854, %v2427
          %2433 = vst.msk [vmem:[#allocation2 + $0x18] sm:$0x3] %vm1856, %v2429
          %v2434 = vrot.slane %v2404, 3
          %v2435 = vrot.slane %v2405, 3
          %v2436 = vsel %vm1872, %v2434, %v2435
          %2437 = vrot.lane.b32.xlu0 %v2436, 16
          %v2438 = vpop.permute.xlu0 %2437
          %2439 = vrot.lane.b32.xlu0 %v2435, 16
          %v2440 = vpop.permute.xlu0 %2439
          %2443 = vst.msk [vmem:[#allocation2 + $0x8] sm:$0xff] %vm1868, %v2438
          %2444 = vst.msk [vmem:[#allocation2 + $0x18] sm:$0x3] %vm1870, %v2440
          %v2445 = vrot.slane %v2404, 4
          %v2446 = vrot.slane %v2405, 4
          %v2447 = vsel %vm1886, %v2445, %v2446
          %2448 = vrot.lane.b32.xlu0 %v2447, 24
          %v2449 = vpop.permute.xlu0 %2448
          %2450 = vrot.lane.b32.xlu0 %v2446, 24
          %v2451 = vpop.permute.xlu0 %2450
          %2454 = vst.msk [vmem:[#allocation2 + $0x8] sm:$0xff] %vm1882, %v2449
          %2455 = vst.msk [vmem:[#allocation2 + $0x18] sm:$0x3] %vm1884, %v2451
          %s2456 = sadd.s32 %s1833, 5
          %s2457 = smul.u32 %s2456, 16
          %s2458 = scalar_lea.vmem [#allocation3], %s2457
          %v2459 = vld [vmem:[%s2458] sm:$0xff]
          %v2460 = vld [vmem:[%s2458 + $0x8] sm:$0x3f]
          %2463 = vrot.lane.b32.xlu0 %v2459, 32
          %v2464 = vpop.permute.xlu0 %2463
          %2465 = vrot.lane.b32.xlu0 %v2460, 32
          %v2466 = vpop.permute.xlu0 %2465
          %2469 = vst.msk [vmem:[#allocation2 + $0x8] sm:$0xff] %vm1896, %v2464
          %2470 = vst.msk [vmem:[#allocation2 + $0x18] sm:$0x3] %vm1898, %v2466
          %v2471 = vrot.slane %v2459, 1
          %v2472 = vrot.slane %v2460, 1
          %v2473 = vsel %vm1844, %v2471, %v2472
          %2474 = vrot.lane.b32.xlu0 %v2473, 40
          %v2475 = vpop.permute.xlu0 %2474
          %2476 = vrot.lane.b32.xlu0 %v2472, 40
          %v2477 = vpop.permute.xlu0 %2476
          %2480 = vst.msk [vmem:[#allocation2 + $0x8] sm:$0xff] %vm1913, %v2475
          %2481 = vst.msk [vmem:[#allocation2 + $0x18] sm:$0x3] %vm1915, %v2477
          %v2482 = vrot.slane %v2459, 2
          %v2483 = vrot.slane %v2460, 2
          %v2484 = vsel %vm1858, %v2482, %v2483
          %2485 = vrot.lane.b32.xlu0 %v2484, 48
          %v2486 = vpop.permute.xlu0 %2485
          %2487 = vrot.lane.b32.xlu0 %v2483, 48
          %v2488 = vpop.permute.xlu0 %2487
          %2491 = vst.msk [vmem:[#allocation2 + $0x8] sm:$0xff] %vm1926, %v2486
          %2492 = vst.msk [vmem:[#allocation2 + $0x18] sm:$0x3] %vm1928, %v2488
          %v2493 = vrot.slane %v2459, 3
          %v2494 = vrot.slane %v2460, 3
          %v2495 = vsel %vm1872, %v2493, %v2494
          %2496 = vrot.lane.b32.xlu0 %v2495, 56
          %v2497 = vpop.permute.xlu0 %2496
          %2498 = vrot.lane.b32.xlu0 %v2494, 56
          %v2499 = vpop.permute.xlu0 %2498
          %2502 = vst.msk [vmem:[#allocation2 + $0x8] sm:$0xff] %vm1939, %v2497
          %2503 = vst.msk [vmem:[#allocation2 + $0x18] sm:$0x3] %vm1941, %v2499
          %v2504 = vrot.slane %v2459, 4
          %v2505 = vrot.slane %v2460, 4
          %v2506 = vsel %vm1886, %v2504, %v2505
          %2507 = vrot.lane.b32.xlu0 %v2506, 64
          %v2508 = vpop.permute.xlu0 %2507
          %2509 = vrot.lane.b32.xlu0 %v2505, 64
          %v2510 = vpop.permute.xlu0 %2509
          %2513 = vst.msk [vmem:[#allocation2 + $0x8] sm:$0xff] %vm1952, %v2508
          %2514 = vst.msk [vmem:[#allocation2 + $0x18] sm:$0x3] %vm1954, %v2510
          %v2515 = vld [vmem:[#allocation2] sm:$0xff]
          %v2516 = vld [vmem:[#allocation2 + $0x8] sm:$0xff]
          %v2517 = vld [vmem:[#allocation2 + $0x10] sm:$0x3]
          %v2518 = vld [vmem:[#allocation2 + $0x18] sm:$0x3]
          %v2519 = vld [vmem:[%s3] sm:$0xff]
          %v2520 = vld [vmem:[%s3 + $0x8] sm:$0xff]
          %v2521 = vld [vmem:[%s3 + $0x10] sm:$0xff]
          %v2522 = vld [vmem:[%s3 + $0x18] sm:$0xff]
          %v2523 = vld [vmem:[%s3 + $0x20] sm:$0xff]
          %v2524 = vld [vmem:[%s3 + $0x28] sm:$0xff]
          %v2525 = vld [vmem:[%s3 + $0x30] sm:$0xff]
          %v2526 = vld [vmem:[%s3 + $0x38] sm:$0xff]
          %v2527 = vld [vmem:[%s3 + $0x40] sm:$0xff]
          %v2528 = vld [vmem:[%s3 + $0x48] sm:$0xff]
          %v2529 = vld [vmem:[%s3 + $0x50] sm:$0xff]
          %v2530 = vld [vmem:[%s3 + $0x58] sm:$0xff]
          %v2531 = vld [vmem:[%s3 + $0x60] sm:$0xff]
          %v2532 = vld [vmem:[%s3 + $0x68] sm:$0xff]
          %v2533 = vld [vmem:[%s3 + $0x70] sm:$0xff]
          %v2534 = vld [vmem:[%s3 + $0x78] sm:$0xff]
          %v2535 = vld [vmem:[%s3 + $0x80] sm:$0xff]
          %v2536 = vld [vmem:[%s3 + $0x88] sm:$0xff]
          %v2537 = vld [vmem:[%s3 + $0x90] sm:$0xff]
          %v2538 = vld [vmem:[%s3 + $0x98] sm:$0xff]
          %v2539 = vld [vmem:[%s3 + $0xa0] sm:$0xff]
          %v2540 = vld [vmem:[%s3 + $0xa8] sm:$0xff]
          %v2541 = vld [vmem:[%s3 + $0xb0] sm:$0xff]
          %v2542 = vld [vmem:[%s3 + $0xb8] sm:$0xff]
          %v2543 = vld [vmem:[%s3 + $0xc0] sm:$0xff]
          %v2544 = vld [vmem:[%s4] sm:$0x1]
          %v2546 = vperm.slane %v2544, 0
          %v2549 = vsel %vm2187, %v2516, 0
          %v2552 = vsel %vm2187, %v2518, 0
          %2554 = vmatpush.msra.mxu0 %v2534
          %2555 = vmatpush.msra.mxu0 %v2533
          %2556 = vmatpush.msra.mxu0 %v2532
          %2557 = vmatpush.msra.mxu0 %v2531
          %2558 = vmatpush.msra.mxu0 %v2530
          %2559 = vmatpush.msra.mxu0 %v2529
          %2560 = vmatpush.msra.mxu0 %v2528
          %2561 = vmatpush.msra.mxu0 %v2527
          %2562 = vmatpush.msra.mxu0 %v2526
          %2563 = vmatpush.msra.mxu0 %v2525
          %2564 = vmatpush.msra.mxu0 %v2524
          %2565 = vmatpush.msra.mxu0 %v2523
          %2566 = vmatpush.msra.mxu0 %v2522
          %2567 = vmatpush.msra.mxu0 %v2521
          %2568 = vmatpush.msra.mxu0 %v2520
          %2569 = vmatpush.msra.mxu0 %v2519
          %2570 = vmatmul.f32.gmra.mxu0 %v2515
          %v2571 = vpop.f32.mrf.mxu0
          %v2572 = vadd.f32 %v2546, %v2571
          %2573 = vmatmul.f32.gmra.mxu0 %v2517
          %v2574 = vpop.f32.mrf.mxu0
          %v2575 = vadd.f32 %v2546, %v2574
          %2576 = vdwg.mxu0
          %2577 = vmatpush.msra.mxu0 0.0
          %2578 = vmatpush.msra.mxu0 0.0
          %2579 = vmatpush.msra.mxu0 0.0
          %2580 = vmatpush.msra.mxu0 0.0
          %2581 = vmatpush.msra.mxu0 0.0
          %2582 = vmatpush.msra.mxu0 0.0
          %2583 = vmatpush.msra.mxu0 0.0
          %2584 = vmatpush.msra.mxu0 %v2543
          %2585 = vmatpush.msra.mxu0 %v2542
          %2586 = vmatpush.msra.mxu0 %v2541
          %2587 = vmatpush.msra.mxu0 %v2540
          %2588 = vmatpush.msra.mxu0 %v2539
          %2589 = vmatpush.msra.mxu0 %v2538
          %2590 = vmatpush.msra.mxu0 %v2537
          %2591 = vmatpush.msra.mxu0 %v2536
          %2592 = vmatpush.msra.mxu0 %v2535
          %2593 = vmatmul.f32.gmra.mxu0 %v2549
          %v2594 = vpop.f32.mrf.mxu0
          %v2595 = vadd.f32 %v2572, %v2594
          %2596 = vmatmul.f32.gmra.mxu0 %v2552
          %v2597 = vpop.f32.mrf.mxu0
          %v2598 = vadd.f32 %v2575, %v2597
          %2599 = vdwg.mxu0
          %v2600 = vmax.f32 %v2595, 0.0
          %v2601 = vmax.f32 %v2598, 0.0
          %v2602 = vmax.f32 %v2240, %v2600
          %v2603 = vmax.f32 %v2241, %v2601
          %v2605 = vrot.slane %v2602, 1
          %v2607 = vmax.f32 %v2602, %v2605
          %s2608 = smul.u32 %s1828, 8
          %s2609 = scalar_lea.vmem [#allocation4], %s2608
          %vm2610 = vcmask 122880
          %2611 = vst.msk [vmem:[%s2609] sm:$0x1] %vm2610, %v2607
          %vm2612 = vcmask 124930
          %2613 = vst.msk [vmem:[%s2609 - $0x1] sm:$0x4] %vm2612, %v2607
          %vm2614 = vcmask 126980
          %2615 = vst.msk [vmem:[%s2609 - $0x2] sm:$0x10] %vm2614, %v2607
          %vm2616 = vcmask 129030
          %2617 = vst.msk [vmem:[%s2609 - $0x3] sm:$0x40] %vm2616, %v2607
          %v2619 = vrot.slane %v2603, 1
          %v2621 = vmax.f32 %v2603, %v2619
          %2622 = vst.msk [vmem:[%s2609 + $0x4] sm:$0x1] %vm2610, %v2621
        $region76: #{net_forward.1} parent=63 // loop_footer
          %s1832 = sadd.s32 1, %s1828
        $region77: #{net_forward.1} parent=63 // loop_footer_branch
          %1827 = sbr.rel target = $region73
        $region78: #{net_forward.1} parent=63 // loop_exit
          _
        %v2623 = vld [vmem:[%s6] sm:$0x1]
        %v2624 = vld [vmem:[#allocation4] sm:$0x1]
        %v2625 = vld [vmem:[%s5] sm:$0xff]
        %v2626 = vld [vmem:[%s5 + $0x8] sm:$0xff]
        %vm2627 = vcmask 130048
        %v2629 = vsel %vm2627, %v2624, 0
        %2631 = vmatpush.msra.mxu0 0.0
        %2632 = vmatpush.msra.mxu0 0.0
        %2633 = vmatpush.msra.mxu0 0.0
        %2634 = vmatpush.msra.mxu0 0.0
        %2635 = vmatpush.msra.mxu0 0.0
        %2636 = vmatpush.msra.mxu0 0.0
        %2637 = vmatpush.msra.mxu0 0.0
        %2638 = vmatpush.msra.mxu0 0.0
        %2639 = vmatpush.msra.mxu0 0.0
        %2640 = vmatpush.msra.mxu0 0.0
        %2641 = vmatpush.msra.mxu0 0.0
        %2642 = vmatpush.msra.mxu0 0.0
        %2643 = vmatpush.msra.mxu0 0.0
        %2644 = vmatpush.msra.mxu0 0.0
        %2645 = vmatpush.msra.mxu0 %v2626
        %2646 = vmatpush.msra.mxu0 %v2625
        %2647 = vmatmul.f32.gmra.mxu0 %v2629
        %v2648 = vpop.f32.mrf.mxu0
        %v2649 = vadd.f32 0.0, %v2648
        %2650 = vdwg.mxu0
        %v2651 = vadd.f32 %v2623, %v2649
        %v2652 = vld [vmem:[#allocation4 + $0x1] sm:$0x1]
        %v2653 = vld [vmem:[%s5 + $0x10] sm:$0xff]
        %v2654 = vld [vmem:[%s5 + $0x18] sm:$0xff]
        %v2656 = vsel %vm2627, %v2652, 0
        %2658 = vmatpush.msra.mxu0 0.0
        %2659 = vmatpush.msra.mxu0 0.0
        %2660 = vmatpush.msra.mxu0 0.0
        %2661 = vmatpush.msra.mxu0 0.0
        %2662 = vmatpush.msra.mxu0 0.0
        %2663 = vmatpush.msra.mxu0 0.0
        %2664 = vmatpush.msra.mxu0 0.0
        %2665 = vmatpush.msra.mxu0 0.0
        %2666 = vmatpush.msra.mxu0 0.0
        %2667 = vmatpush.msra.mxu0 0.0
        %2668 = vmatpush.msra.mxu0 0.0
        %2669 = vmatpush.msra.mxu0 0.0
        %2670 = vmatpush.msra.mxu0 0.0
        %2671 = vmatpush.msra.mxu0 0.0
        %2672 = vmatpush.msra.mxu0 %v2654
        %2673 = vmatpush.msra.mxu0 %v2653
        %2674 = vmatmul.f32.gmra.mxu0 %v2656
        %v2675 = vpop.f32.mrf.mxu0
        %v2676 = vadd.f32 0.0, %v2675
        %2677 = vdwg.mxu0
        %v2678 = vadd.f32 %v2651, %v2676
        %v2679 = vld [vmem:[#allocation4 + $0x2] sm:$0x1]
        %v2680 = vld [vmem:[%s5 + $0x20] sm:$0xff]
        %v2681 = vld [vmem:[%s5 + $0x28] sm:$0xff]
        %v2683 = vsel %vm2627, %v2679, 0
        %2685 = vmatpush.msra.mxu0 0.0
        %2686 = vmatpush.msra.mxu0 0.0
        %2687 = vmatpush.msra.mxu0 0.0
        %2688 = vmatpush.msra.mxu0 0.0
        %2689 = vmatpush.msra.mxu0 0.0
        %2690 = vmatpush.msra.mxu0 0.0
        %2691 = vmatpush.msra.mxu0 0.0
        %2692 = vmatpush.msra.mxu0 0.0
        %2693 = vmatpush.msra.mxu0 0.0
        %2694 = vmatpush.msra.mxu0 0.0
        %2695 = vmatpush.msra.mxu0 0.0
        %2696 = vmatpush.msra.mxu0 0.0
        %2697 = vmatpush.msra.mxu0 0.0
        %2698 = vmatpush.msra.mxu0 0.0
        %2699 = vmatpush.msra.mxu0 %v2681
        %2700 = vmatpush.msra.mxu0 %v2680
        %2701 = vmatmul.f32.gmra.mxu0 %v2683
        %v2702 = vpop.f32.mrf.mxu0
        %v2703 = vadd.f32 0.0, %v2702
        %2704 = vdwg.mxu0
        %v2705 = vadd.f32 %v2678, %v2703
        %v2706 = vld [vmem:[#allocation4 + $0x3] sm:$0x1]
        %v2707 = vld [vmem:[%s5 + $0x30] sm:$0xff]
        %v2708 = vld [vmem:[%s5 + $0x38] sm:$0xff]
        %v2710 = vsel %vm2627, %v2706, 0
        %2712 = vmatpush.msra.mxu0 0.0
        %2713 = vmatpush.msra.mxu0 0.0
        %2714 = vmatpush.msra.mxu0 0.0
        %2715 = vmatpush.msra.mxu0 0.0
        %2716 = vmatpush.msra.mxu0 0.0
        %2717 = vmatpush.msra.mxu0 0.0
        %2718 = vmatpush.msra.mxu0 0.0
        %2719 = vmatpush.msra.mxu0 0.0
        %2720 = vmatpush.msra.mxu0 0.0
        %2721 = vmatpush.msra.mxu0 0.0
        %2722 = vmatpush.msra.mxu0 0.0
        %2723 = vmatpush.msra.mxu0 0.0
        %2724 = vmatpush.msra.mxu0 0.0
        %2725 = vmatpush.msra.mxu0 0.0
        %2726 = vmatpush.msra.mxu0 %v2708
        %2727 = vmatpush.msra.mxu0 %v2707
        %2728 = vmatmul.f32.gmra.mxu0 %v2710
        %v2729 = vpop.f32.mrf.mxu0
        %v2730 = vadd.f32 0.0, %v2729
        %2731 = vdwg.mxu0
        %v2732 = vadd.f32 %v2705, %v2730
        %v2733 = vld [vmem:[#allocation4 + $0x4] sm:$0x1]
        %v2734 = vld [vmem:[%s5 + $0x40] sm:$0xff]
        %v2735 = vld [vmem:[%s5 + $0x48] sm:$0xff]
        %v2737 = vsel %vm2627, %v2733, 0
        %2739 = vmatpush.msra.mxu0 0.0
        %2740 = vmatpush.msra.mxu0 0.0
        %2741 = vmatpush.msra.mxu0 0.0
        %2742 = vmatpush.msra.mxu0 0.0
        %2743 = vmatpush.msra.mxu0 0.0
        %2744 = vmatpush.msra.mxu0 0.0
        %2745 = vmatpush.msra.mxu0 0.0
        %2746 = vmatpush.msra.mxu0 0.0
        %2747 = vmatpush.msra.mxu0 0.0
        %2748 = vmatpush.msra.mxu0 0.0
        %2749 = vmatpush.msra.mxu0 0.0
        %2750 = vmatpush.msra.mxu0 0.0
        %2751 = vmatpush.msra.mxu0 0.0
        %2752 = vmatpush.msra.mxu0 0.0
        %2753 = vmatpush.msra.mxu0 %v2735
        %2754 = vmatpush.msra.mxu0 %v2734
        %2755 = vmatmul.f32.gmra.mxu0 %v2737
        %v2756 = vpop.f32.mrf.mxu0
        %v2757 = vadd.f32 0.0, %v2756
        %2758 = vdwg.mxu0
        %v2759 = vadd.f32 %v2732, %v2757
        %s2760 = scalar_lea.vmem [#allocation4], 8
        %v2761 = vld [vmem:[%s2760] sm:$0x1]
        %v2762 = vld [vmem:[%s5 + $0x50] sm:$0xff]
        %v2763 = vld [vmem:[%s5 + $0x58] sm:$0xff]
        %v2765 = vsel %vm2627, %v2761, 0
        %2767 = vmatpush.msra.mxu0 0.0
        %2768 = vmatpush.msra.mxu0 0.0
        %2769 = vmatpush.msra.mxu0 0.0
        %2770 = vmatpush.msra.mxu0 0.0
        %2771 = vmatpush.msra.mxu0 0.0
        %2772 = vmatpush.msra.mxu0 0.0
        %2773 = vmatpush.msra.mxu0 0.0
        %2774 = vmatpush.msra.mxu0 0.0
        %2775 = vmatpush.msra.mxu0 0.0
        %2776 = vmatpush.msra.mxu0 0.0
        %2777 = vmatpush.msra.mxu0 0.0
        %2778 = vmatpush.msra.mxu0 0.0
        %2779 = vmatpush.msra.mxu0 0.0
        %2780 = vmatpush.msra.mxu0 0.0
        %2781 = vmatpush.msra.mxu0 %v2763
        %2782 = vmatpush.msra.mxu0 %v2762
        %2783 = vmatmul.f32.gmra.mxu0 %v2765
        %v2784 = vpop.f32.mrf.mxu0
        %v2785 = vadd.f32 0.0, %v2784
        %2786 = vdwg.mxu0
        %v2787 = vadd.f32 %v2759, %v2785
        %v2788 = vld [vmem:[%s2760 + $0x1] sm:$0x1]
        %v2789 = vld [vmem:[%s5 + $0x60] sm:$0xff]
        %v2790 = vld [vmem:[%s5 + $0x68] sm:$0xff]
        %v2792 = vsel %vm2627, %v2788, 0
        %2794 = vmatpush.msra.mxu0 0.0
        %2795 = vmatpush.msra.mxu0 0.0
        %2796 = vmatpush.msra.mxu0 0.0
        %2797 = vmatpush.msra.mxu0 0.0
        %2798 = vmatpush.msra.mxu0 0.0
        %2799 = vmatpush.msra.mxu0 0.0
        %2800 = vmatpush.msra.mxu0 0.0
        %2801 = vmatpush.msra.mxu0 0.0
        %2802 = vmatpush.msra.mxu0 0.0
        %2803 = vmatpush.msra.mxu0 0.0
        %2804 = vmatpush.msra.mxu0 0.0
        %2805 = vmatpush.msra.mxu0 0.0
        %2806 = vmatpush.msra.mxu0 0.0
        %2807 = vmatpush.msra.mxu0 0.0
        %2808 = vmatpush.msra.mxu0 %v2790
        %2809 = vmatpush.msra.mxu0 %v2789
        %2810 = vmatmul.f32.gmra.mxu0 %v2792
        %v2811 = vpop.f32.mrf.mxu0
        %v2812 = vadd.f32 0.0, %v2811
        %2813 = vdwg.mxu0
        %v2814 = vadd.f32 %v2787, %v2812
        %v2815 = vld [vmem:[%s2760 + $0x2] sm:$0x1]
        %v2816 = vld [vmem:[%s5 + $0x70] sm:$0xff]
        %v2817 = vld [vmem:[%s5 + $0x78] sm:$0xff]
        %v2819 = vsel %vm2627, %v2815, 0
        %2821 = vmatpush.msra.mxu0 0.0
        %2822 = vmatpush.msra.mxu0 0.0
        %2823 = vmatpush.msra.mxu0 0.0
        %2824 = vmatpush.msra.mxu0 0.0
        %2825 = vmatpush.msra.mxu0 0.0
        %2826 = vmatpush.msra.mxu0 0.0
        %2827 = vmatpush.msra.mxu0 0.0
        %2828 = vmatpush.msra.mxu0 0.0
        %2829 = vmatpush.msra.mxu0 0.0
        %2830 = vmatpush.msra.mxu0 0.0
        %2831 = vmatpush.msra.mxu0 0.0
        %2832 = vmatpush.msra.mxu0 0.0
        %2833 = vmatpush.msra.mxu0 0.0
        %2834 = vmatpush.msra.mxu0 0.0
        %2835 = vmatpush.msra.mxu0 %v2817
        %2836 = vmatpush.msra.mxu0 %v2816
        %2837 = vmatmul.f32.gmra.mxu0 %v2819
        %v2838 = vpop.f32.mrf.mxu0
        %v2839 = vadd.f32 0.0, %v2838
        %2840 = vdwg.mxu0
        %v2841 = vadd.f32 %v2814, %v2839
        %v2842 = vld [vmem:[%s2760 + $0x3] sm:$0x1]
        %v2843 = vld [vmem:[%s5 + $0x80] sm:$0xff]
        %v2844 = vld [vmem:[%s5 + $0x88] sm:$0xff]
        %v2846 = vsel %vm2627, %v2842, 0
        %2848 = vmatpush.msra.mxu0 0.0
        %2849 = vmatpush.msra.mxu0 0.0
        %2850 = vmatpush.msra.mxu0 0.0
        %2851 = vmatpush.msra.mxu0 0.0
        %2852 = vmatpush.msra.mxu0 0.0
        %2853 = vmatpush.msra.mxu0 0.0
        %2854 = vmatpush.msra.mxu0 0.0
        %2855 = vmatpush.msra.mxu0 0.0
        %2856 = vmatpush.msra.mxu0 0.0
        %2857 = vmatpush.msra.mxu0 0.0
        %2858 = vmatpush.msra.mxu0 0.0
        %2859 = vmatpush.msra.mxu0 0.0
        %2860 = vmatpush.msra.mxu0 0.0
        %2861 = vmatpush.msra.mxu0 0.0
        %2862 = vmatpush.msra.mxu0 %v2844
        %2863 = vmatpush.msra.mxu0 %v2843
        %2864 = vmatmul.f32.gmra.mxu0 %v2846
        %v2865 = vpop.f32.mrf.mxu0
        %v2866 = vadd.f32 0.0, %v2865
        %2867 = vdwg.mxu0
        %v2868 = vadd.f32 %v2841, %v2866
        %v2869 = vld [vmem:[%s2760 + $0x4] sm:$0x1]
        %v2870 = vld [vmem:[%s5 + $0x90] sm:$0xff]
        %v2871 = vld [vmem:[%s5 + $0x98] sm:$0xff]
        %v2873 = vsel %vm2627, %v2869, 0
        %2875 = vmatpush.msra.mxu0 0.0
        %2876 = vmatpush.msra.mxu0 0.0
        %2877 = vmatpush.msra.mxu0 0.0
        %2878 = vmatpush.msra.mxu0 0.0
        %2879 = vmatpush.msra.mxu0 0.0
        %2880 = vmatpush.msra.mxu0 0.0
        %2881 = vmatpush.msra.mxu0 0.0
        %2882 = vmatpush.msra.mxu0 0.0
        %2883 = vmatpush.msra.mxu0 0.0
        %2884 = vmatpush.msra.mxu0 0.0
        %2885 = vmatpush.msra.mxu0 0.0
        %2886 = vmatpush.msra.mxu0 0.0
        %2887 = vmatpush.msra.mxu0 0.0
        %2888 = vmatpush.msra.mxu0 0.0
        %2889 = vmatpush.msra.mxu0 %v2871
        %2890 = vmatpush.msra.mxu0 %v2870
        %2891 = vmatmul.f32.gmra.mxu0 %v2873
        %v2892 = vpop.f32.mrf.mxu0
        %v2893 = vadd.f32 0.0, %v2892
        %2894 = vdwg.mxu0
        %v2895 = vadd.f32 %v2868, %v2893
        %s2896 = scalar_lea.vmem [#allocation4], 16
        %v2897 = vld [vmem:[%s2896] sm:$0x1]
        %v2898 = vld [vmem:[%s5 + $0xa0] sm:$0xff]
        %v2899 = vld [vmem:[%s5 + $0xa8] sm:$0xff]
        %v2901 = vsel %vm2627, %v2897, 0
        %2903 = vmatpush.msra.mxu0 0.0
        %2904 = vmatpush.msra.mxu0 0.0
        %2905 = vmatpush.msra.mxu0 0.0
        %2906 = vmatpush.msra.mxu0 0.0
        %2907 = vmatpush.msra.mxu0 0.0
        %2908 = vmatpush.msra.mxu0 0.0
        %2909 = vmatpush.msra.mxu0 0.0
        %2910 = vmatpush.msra.mxu0 0.0
        %2911 = vmatpush.msra.mxu0 0.0
        %2912 = vmatpush.msra.mxu0 0.0
        %2913 = vmatpush.msra.mxu0 0.0
        %2914 = vmatpush.msra.mxu0 0.0
        %2915 = vmatpush.msra.mxu0 0.0
        %2916 = vmatpush.msra.mxu0 0.0
        %2917 = vmatpush.msra.mxu0 %v2899
        %2918 = vmatpush.msra.mxu0 %v2898
        %2919 = vmatmul.f32.gmra.mxu0 %v2901
        %v2920 = vpop.f32.mrf.mxu0
        %v2921 = vadd.f32 0.0, %v2920
        %2922 = vdwg.mxu0
        %v2923 = vadd.f32 %v2895, %v2921
        %v2924 = vld [vmem:[%s2896 + $0x1] sm:$0x1]
        %v2925 = vld [vmem:[%s5 + $0xb0] sm:$0xff]
        %v2926 = vld [vmem:[%s5 + $0xb8] sm:$0xff]
        %v2928 = vsel %vm2627, %v2924, 0
        %2930 = vmatpush.msra.mxu0 0.0
        %2931 = vmatpush.msra.mxu0 0.0
        %2932 = vmatpush.msra.mxu0 0.0
        %2933 = vmatpush.msra.mxu0 0.0
        %2934 = vmatpush.msra.mxu0 0.0
        %2935 = vmatpush.msra.mxu0 0.0
        %2936 = vmatpush.msra.mxu0 0.0
        %2937 = vmatpush.msra.mxu0 0.0
        %2938 = vmatpush.msra.mxu0 0.0
        %2939 = vmatpush.msra.mxu0 0.0
        %2940 = vmatpush.msra.mxu0 0.0
        %2941 = vmatpush.msra.mxu0 0.0
        %2942 = vmatpush.msra.mxu0 0.0
        %2943 = vmatpush.msra.mxu0 0.0
        %2944 = vmatpush.msra.mxu0 %v2926
        %2945 = vmatpush.msra.mxu0 %v2925
        %2946 = vmatmul.f32.gmra.mxu0 %v2928
        %v2947 = vpop.f32.mrf.mxu0
        %v2948 = vadd.f32 0.0, %v2947
        %2949 = vdwg.mxu0
        %v2950 = vadd.f32 %v2923, %v2948
        %v2951 = vld [vmem:[%s2896 + $0x2] sm:$0x1]
        %v2952 = vld [vmem:[%s5 + $0xc0] sm:$0xff]
        %v2953 = vld [vmem:[%s5 + $0xc8] sm:$0xff]
        %v2955 = vsel %vm2627, %v2951, 0
        %2957 = vmatpush.msra.mxu0 0.0
        %2958 = vmatpush.msra.mxu0 0.0
        %2959 = vmatpush.msra.mxu0 0.0
        %2960 = vmatpush.msra.mxu0 0.0
        %2961 = vmatpush.msra.mxu0 0.0
        %2962 = vmatpush.msra.mxu0 0.0
        %2963 = vmatpush.msra.mxu0 0.0
        %2964 = vmatpush.msra.mxu0 0.0
        %2965 = vmatpush.msra.mxu0 0.0
        %2966 = vmatpush.msra.mxu0 0.0
        %2967 = vmatpush.msra.mxu0 0.0
        %2968 = vmatpush.msra.mxu0 0.0
        %2969 = vmatpush.msra.mxu0 0.0
        %2970 = vmatpush.msra.mxu0 0.0
        %2971 = vmatpush.msra.mxu0 %v2953
        %2972 = vmatpush.msra.mxu0 %v2952
        %2973 = vmatmul.f32.gmra.mxu0 %v2955
        %v2974 = vpop.f32.mrf.mxu0
        %v2975 = vadd.f32 0.0, %v2974
        %2976 = vdwg.mxu0
        %v2977 = vadd.f32 %v2950, %v2975
        %v2978 = vld [vmem:[%s2896 + $0x3] sm:$0x1]
        %v2979 = vld [vmem:[%s5 + $0xd0] sm:$0xff]
        %v2980 = vld [vmem:[%s5 + $0xd8] sm:$0xff]
        %v2982 = vsel %vm2627, %v2978, 0
        %2984 = vmatpush.msra.mxu0 0.0
        %2985 = vmatpush.msra.mxu0 0.0
        %2986 = vmatpush.msra.mxu0 0.0
        %2987 = vmatpush.msra.mxu0 0.0
        %2988 = vmatpush.msra.mxu0 0.0
        %2989 = vmatpush.msra.mxu0 0.0
        %2990 = vmatpush.msra.mxu0 0.0
        %2991 = vmatpush.msra.mxu0 0.0
        %2992 = vmatpush.msra.mxu0 0.0
        %2993 = vmatpush.msra.mxu0 0.0
        %2994 = vmatpush.msra.mxu0 0.0
        %2995 = vmatpush.msra.mxu0 0.0
        %2996 = vmatpush.msra.mxu0 0.0
        %2997 = vmatpush.msra.mxu0 0.0
        %2998 = vmatpush.msra.mxu0 %v2980
        %2999 = vmatpush.msra.mxu0 %v2979
        %3000 = vmatmul.f32.gmra.mxu0 %v2982
        %v3001 = vpop.f32.mrf.mxu0
        %v3002 = vadd.f32 0.0, %v3001
        %3003 = vdwg.mxu0
        %v3004 = vadd.f32 %v2977, %v3002
        %v3005 = vld [vmem:[%s2896 + $0x4] sm:$0x1]
        %v3006 = vld [vmem:[%s5 + $0xe0] sm:$0xff]
        %v3007 = vld [vmem:[%s5 + $0xe8] sm:$0xff]
        %v3009 = vsel %vm2627, %v3005, 0
        %3011 = vmatpush.msra.mxu0 0.0
        %3012 = vmatpush.msra.mxu0 0.0
        %3013 = vmatpush.msra.mxu0 0.0
        %3014 = vmatpush.msra.mxu0 0.0
        %3015 = vmatpush.msra.mxu0 0.0
        %3016 = vmatpush.msra.mxu0 0.0
        %3017 = vmatpush.msra.mxu0 0.0
        %3018 = vmatpush.msra.mxu0 0.0
        %3019 = vmatpush.msra.mxu0 0.0
        %3020 = vmatpush.msra.mxu0 0.0
        %3021 = vmatpush.msra.mxu0 0.0
        %3022 = vmatpush.msra.mxu0 0.0
        %3023 = vmatpush.msra.mxu0 0.0
        %3024 = vmatpush.msra.mxu0 0.0
        %3025 = vmatpush.msra.mxu0 %v3007
        %3026 = vmatpush.msra.mxu0 %v3006
        %3027 = vmatmul.f32.gmra.mxu0 %v3009
        %v3028 = vpop.f32.mrf.mxu0
        %v3029 = vadd.f32 0.0, %v3028
        %3030 = vdwg.mxu0
        %v3031 = vadd.f32 %v3004, %v3029
        %s3032 = scalar_lea.vmem [#allocation4], 24
        %v3033 = vld [vmem:[%s3032] sm:$0x1]
        %v3034 = vld [vmem:[%s5 + $0xf0] sm:$0xff]
        %v3035 = vld [vmem:[%s5 + $0xf8] sm:$0xff]
        %v3037 = vsel %vm2627, %v3033, 0
        %3039 = vmatpush.msra.mxu0 0.0
        %3040 = vmatpush.msra.mxu0 0.0
        %3041 = vmatpush.msra.mxu0 0.0
        %3042 = vmatpush.msra.mxu0 0.0
        %3043 = vmatpush.msra.mxu0 0.0
        %3044 = vmatpush.msra.mxu0 0.0
        %3045 = vmatpush.msra.mxu0 0.0
        %3046 = vmatpush.msra.mxu0 0.0
        %3047 = vmatpush.msra.mxu0 0.0
        %3048 = vmatpush.msra.mxu0 0.0
        %3049 = vmatpush.msra.mxu0 0.0
        %3050 = vmatpush.msra.mxu0 0.0
        %3051 = vmatpush.msra.mxu0 0.0
        %3052 = vmatpush.msra.mxu0 0.0
        %3053 = vmatpush.msra.mxu0 %v3035
        %3054 = vmatpush.msra.mxu0 %v3034
        %3055 = vmatmul.f32.gmra.mxu0 %v3037
        %v3056 = vpop.f32.mrf.mxu0
        %v3057 = vadd.f32 0.0, %v3056
        %3058 = vdwg.mxu0
        %v3059 = vadd.f32 %v3031, %v3057
        %v3060 = vld [vmem:[%s3032 + $0x1] sm:$0x1]
        %v3061 = vld [vmem:[%s5 + $0x100] sm:$0xff]
        %v3062 = vld [vmem:[%s5 + $0x108] sm:$0xff]
        %v3064 = vsel %vm2627, %v3060, 0
        %3066 = vmatpush.msra.mxu0 0.0
        %3067 = vmatpush.msra.mxu0 0.0
        %3068 = vmatpush.msra.mxu0 0.0
        %3069 = vmatpush.msra.mxu0 0.0
        %3070 = vmatpush.msra.mxu0 0.0
        %3071 = vmatpush.msra.mxu0 0.0
        %3072 = vmatpush.msra.mxu0 0.0
        %3073 = vmatpush.msra.mxu0 0.0
        %3074 = vmatpush.msra.mxu0 0.0
        %3075 = vmatpush.msra.mxu0 0.0
        %3076 = vmatpush.msra.mxu0 0.0
        %3077 = vmatpush.msra.mxu0 0.0
        %3078 = vmatpush.msra.mxu0 0.0
        %3079 = vmatpush.msra.mxu0 0.0
        %3080 = vmatpush.msra.mxu0 %v3062
        %3081 = vmatpush.msra.mxu0 %v3061
        %3082 = vmatmul.f32.gmra.mxu0 %v3064
        %v3083 = vpop.f32.mrf.mxu0
        %v3084 = vadd.f32 0.0, %v3083
        %3085 = vdwg.mxu0
        %v3086 = vadd.f32 %v3059, %v3084
        %v3087 = vld [vmem:[%s3032 + $0x2] sm:$0x1]
        %v3088 = vld [vmem:[%s5 + $0x110] sm:$0xff]
        %v3089 = vld [vmem:[%s5 + $0x118] sm:$0xff]
        %v3091 = vsel %vm2627, %v3087, 0
        %3093 = vmatpush.msra.mxu0 0.0
        %3094 = vmatpush.msra.mxu0 0.0
        %3095 = vmatpush.msra.mxu0 0.0
        %3096 = vmatpush.msra.mxu0 0.0
        %3097 = vmatpush.msra.mxu0 0.0
        %3098 = vmatpush.msra.mxu0 0.0
        %3099 = vmatpush.msra.mxu0 0.0
        %3100 = vmatpush.msra.mxu0 0.0
        %3101 = vmatpush.msra.mxu0 0.0
        %3102 = vmatpush.msra.mxu0 0.0
        %3103 = vmatpush.msra.mxu0 0.0
        %3104 = vmatpush.msra.mxu0 0.0
        %3105 = vmatpush.msra.mxu0 0.0
        %3106 = vmatpush.msra.mxu0 0.0
        %3107 = vmatpush.msra.mxu0 %v3089
        %3108 = vmatpush.msra.mxu0 %v3088
        %3109 = vmatmul.f32.gmra.mxu0 %v3091
        %v3110 = vpop.f32.mrf.mxu0
        %v3111 = vadd.f32 0.0, %v3110
        %3112 = vdwg.mxu0
        %v3113 = vadd.f32 %v3086, %v3111
        %v3114 = vld [vmem:[%s3032 + $0x3] sm:$0x1]
        %v3115 = vld [vmem:[%s5 + $0x120] sm:$0xff]
        %v3116 = vld [vmem:[%s5 + $0x128] sm:$0xff]
        %v3118 = vsel %vm2627, %v3114, 0
        %3120 = vmatpush.msra.mxu0 0.0
        %3121 = vmatpush.msra.mxu0 0.0
        %3122 = vmatpush.msra.mxu0 0.0
        %3123 = vmatpush.msra.mxu0 0.0
        %3124 = vmatpush.msra.mxu0 0.0
        %3125 = vmatpush.msra.mxu0 0.0
        %3126 = vmatpush.msra.mxu0 0.0
        %3127 = vmatpush.msra.mxu0 0.0
        %3128 = vmatpush.msra.mxu0 0.0
        %3129 = vmatpush.msra.mxu0 0.0
        %3130 = vmatpush.msra.mxu0 0.0
        %3131 = vmatpush.msra.mxu0 0.0
        %3132 = vmatpush.msra.mxu0 0.0
        %3133 = vmatpush.msra.mxu0 0.0
        %3134 = vmatpush.msra.mxu0 %v3116
        %3135 = vmatpush.msra.mxu0 %v3115
        %3136 = vmatmul.f32.gmra.mxu0 %v3118
        %v3137 = vpop.f32.mrf.mxu0
        %v3138 = vadd.f32 0.0, %v3137
        %3139 = vdwg.mxu0
        %v3140 = vadd.f32 %v3113, %v3138
        %v3141 = vld [vmem:[%s3032 + $0x4] sm:$0x1]
        %v3142 = vld [vmem:[%s5 + $0x130] sm:$0xff]
        %v3143 = vld [vmem:[%s5 + $0x138] sm:$0xff]
        %v3145 = vsel %vm2627, %v3141, 0
        %3147 = vmatpush.msra.mxu0 0.0
        %3148 = vmatpush.msra.mxu0 0.0
        %3149 = vmatpush.msra.mxu0 0.0
        %3150 = vmatpush.msra.mxu0 0.0
        %3151 = vmatpush.msra.mxu0 0.0
        %3152 = vmatpush.msra.mxu0 0.0
        %3153 = vmatpush.msra.mxu0 0.0
        %3154 = vmatpush.msra.mxu0 0.0
        %3155 = vmatpush.msra.mxu0 0.0
        %3156 = vmatpush.msra.mxu0 0.0
        %3157 = vmatpush.msra.mxu0 0.0
        %3158 = vmatpush.msra.mxu0 0.0
        %3159 = vmatpush.msra.mxu0 0.0
        %3160 = vmatpush.msra.mxu0 0.0
        %3161 = vmatpush.msra.mxu0 %v3143
        %3162 = vmatpush.msra.mxu0 %v3142
        %3163 = vmatmul.f32.gmra.mxu0 %v3145
        %v3164 = vpop.f32.mrf.mxu0
        %v3165 = vadd.f32 0.0, %v3164
        %3166 = vdwg.mxu0
        %v3167 = vadd.f32 %v3140, %v3165
        %s3168 = scalar_lea.vmem [#allocation4], 32
        %v3169 = vld [vmem:[%s3168] sm:$0x1]
        %v3170 = vld [vmem:[%s5 + $0x140] sm:$0xff]
        %v3171 = vld [vmem:[%s5 + $0x148] sm:$0xff]
        %v3173 = vsel %vm2627, %v3169, 0
        %3175 = vmatpush.msra.mxu0 0.0
        %3176 = vmatpush.msra.mxu0 0.0
        %3177 = vmatpush.msra.mxu0 0.0
        %3178 = vmatpush.msra.mxu0 0.0
        %3179 = vmatpush.msra.mxu0 0.0
        %3180 = vmatpush.msra.mxu0 0.0
        %3181 = vmatpush.msra.mxu0 0.0
        %3182 = vmatpush.msra.mxu0 0.0
        %3183 = vmatpush.msra.mxu0 0.0
        %3184 = vmatpush.msra.mxu0 0.0
        %3185 = vmatpush.msra.mxu0 0.0
        %3186 = vmatpush.msra.mxu0 0.0
        %3187 = vmatpush.msra.mxu0 0.0
        %3188 = vmatpush.msra.mxu0 0.0
        %3189 = vmatpush.msra.mxu0 %v3171
        %3190 = vmatpush.msra.mxu0 %v3170
        %3191 = vmatmul.f32.gmra.mxu0 %v3173
        %v3192 = vpop.f32.mrf.mxu0
        %v3193 = vadd.f32 0.0, %v3192
        %3194 = vdwg.mxu0
        %v3195 = vadd.f32 %v3167, %v3193
        %v3196 = vld [vmem:[%s3168 + $0x1] sm:$0x1]
        %v3197 = vld [vmem:[%s5 + $0x150] sm:$0xff]
        %v3198 = vld [vmem:[%s5 + $0x158] sm:$0xff]
        %v3200 = vsel %vm2627, %v3196, 0
        %3202 = vmatpush.msra.mxu0 0.0
        %3203 = vmatpush.msra.mxu0 0.0
        %3204 = vmatpush.msra.mxu0 0.0
        %3205 = vmatpush.msra.mxu0 0.0
        %3206 = vmatpush.msra.mxu0 0.0
        %3207 = vmatpush.msra.mxu0 0.0
        %3208 = vmatpush.msra.mxu0 0.0
        %3209 = vmatpush.msra.mxu0 0.0
        %3210 = vmatpush.msra.mxu0 0.0
        %3211 = vmatpush.msra.mxu0 0.0
        %3212 = vmatpush.msra.mxu0 0.0
        %3213 = vmatpush.msra.mxu0 0.0
        %3214 = vmatpush.msra.mxu0 0.0
        %3215 = vmatpush.msra.mxu0 0.0
        %3216 = vmatpush.msra.mxu0 %v3198
        %3217 = vmatpush.msra.mxu0 %v3197
        %3218 = vmatmul.f32.gmra.mxu0 %v3200
        %v3219 = vpop.f32.mrf.mxu0
        %v3220 = vadd.f32 0.0, %v3219
        %3221 = vdwg.mxu0
        %v3222 = vadd.f32 %v3195, %v3220
        %v3223 = vld [vmem:[%s3168 + $0x2] sm:$0x1]
        %v3224 = vld [vmem:[%s5 + $0x160] sm:$0xff]
        %v3225 = vld [vmem:[%s5 + $0x168] sm:$0xff]
        %v3227 = vsel %vm2627, %v3223, 0
        %3229 = vmatpush.msra.mxu0 0.0
        %3230 = vmatpush.msra.mxu0 0.0
        %3231 = vmatpush.msra.mxu0 0.0
        %3232 = vmatpush.msra.mxu0 0.0
        %3233 = vmatpush.msra.mxu0 0.0
        %3234 = vmatpush.msra.mxu0 0.0
        %3235 = vmatpush.msra.mxu0 0.0
        %3236 = vmatpush.msra.mxu0 0.0
        %3237 = vmatpush.msra.mxu0 0.0
        %3238 = vmatpush.msra.mxu0 0.0
        %3239 = vmatpush.msra.mxu0 0.0
        %3240 = vmatpush.msra.mxu0 0.0
        %3241 = vmatpush.msra.mxu0 0.0
        %3242 = vmatpush.msra.mxu0 0.0
        %3243 = vmatpush.msra.mxu0 %v3225
        %3244 = vmatpush.msra.mxu0 %v3224
        %3245 = vmatmul.f32.gmra.mxu0 %v3227
        %v3246 = vpop.f32.mrf.mxu0
        %v3247 = vadd.f32 0.0, %v3246
        %3248 = vdwg.mxu0
        %v3249 = vadd.f32 %v3222, %v3247
        %v3250 = vld [vmem:[%s3168 + $0x3] sm:$0x1]
        %v3251 = vld [vmem:[%s5 + $0x170] sm:$0xff]
        %v3252 = vld [vmem:[%s5 + $0x178] sm:$0xff]
        %v3254 = vsel %vm2627, %v3250, 0
        %3256 = vmatpush.msra.mxu0 0.0
        %3257 = vmatpush.msra.mxu0 0.0
        %3258 = vmatpush.msra.mxu0 0.0
        %3259 = vmatpush.msra.mxu0 0.0
        %3260 = vmatpush.msra.mxu0 0.0
        %3261 = vmatpush.msra.mxu0 0.0
        %3262 = vmatpush.msra.mxu0 0.0
        %3263 = vmatpush.msra.mxu0 0.0
        %3264 = vmatpush.msra.mxu0 0.0
        %3265 = vmatpush.msra.mxu0 0.0
        %3266 = vmatpush.msra.mxu0 0.0
        %3267 = vmatpush.msra.mxu0 0.0
        %3268 = vmatpush.msra.mxu0 0.0
        %3269 = vmatpush.msra.mxu0 0.0
        %3270 = vmatpush.msra.mxu0 %v3252
        %3271 = vmatpush.msra.mxu0 %v3251
        %3272 = vmatmul.f32.gmra.mxu0 %v3254
        %v3273 = vpop.f32.mrf.mxu0
        %v3274 = vadd.f32 0.0, %v3273
        %3275 = vdwg.mxu0
        %v3276 = vadd.f32 %v3249, %v3274
        %v3277 = vld [vmem:[%s3168 + $0x4] sm:$0x1]
        %v3278 = vld [vmem:[%s5 + $0x180] sm:$0xff]
        %v3279 = vld [vmem:[%s5 + $0x188] sm:$0xff]
        %v3281 = vsel %vm2627, %v3277, 0
        %3283 = vmatpush.msra.mxu0 0.0
        %3284 = vmatpush.msra.mxu0 0.0
        %3285 = vmatpush.msra.mxu0 0.0
        %3286 = vmatpush.msra.mxu0 0.0
        %3287 = vmatpush.msra.mxu0 0.0
        %3288 = vmatpush.msra.mxu0 0.0
        %3289 = vmatpush.msra.mxu0 0.0
        %3290 = vmatpush.msra.mxu0 0.0
        %3291 = vmatpush.msra.mxu0 0.0
        %3292 = vmatpush.msra.mxu0 0.0
        %3293 = vmatpush.msra.mxu0 0.0
        %3294 = vmatpush.msra.mxu0 0.0
        %3295 = vmatpush.msra.mxu0 0.0
        %3296 = vmatpush.msra.mxu0 0.0
        %3297 = vmatpush.msra.mxu0 %v3279
        %3298 = vmatpush.msra.mxu0 %v3278
        %3299 = vmatmul.f32.gmra.mxu0 %v3281
        %v3300 = vpop.f32.mrf.mxu0
        %v3301 = vadd.f32 0.0, %v3300
        %3302 = vdwg.mxu0
        %v3303 = vadd.f32 %v3276, %v3301
        %v3304 = vmax.f32 %v3303, 0.0
        %v3305 = vld [vmem:[%s7] sm:$0xff]
        %v3306 = vld [vmem:[%s7 + $0x8] sm:$0xff]
        %v3307 = vld [vmem:[%s7 + $0x10] sm:$0xff]
        %v3308 = vld [vmem:[%s7 + $0x18] sm:$0xff]
        %v3309 = vld [vmem:[%s7 + $0x20] sm:$0xff]
        %v3310 = vld [vmem:[%s7 + $0x28] sm:$0xff]
        %v3311 = vld [vmem:[%s7 + $0x30] sm:$0xff]
        %v3312 = vld [vmem:[%s7 + $0x38] sm:$0xff]
        %v3313 = vld [vmem:[%s7 + $0x40] sm:$0xff]
        %v3314 = vld [vmem:[%s7 + $0x48] sm:$0xff]
        %v3315 = vld [vmem:[%s7 + $0x50] sm:$0xff]
        %v3316 = vld [vmem:[%s7 + $0x58] sm:$0xff]
        %v3317 = vld [vmem:[%s7 + $0x60] sm:$0xff]
        %v3318 = vld [vmem:[%s7 + $0x68] sm:$0xff]
        %v3319 = vld [vmem:[%s7 + $0x70] sm:$0xff]
        %v3320 = vld [vmem:[%s7 + $0x78] sm:$0xff]
        %v3321 = vld [vmem:[%s8] sm:$0x1]
        %3322 = vmatpush.msra.mxu0 %v3320
        %3323 = vmatpush.msra.mxu0 %v3319
        %3324 = vmatpush.msra.mxu0 %v3318
        %3325 = vmatpush.msra.mxu0 %v3317
        %3326 = vmatpush.msra.mxu0 %v3316
        %3327 = vmatpush.msra.mxu0 %v3315
        %3328 = vmatpush.msra.mxu0 %v3314
        %3329 = vmatpush.msra.mxu0 %v3313
        %3330 = vmatpush.msra.mxu0 %v3312
        %3331 = vmatpush.msra.mxu0 %v3311
        %3332 = vmatpush.msra.mxu0 %v3310
        %3333 = vmatpush.msra.mxu0 %v3309
        %3334 = vmatpush.msra.mxu0 %v3308
        %3335 = vmatpush.msra.mxu0 %v3307
        %3336 = vmatpush.msra.mxu0 %v3306
        %3337 = vmatpush.msra.mxu0 %v3305
        %3338 = vmatmul.f32.gmra.mxu0 %v3304
        %v3339 = vpop.f32.mrf.mxu0
        %v3340 = vadd.f32 %v3321, %v3339
        %3341 = vdwg.mxu0
        %v3342 = vmax.f32 %v3340, 0.0
        %v3343 = vld [vmem:[%s9] sm:$0xff]
        %v3344 = vld [vmem:[%s9 + $0x8] sm:$0xff]
        %v3345 = vld [vmem:[%s9 + $0x10] sm:$0xff]
        %v3346 = vld [vmem:[%s9 + $0x18] sm:$0xff]
        %v3347 = vld [vmem:[%s9 + $0x20] sm:$0xff]
        %v3348 = vld [vmem:[%s9 + $0x28] sm:$0xff]
        %v3349 = vld [vmem:[%s9 + $0x30] sm:$0xff]
        %v3350 = vld [vmem:[%s9 + $0x38] sm:$0xff]
        %v3351 = vld [vmem:[%s9 + $0x40] sm:$0xff]
        %v3352 = vld [vmem:[%s9 + $0x48] sm:$0xff]
        %v3353 = vld [vmem:[%s9 + $0x50] sm:$0xff]
        %v3354 = vld [vmem:[%s9 + $0x58] sm:$0xff]
        %v3355 = vld [vmem:[%s9 + $0x60] sm:$0xff]
        %v3356 = vld [vmem:[%s9 + $0x68] sm:$0xff]
        %v3357 = vld [vmem:[%s9 + $0x70] sm:$0xff]
        %v3358 = vld [vmem:[%s9 + $0x78] sm:$0xff]
        %v3359 = vld [vmem:[%s10] sm:$0x1]
        %3360 = vmatpush.msra.mxu0 %v3358
        %3361 = vmatpush.msra.mxu0 %v3357
        %3362 = vmatpush.msra.mxu0 %v3356
        %3363 = vmatpush.msra.mxu0 %v3355
        %3364 = vmatpush.msra.mxu0 %v3354
        %3365 = vmatpush.msra.mxu0 %v3353
        %3366 = vmatpush.msra.mxu0 %v3352
        %3367 = vmatpush.msra.mxu0 %v3351
        %3368 = vmatpush.msra.mxu0 %v3350
        %3369 = vmatpush.msra.mxu0 %v3349
        %3370 = vmatpush.msra.mxu0 %v3348
        %3371 = vmatpush.msra.mxu0 %v3347
        %3372 = vmatpush.msra.mxu0 %v3346
        %3373 = vmatpush.msra.mxu0 %v3345
        %3374 = vmatpush.msra.mxu0 %v3344
        %3375 = vmatpush.msra.mxu0 %v3343
        %3376 = vmatmul.f32.gmra.mxu0 %v3342
        %v3377 = vpop.f32.mrf.mxu0
        %v3378 = vadd.f32 %v3359, %v3377
        %3379 = vdwg.mxu0
        %3380 = vst [vmem:[%s378] sm:$0x1] %v3378
        %s3381 = sand.u32 %s269, 1
        %s3382 = scalar_lea.sflag [#allocation6], %s3381
        %s3383 = sand.u32 %s269, 1
        %s3384 = scalar_lea.vmem [#allocation5], %s3383
        // Predicated region
        $region79: #{net_forward.1} parent=63 // pred_check
          %p3385 = pneg %p279
        $region80: #{net_forward.1} parent=63 // pred_check_branch
          %3387 = sbr.rel (%p3385) target = $region82
        $region81: #{net_forward.1} parent=63 // pred_region
          %3389 = vsyncadd %s3382, 0
          %s3390 = scalar_lea.hbm %s11, %s25
          %s3392 = sshll.u32 %s3384, 4
          %s3393 = int_to_ptr.vmem [resolvable:$true] %s3392
          %s3394 = sshll.u32 %s3390, 4
          %s3395 = int_to_ptr.hbm [resolvable:$true] %s3394
          %3397 = dma.vmem_to_hbm [thread:$0]  %s3393, 16, %s3395, %s3382
        $region82: #{net_forward.1} parent=63 // pred_fallthru
          _
      $region64: #{net_forward.1} parent=5 // pred_fallthru
        _
      %p3398 = scmp.le.s32.totalorder 2, %s20
      // Predicated region
      $region83: #{net_forward.1} parent=5 // pred_check
        %p3399 = pneg %p3398
      $region84: #{net_forward.1} parent=5 // pred_check_branch
        %3401 = sbr.rel (%p3399) target = $region86
      $region85: #{net_forward.1} parent=5 // pred_region
        %s3402 = ssub.s32 %s20, 2
        // Predicated region
        $region87: #{net_forward.1} parent=85 // pred_check
          %p3403 = pneg %p285
        $region88: #{net_forward.1} parent=85 // pred_check_branch
          %3405 = sbr.rel (%p3403) target = $region90
        $region89: #{net_forward.1} parent=85 // pred_region
          %s3406 = sand.u32 %s270, 1
          %s3407 = scalar_lea.sflag [#allocation6], %s3406
          %s3408 = sand.u32 %s270, 1
          %s3409 = scalar_lea.vmem [#allocation5], %s3408
          %3411 = dma.done %s3407, 16
        $region90: #{net_forward.1} parent=85 // pred_fallthru
          _
      $region86: #{net_forward.1} parent=5 // pred_fallthru
        _
    $region6: #{net_forward.1} parent=1 // loop_footer
      %s24 = sadd.s32 1, %s20
    $region7: #{net_forward.1} parent=1 // loop_footer_branch
      %19 = sbr.rel target = $region3
    $region8: #{net_forward.1} parent=1 // loop_exit
      _
    %3412 = vsyncpa [#allocation6], 1
    %s3413 = scalar_lea.sflag [#allocation6], 1
    %3414 = vsyncpa %s3413, 1

</llo_original>
